<compile_context>
chip_gen: v6e
topology: v6e:2x2x1
jax: 0.10.0
libtpu: 0.0.40
codegen_flags: <defaults>
</compile_context>

<pallas_src>
import jax
import jax.numpy as jnp
from jax.experimental import pallas as pl
from jax.experimental.pallas import tpu as pltpu

FEATURES_DIM = 512
H1 = 256
H2 = 128
BN_EPS = 1e-5


def _round_up(n, m):
    return ((n + m - 1) // m) * m


# ---------------------------------------------------------------------------
# Kernel 1: fused training-mode BatchNorm + MLP.  x (bf16) has a constant
# index_map and the full (pad_B, 512) block, so it is DMA'd from HBM exactly
# once and stays VMEM-resident; the grid iterates row chunks of the MLP.
# ---------------------------------------------------------------------------
def _fused_train_kernel(meta_ref, x_ref, gamma_ref, beta_ref,
                        w1_ref, b1_ref, w2_ref, b2_ref, w3_ref, b3_ref,
                        out_ref, scale_ref, shift_ref):
    i = pl.program_id(0)
    chunk_b = out_ref.shape[1]

    @pl.when(i == 0)
    def _():
        inv_b = meta_ref[0]                      # 1 / true batch size (SMEM scalar)
        n_pad = meta_ref[1]                      # number of zero padding rows
        xf = x_ref[...].astype(jnp.float32)
        mean = jnp.sum(xf, axis=0, keepdims=True) * inv_b
        d = xf - mean
        # Centered variance; each zero padding row contributes exactly mean^2 -> subtract.
        var = (jnp.sum(d * d, axis=0, keepdims=True) - n_pad * mean * mean) * inv_b
        scale = gamma_ref[...] * jax.lax.rsqrt(var + BN_EPS)
        scale_ref[...] = scale
        shift_ref[...] = beta_ref[...] - mean * scale

    start = pl.multiple_of(i * chunk_b, chunk_b)
    rows = x_ref[pl.ds(start, chunk_b), :].astype(jnp.float32)     # (chunk_b, 512)
    y = (rows * scale_ref[...] + shift_ref[...]).astype(jnp.bfloat16)
    h1 = jnp.maximum(jnp.dot(y, w1_ref[...],
                             preferred_element_type=jnp.float32) + b1_ref[...], 0.0)
    h2 = jnp.maximum(jnp.dot(h1.astype(jnp.bfloat16), w2_ref[...],
                             preferred_element_type=jnp.float32) + b2_ref[...], 0.0)
    # Value head Linear(128,1): VPU multiply + cross-lane reduce (kept off the MXU).
    v = jnp.sum(h2 * w3_ref[...], axis=-1)                          # (chunk_b,)
    out_ref[...] = v.reshape(1, chunk_b) + b3_ref[...]              # lane-dense store


# ---------------------------------------------------------------------------
# Kernel 2: streaming BN statistics (large-batch training fallback).
# TODO(synk): E[x^2]-E[x]^2 here can cancel for |mean| >> std; the default
#             fused path uses a centered variance instead.
# ---------------------------------------------------------------------------
def _bn_stats_kernel(meta_ref, x_ref, mean_ref, var_ref, s_acc, q_acc):
    i = pl.program_id(0)

    @pl.when(i == 0)
    def _():
        s_acc[...] = jnp.zeros_like(s_acc)
        q_acc[...] = jnp.zeros_like(q_acc)

    x = x_ref[...].astype(jnp.float32)                              # (tile_b, 512)
    s_acc[...] += jnp.sum(x, axis=0, keepdims=True)
    q_acc[...] += jnp.sum(x * x, axis=0, keepdims=True)

    @pl.when(i == pl.num_programs(0) - 1)
    def _():
        inv_b = meta_ref[0]
        mean = s_acc[...] * inv_b                # zero padding rows are exact for the sums
        mean_ref[...] = mean
        var_ref[...] = q_acc[...] * inv_b - mean * mean


# ---------------------------------------------------------------------------
# Kernel 3: streaming MLP over batch tiles; BN already folded into w1/b1 on the
# host, so the kernel consumes raw bf16 x.  Weights are VMEM-resident; only x is
# re-DMA'd per tile; "parallel" grid axis -> v7x megacore.
# ---------------------------------------------------------------------------
def _mlp_fold_kernel(x_ref, w1_ref, b1_ref, w2_ref, b2_ref, w3_ref, b3_ref, out_ref):
    tile_b = out_ref.shape[1]
    h1 = jnp.maximum(jnp.dot(x_ref[...], w1_ref[...],
                             preferred_element_type=jnp.float32) + b1_ref[...], 0.0)
    h2 = jnp.maximum(jnp.dot(h1.astype(jnp.bfloat16), w2_ref[...],
                             preferred_element_type=jnp.float32) + b2_ref[...], 0.0)
    v = jnp.sum(h2 * w3_ref[...], axis=-1)
    out_ref[...] = v.reshape(1, tile_b) + b3_ref[...]               # lane-dense store


def dvn_forward(observations, params, *, training=True, block_b=1024,
                fused_max_rows=2048):
    """observations: (B, ...) flattening to (B, 512). Returns (B, 1) float32.

    training=True  -> BatchNorm uses batch statistics (matches nn.Module default mode).
    training=False -> eval mode: running_mean/running_var folded on the host, single
                      streaming MLP kernel (no stats pass).
    """
    B = observations.shape[0]
    x = observations.reshape(B, -1)
    assert x.shape[1] == FEATURES_DIM
    x = x.astype(jnp.bfloat16)                   # stream activations at half the HBM bytes
    F = FEATURES_DIM

    # ---- batch tiling -------------------------------------------------------
    rb = _round_up(B, 16)                        # bf16 sublane packing: 16-row alignment
    if rb < 256:
        tile_b = rb                              # single tile (block == full padded array)
    else:
        # multi-tile: 128-aligned tiles so the per-tile (1, tile_b) output store is
        # lane-dense; guarantee >=2 tiles so v7x megacore can split the grid.
        tile_b = min(_round_up(block_b, 128), 128 * max(1, (rb // 2) // 128))
    pad_B = _round_up(rb, tile_b)
    if pad_B != B:
        x = jnp.pad(x, ((0, pad_B - B), (0, 0)))  # zero rows; exact for the stats sums
    n_tiles = pad_B // tile_b

    meta = jnp.array([1.0 / B, float(pad_B - B)], dtype=jnp.float32)
    w1_bf = params["w1"].astype(jnp.bfloat16)
    w2_bf = params["w2"].astype(jnp.bfloat16)

    def const_spec(shape):
        return pl.BlockSpec(shape, lambda i: (0, 0))

    out_spec = pl.BlockSpec((1, tile_b), lambda i: (0, i))

    # ---- fused single-read path (training mode, x fits the VMEM budget) ------
    if training and pad_B <= fused_max_rows:
        out2d = pl.pallas_call(
            _fused_train_kernel,
            out_shape=jax.ShapeDtypeStruct((1, pad_B), jnp.float32),
            grid=(n_tiles,),
            in_specs=[
                pl.BlockSpec(memory_space=pltpu.MemorySpace.SMEM),   # meta scalars
                const_spec((pad_B, F)),                              # x resident (1 DMA)
                const_spec((1, F)),                                  # gamma
                const_spec((1, F)),                                  # beta
                const_spec((F, H1)),                                 # w1 (bf16, resident)
                const_spec((1, H1)),                                 # b1
                const_spec((H1, H2)),                                # w2 (bf16, resident)
                const_spec((1, H2)),                                 # b2
                const_spec((1, H2)),                                 # w3 row
                const_spec((1, 1)),                                  # b3
            ],
            out_specs=out_spec,
            scratch_shapes=[pltpu.VMEM((1, F), jnp.float32),         # scale
                            pltpu.VMEM((1, F), jnp.float32)],        # shift
            compiler_params=pltpu.CompilerParams(
                dimension_semantics=("arbitrary",),                  # stats at step 0
                vmem_limit_bytes=32 * 1024 * 1024),
        )(meta, x, params["gamma"], params["beta"],
          w1_bf, params["b1"], w2_bf, params["b2"], params["w3"], params["b3"])
        return out2d[0, :B].reshape(B, 1)

    # ---- mean / var ----------------------------------------------------------
    if training:
        # Large-batch fallback: one streaming stats pass over bf16 x tiles.
        # TODO(synk): on v7x this reduction runs on a single TensorCore; a 2-way
        #             core split would speed it up but eval-mode folding removes it.
        mean, var = pl.pallas_call(
            _bn_stats_kernel,
            out_shape=(jax.ShapeDtypeStruct((1, F), jnp.float32),
                       jax.ShapeDtypeStruct((1, F), jnp.float32)),
            grid=(n_tiles,),
            in_specs=[pl.BlockSpec(memory_space=pltpu.MemorySpace.SMEM),
                      pl.BlockSpec((tile_b, F), lambda i: (i, 0))],
            out_specs=(pl.BlockSpec((1, F), lambda i: (0, 0)),
                       pl.BlockSpec((1, F), lambda i: (0, 0))),
            scratch_shapes=[pltpu.VMEM((1, F), jnp.float32),
                            pltpu.VMEM((1, F), jnp.float32)],
            compiler_params=pltpu.CompilerParams(
                dimension_semantics=("arbitrary",)),
        )(meta, x)
    else:
        mean, var = params["running_mean"], params["running_var"]

    # Fold BN into the first linear layer (tiny O(weights) XLA ops, once per batch):
    #   (x*scale + shift) @ w1 + b1 == x @ (scale^T * w1) + (shift @ w1 + b1)
    scale = params["gamma"] * jax.lax.rsqrt(var + BN_EPS)
    shift = params["beta"] - mean * scale
    w1f = (params["w1"] * scale.reshape(F, 1)).astype(jnp.bfloat16)
    b1f = params["b1"] + shift @ params["w1"]

    out2d = pl.pallas_call(
        _mlp_fold_kernel,
        out_shape=jax.ShapeDtypeStruct((1, pad_B), jnp.float32),
        grid=(n_tiles,),
        in_specs=[
            pl.BlockSpec((tile_b, F), lambda i: (i, 0)),             # x streamed (bf16)
            const_spec((F, H1)),                                     # folded w1 (resident)
            const_spec((1, H1)),                                     # folded b1
            const_spec((H1, H2)),                                    # w2 (resident)
            const_spec((1, H2)),                                     # b2
            const_spec((1, H2)),                                     # w3 row
            const_spec((1, 1)),                                      # b3
        ],
        out_specs=out_spec,
        compiler_params=pltpu.CompilerParams(
            dimension_semantics=("parallel",)),                      # megacore on v7x
    )(x, w1f, b1f, w2_bf, params["b2"], params["w3"], params["b3"])
    return out2d[0, :B].reshape(B, 1)


# ---------------------------------------------------------------------------
# Parameters & pure-JAX reference (for correctness check)
# ---------------------------------------------------------------------------
def init_params(key):
    """Deterministic init mimicking PyTorch defaults (Linear: U[-1/sqrt(fan_in), +])."""
    ks = jax.random.split(key, 8)

    def linear(kw, kb, fan_in, fan_out):
        bound = 1.0 / jnp.sqrt(fan_in)
        w = jax.random.uniform(kw, (fan_in, fan_out), jnp.float32, -bound, bound)
        b = jax.random.uniform(kb, (1, fan_out), jnp.float32, -bound, bound)
        return w, b

    w1, b1 = linear(ks[0], ks[1], FEATURES_DIM, H1)
    w2, b2 = linear(ks[2], ks[3], H1, H2)
    w3, b3 = linear(ks[4], ks[5], H2, 1)
    return {
        "gamma": jnp.ones((1, FEATURES_DIM), jnp.float32),           # BatchNorm1d weight
        "beta": jnp.zeros((1, FEATURES_DIM), jnp.float32),           # BatchNorm1d bias
        # eval-mode running statistics (non-trivial so the folded path is exercised)
        "running_mean": 0.1 * jax.random.normal(ks[6], (1, FEATURES_DIM), jnp.float32),
        "running_var": jax.random.uniform(ks[7], (1, FEATURES_DIM), jnp.float32, 0.5, 1.5),
        "w1": w1, "b1": b1,
        "w2": w2, "b2": b2,
        "w3": w3.T.reshape(1, H2),                                   # stored as (1, 128) row
        "b3": b3.reshape(1, 1),
    }


def dvn_reference(observations, params, *, training=True):
    B = observations.shape[0]
    x = observations.reshape(B, -1).astype(jnp.float32)
    if training:
        mean = jnp.mean(x, axis=0, keepdims=True)
        var = jnp.mean((x - mean) ** 2, axis=0, keepdims=True)       # biased variance
    else:
        mean, var = params["running_mean"], params["running_var"]
    y = (x - mean) * jax.lax.rsqrt(var + BN_EPS)
    y = y * params["gamma"] + params["beta"]
    h1 = jnp.maximum(y @ params["w1"] + params["b1"], 0.0)
    h2 = jnp.maximum(h1 @ params["w2"] + params["b2"], 0.0)
    return h2 @ params["w3"].T + params["b3"]


if __name__ == "__main__":
    key = jax.random.PRNGKey(0)
    k_obs, k_params = jax.random.split(key)
    params = init_params(k_params)

    B = 300  # pads to 384 rows -> 3 tiles of 128: exercises the grid, padding & masking
    observations = jax.random.normal(k_obs, (B, FEATURES_DIM), jnp.float32)
    ref_train = dvn_reference(observations, params, training=True)
    ref_eval = dvn_reference(observations, params, training=False)

    # Path 1: training-mode BN, fused single-HBM-read kernel (default).
    out_fused = jax.block_until_ready(
        dvn_forward(observations, params, training=True, block_b=128))
    assert out_fused.shape == (B, 1) and out_fused.dtype == jnp.float32
    assert jnp.allclose(out_fused, ref_train, atol=5e-2, rtol=5e-2), "fused path mismatch"

    # Path 2: training-mode BN, two-pass streaming fallback (forced at small size).
    out_stream = jax.block_until_ready(
        dvn_forward(observations, params, training=True, block_b=128, fused_max_rows=0))
    assert jnp.allclose(out_stream, ref_train, atol=5e-2, rtol=5e-2), "two-pass mismatch"

    # Path 3: eval-mode BN (running stats folded into w1/b1), MLP kernel only.
    out_eval = jax.block_until_ready(
        dvn_forward(observations, params, training=False, block_b=128))
    assert jnp.allclose(out_eval, ref_eval, atol=5e-2, rtol=5e-2), "eval path mismatch"

    # Degenerate tiny batch (single tile, heavy padding) through the fused path.
    B_small = 4
    obs_small = jax.random.normal(jax.random.PRNGKey(1), (B_small, FEATURES_DIM), jnp.float32)
    out_small = jax.block_until_ready(dvn_forward(obs_small, params, training=True))
    ref_small = dvn_reference(obs_small, params, training=True)
    assert jnp.allclose(out_small, ref_small, atol=5e-2, rtol=5e-2), "tiny batch mismatch"

    print("KERNEL_OK")
</pallas_src>

<mosaic_0001>
module attributes {stable_mosaic.version = 11 : i64} {
  func.func @_fused_train_kernel(%arg0: i32, %arg1: memref<2xf32, #tpu.memory_space<smem>>, %arg2: memref<384x512xbf16, #tpu.memory_space<vmem>>, %arg3: memref<1x512xf32, #tpu.memory_space<vmem>>, %arg4: memref<1x512xf32, #tpu.memory_space<vmem>>, %arg5: memref<512x256xbf16, #tpu.memory_space<vmem>>, %arg6: memref<1x256xf32, #tpu.memory_space<vmem>>, %arg7: memref<256x128xbf16, #tpu.memory_space<vmem>>, %arg8: memref<1x128xf32, #tpu.memory_space<vmem>>, %arg9: memref<1x128xf32, #tpu.memory_space<vmem>>, %arg10: memref<1x1xf32, #tpu.memory_space<vmem>>, %arg11: memref<1x128xf32, #tpu.memory_space<vmem>>, %arg12: memref<1x512xf32, #tpu.memory_space<vmem>>, %arg13: memref<1x512xf32, #tpu.memory_space<vmem>>) attributes {dimension_semantics = [#tpu.dimension_semantics<arbitrary>], iteration_bounds = array<i64: 3>, scalar_prefetch = 0 : i64, scratch_operands = 2 : i64, tpu.core_type = #tpu.core_type<tc>, window_params = [{transform_indices = @transform_0, window_bounds = array<i64: 2>}, {pipeline_mode = #tpu.pipeline_mode<synchronous>, transform_indices = @transform_1, window_bounds = array<i64: 384, 512>}, {pipeline_mode = #tpu.pipeline_mode<synchronous>, transform_indices = @transform_2, window_bounds = array<i64: 1, 512>}, {pipeline_mode = #tpu.pipeline_mode<synchronous>, transform_indices = @transform_3, window_bounds = array<i64: 1, 512>}, {pipeline_mode = #tpu.pipeline_mode<synchronous>, transform_indices = @transform_4, window_bounds = array<i64: 512, 256>}, {pipeline_mode = #tpu.pipeline_mode<synchronous>, transform_indices = @transform_5, window_bounds = array<i64: 1, 256>}, {pipeline_mode = #tpu.pipeline_mode<synchronous>, transform_indices = @transform_6, window_bounds = array<i64: 256, 128>}, {pipeline_mode = #tpu.pipeline_mode<synchronous>, transform_indices = @transform_7, window_bounds = array<i64: 1, 128>}, {pipeline_mode = #tpu.pipeline_mode<synchronous>, transform_indices = @transform_8, window_bounds = array<i64: 1, 128>}, {pipeline_mode = #tpu.pipeline_mode<synchronous>, transform_indices = @transform_9, window_bounds = array<i64: 1, 1>}, {transform_indices = @transform_10, window_bounds = array<i64: 1, 128>}]} {
    %c0_i32 = arith.constant 0 : i32
    %0 = arith.cmpi eq, %arg0, %c0_i32 : i32
    %1 = arith.extui %0 : i1 to i32
    %c0_i32_0 = arith.constant 0 : i32
    %2 = arith.cmpi ne, %1, %c0_i32_0 : i32
    scf.if %2 {
      %c0_23 = arith.constant 0 : index
      %39 = memref.load %arg1[%c0_23] : memref<2xf32, #tpu.memory_space<smem>>
      %c1 = arith.constant 1 : index
      %40 = memref.load %arg1[%c1] : memref<2xf32, #tpu.memory_space<smem>>
      %c0_24 = arith.constant 0 : index
      %c0_25 = arith.constant 0 : index
      %41 = vector.load %arg2[%c0_24, %c0_25] : memref<384x512xbf16, #tpu.memory_space<vmem>>, vector<384x512xbf16>
      %42 = arith.extf %41 : vector<384x512xbf16> to vector<384x512xf32>
      %cst_26 = arith.constant dense<0.000000e+00> : vector<512xf32>
      %43 = vector.multi_reduction <add>, %42, %cst_26 [0] : vector<384x512xf32> to vector<512xf32>
      %44 = vector.shape_cast %43 : vector<512xf32> to vector<1x512xf32>
      %45 = vector.broadcast %39 : f32 to vector<1x512xf32>
      %46 = arith.mulf %44, %45 : vector<1x512xf32>
      %47 = vector.broadcast %46 : vector<1x512xf32> to vector<384x512xf32>
      %48 = arith.subf %42, %47 : vector<384x512xf32>
      %49 = arith.mulf %48, %48 : vector<384x512xf32>
      %cst_27 = arith.constant dense<0.000000e+00> : vector<512xf32>
      %50 = vector.multi_reduction <add>, %49, %cst_27 [0] : vector<384x512xf32> to vector<512xf32>
      %51 = vector.shape_cast %50 : vector<512xf32> to vector<1x512xf32>
      %52 = vector.broadcast %40 : f32 to vector<1x512xf32>
      %53 = arith.mulf %52, %46 : vector<1x512xf32>
      %54 = arith.mulf %53, %46 : vector<1x512xf32>
      %55 = arith.subf %51, %54 : vector<1x512xf32>
      %56 = vector.broadcast %39 : f32 to vector<1x512xf32>
      %57 = arith.mulf %55, %56 : vector<1x512xf32>
      %c0_28 = arith.constant 0 : index
      %c0_29 = arith.constant 0 : index
      %58 = vector.load %arg3[%c0_28, %c0_29] : memref<1x512xf32, #tpu.memory_space<vmem>>, vector<1x512xf32>
      %cst_30 = arith.constant 9.99999974E-6 : f32
      %59 = vector.broadcast %cst_30 : f32 to vector<1x512xf32>
      %60 = arith.addf %57, %59 : vector<1x512xf32>
      %61 = math.rsqrt %60 : vector<1x512xf32>
      %62 = arith.mulf %58, %61 : vector<1x512xf32>
      %c0_31 = arith.constant 0 : index
      %c0_32 = arith.constant 0 : index
      %63 = vector.load %arg12[%c0_31, %c0_32] : memref<1x512xf32, #tpu.memory_space<vmem>>, vector<1x512xf32>
      tpu.vector_store %arg12[%c0_31, %c0_32], %62 {strides = array<i32>} : memref<1x512xf32, #tpu.memory_space<vmem>>, vector<1x512xf32>,
      %c0_33 = arith.constant 0 : index
      %c0_34 = arith.constant 0 : index
      %64 = vector.load %arg4[%c0_33, %c0_34] : memref<1x512xf32, #tpu.memory_space<vmem>>, vector<1x512xf32>
      %65 = arith.mulf %46, %62 : vector<1x512xf32>
      %66 = arith.subf %64, %65 : vector<1x512xf32>
      %c0_35 = arith.constant 0 : index
      %c0_36 = arith.constant 0 : index
      %67 = vector.load %arg13[%c0_35, %c0_36] : memref<1x512xf32, #tpu.memory_space<vmem>>, vector<1x512xf32>
      tpu.vector_store %arg13[%c0_35, %c0_36], %66 {strides = array<i32>} : memref<1x512xf32, #tpu.memory_space<vmem>>, vector<1x512xf32>,
    } else {
    }
    %c128_i32 = arith.constant 128 : i32
    %3 = arith.muli %arg0, %c128_i32 : i32
    %4 = tpu.assume_multiple %3, 128 : i32
    %5 = arith.index_cast %4 : i32 to index
    %c0 = arith.constant 0 : index
    %6 = vector.load %arg2[%5, %c0] : memref<384x512xbf16, #tpu.memory_space<vmem>>, vector<128x512xbf16>
    %7 = arith.extf %6 : vector<128x512xbf16> to vector<128x512xf32>
    %c0_1 = arith.constant 0 : index
    %c0_2 = arith.constant 0 : index
    %8 = vector.load %arg12[%c0_1, %c0_2] : memref<1x512xf32, #tpu.memory_space<vmem>>, vector<1x512xf32>
    %9 = vector.broadcast %8 : vector<1x512xf32> to vector<128x512xf32>
    %10 = arith.mulf %7, %9 : vector<128x512xf32>
    %c0_3 = arith.constant 0 : index
    %c0_4 = arith.constant 0 : index
    %11 = vector.load %arg13[%c0_3, %c0_4] : memref<1x512xf32, #tpu.memory_space<vmem>>, vector<1x512xf32>
    %12 = vector.broadcast %11 : vector<1x512xf32> to vector<128x512xf32>
    %13 = arith.addf %10, %12 : vector<128x512xf32>
    %14 = arith.truncf %13 : vector<128x512xf32> to vector<128x512xbf16>
    %c0_5 = arith.constant 0 : index
    %c0_6 = arith.constant 0 : index
    %15 = vector.load %arg5[%c0_5, %c0_6] : memref<512x256xbf16, #tpu.memory_space<vmem>>, vector<512x256xbf16>
    %cst = arith.constant dense<0.000000e+00> : vector<128x256xf32>
    %16 = tpu.matmul %14, %15, %cst {dimension_numbers = #tpu.dot_dimension_numbers<[1], [0], [0], [1], [0, 0, 1, 1], [], []>} : vector<128x512xbf16>, vector<512x256xbf16>, vector<128x256xf32> -> vector<128x256xf32>
    %c0_7 = arith.constant 0 : index
    %c0_8 = arith.constant 0 : index
    %17 = vector.load %arg6[%c0_7, %c0_8] : memref<1x256xf32, #tpu.memory_space<vmem>>, vector<1x256xf32>
    %18 = vector.broadcast %17 : vector<1x256xf32> to vector<128x256xf32>
    %19 = arith.addf %16, %18 : vector<128x256xf32>
    %cst_9 = arith.constant 0.000000e+00 : f32
    %20 = vector.broadcast %cst_9 : f32 to vector<128x256xf32>
    %21 = arith.maximumf %19, %20 : vector<128x256xf32>
    %22 = arith.truncf %21 : vector<128x256xf32> to vector<128x256xbf16>
    %c0_10 = arith.constant 0 : index
    %c0_11 = arith.constant 0 : index
    %23 = vector.load %arg7[%c0_10, %c0_11] : memref<256x128xbf16, #tpu.memory_space<vmem>>, vector<256x128xbf16>
    %cst_12 = arith.constant dense<0.000000e+00> : vector<128x128xf32>
    %24 = tpu.matmul %22, %23, %cst_12 {dimension_numbers = #tpu.dot_dimension_numbers<[1], [0], [0], [1], [0, 0, 1, 1], [], []>} : vector<128x256xbf16>, vector<256x128xbf16>, vector<128x128xf32> -> vector<128x128xf32>
    %c0_13 = arith.constant 0 : index
    %c0_14 = arith.constant 0 : index
    %25 = vector.load %arg8[%c0_13, %c0_14] : memref<1x128xf32, #tpu.memory_space<vmem>>, vector<1x128xf32>
    %26 = vector.broadcast %25 : vector<1x128xf32> to vector<128x128xf32>
    %27 = arith.addf %24, %26 : vector<128x128xf32>
    %cst_15 = arith.constant 0.000000e+00 : f32
    %28 = vector.broadcast %cst_15 : f32 to vector<128x128xf32>
    %29 = arith.maximumf %27, %28 : vector<128x128xf32>
    %c0_16 = arith.constant 0 : index
    %c0_17 = arith.constant 0 : index
    %30 = vector.load %arg9[%c0_16, %c0_17] : memref<1x128xf32, #tpu.memory_space<vmem>>, vector<1x128xf32>
    %31 = vector.broadcast %30 : vector<1x128xf32> to vector<128x128xf32>
    %32 = arith.mulf %29, %31 : vector<128x128xf32>
    %cst_18 = arith.constant dense<0.000000e+00> : vector<128xf32>
    %33 = vector.multi_reduction <add>, %32, %cst_18 [1] : vector<128x128xf32> to vector<128xf32>
    %34 = vector.shape_cast %33 : vector<128xf32> to vector<1x128xf32>
    %c0_19 = arith.constant 0 : index
    %c0_20 = arith.constant 0 : index
    %35 = vector.load %arg10[%c0_19, %c0_20] : memref<1x1xf32, #tpu.memory_space<vmem>>, vector<1x1xf32>
    %36 = vector.broadcast %35 : vector<1x1xf32> to vector<1x128xf32>
    %37 = arith.addf %34, %36 : vector<1x128xf32>
    %c0_21 = arith.constant 0 : index
    %c0_22 = arith.constant 0 : index
    %38 = vector.load %arg11[%c0_21, %c0_22] : memref<1x128xf32, #tpu.memory_space<vmem>>, vector<1x128xf32>
    tpu.vector_store %arg11[%c0_21, %c0_22], %37 {strides = array<i32>} : memref<1x128xf32, #tpu.memory_space<vmem>>, vector<1x128xf32>,
    return
  }
  func.func @transform_0(%arg0: i32) -> i32 {
    %c0_i32 = arith.constant 0 : i32
    %c0_i32_0 = arith.constant 0 : i32
    return %c0_i32 : i32
  }
  func.func @transform_1(%arg0: i32) -> (i32, i32) {
    %c0_i32 = arith.constant 0 : i32
    %c0_i32_0 = arith.constant 0 : i32
    %c0_i32_1 = arith.constant 0 : i32
    return %c0_i32, %c0_i32_0 : i32, i32
  }
  func.func @transform_2(%arg0: i32) -> (i32, i32) {
    %c0_i32 = arith.constant 0 : i32
    %c0_i32_0 = arith.constant 0 : i32
    %c0_i32_1 = arith.constant 0 : i32
    return %c0_i32, %c0_i32_0 : i32, i32
  }
  func.func @transform_3(%arg0: i32) -> (i32, i32) {
    %c0_i32 = arith.constant 0 : i32
    %c0_i32_0 = arith.constant 0 : i32
    %c0_i32_1 = arith.constant 0 : i32
    return %c0_i32, %c0_i32_0 : i32, i32
  }
  func.func @transform_4(%arg0: i32) -> (i32, i32) {
    %c0_i32 = arith.constant 0 : i32
    %c0_i32_0 = arith.constant 0 : i32
    %c0_i32_1 = arith.constant 0 : i32
    return %c0_i32, %c0_i32_0 : i32, i32
  }
  func.func @transform_5(%arg0: i32) -> (i32, i32) {
    %c0_i32 = arith.constant 0 : i32
    %c0_i32_0 = arith.constant 0 : i32
    %c0_i32_1 = arith.constant 0 : i32
    return %c0_i32, %c0_i32_0 : i32, i32
  }
  func.func @transform_6(%arg0: i32) -> (i32, i32) {
    %c0_i32 = arith.constant 0 : i32
    %c0_i32_0 = arith.constant 0 : i32
    %c0_i32_1 = arith.constant 0 : i32
    return %c0_i32, %c0_i32_0 : i32, i32
  }
  func.func @transform_7(%arg0: i32) -> (i32, i32) {
    %c0_i32 = arith.constant 0 : i32
    %c0_i32_0 = arith.constant 0 : i32
    %c0_i32_1 = arith.constant 0 : i32
    return %c0_i32, %c0_i32_0 : i32, i32
  }
  func.func @transform_8(%arg0: i32) -> (i32, i32) {
    %c0_i32 = arith.constant 0 : i32
    %c0_i32_0 = arith.constant 0 : i32
    %c0_i32_1 = arith.constant 0 : i32
    return %c0_i32, %c0_i32_0 : i32, i32
  }
  func.func @transform_9(%arg0: i32) -> (i32, i32) {
    %c0_i32 = arith.constant 0 : i32
    %c0_i32_0 = arith.constant 0 : i32
    %c0_i32_1 = arith.constant 0 : i32
    return %c0_i32, %c0_i32_0 : i32, i32
  }
  func.func @transform_10(%arg0: i32) -> (i32, i32) {
    %c0_i32 = arith.constant 0 : i32
    %c0_i32_0 = arith.constant 0 : i32
    return %c0_i32, %arg0 : i32, i32
  }
}

</mosaic_0001>

<llo_original>
// kernel: tpu_custom_call.1
$region0: #{tpu_custom_call.1}
  #allocation0 [shape = 'u32[]', space=smem, size = 0x4, offset = 0x4, fixed_abs, tag = 'smem constant byte address 0x4 - core index']
  #allocation1 [shape = 'u32[144,128]{1,0:T(1,128)}', space=vmem, size = 0x12000, scoped, tag = 'internal scratch']
  #allocation2 [shape = 'f32[1,512]{1,0:T(1,128)}', space=vmem, size = 0x800, scoped, tag = 'scratch operand']
  #allocation3 [shape = 'f32[1,512]{1,0:T(1,128)}', space=vmem, size = 0x800, scoped, tag = 'scratch operand']
  #allocation4 [shape = 'f32[1,1]{1,0:T(1,128)S(1)}', space=vmem, size = 0x200, scoped, tag = 'scoped memory for tpu_custom_call.1']
  %s0 = inlined_call_operand.vmem [shape: f32[2], index: 0, kind: input, shape index: {}]
  %s1 = inlined_call_operand.hbm [shape: bf16[384,512], index: 1, kind: input, shape index: {}]
  %s2 = inlined_call_operand.vmem [shape: f32[1,512], index: 2, kind: input, shape index: {}]
  %s3 = inlined_call_operand.hbm [shape: f32[1,512], index: 3, kind: input, shape index: {}]
  %s4 = inlined_call_operand.hbm [shape: bf16[512,256], index: 4, kind: input, shape index: {}]
  %s5 = inlined_call_operand.vmem [shape: f32[1,256], index: 5, kind: input, shape index: {}]
  %s6 = inlined_call_operand.hbm [shape: bf16[256,128], index: 6, kind: input, shape index: {}]
  %s7 = inlined_call_operand.vmem [shape: f32[1,128], index: 7, kind: input, shape index: {}]
  %s8 = inlined_call_operand.vmem [shape: f32[1,128], index: 8, kind: input, shape index: {}]
  %s9 = inlined_call_operand.<no memory space> [shape: f32[1,1], index: 9, kind: input, shape index: {}]
  %s10 = inlined_call_operand.hbm [shape: f32[1,384], index: 10, kind: output, shape index: {}]
  %s11 = sld [smem:[#allocation0]]
  $region97: #{tpu_custom_call.1} parent=0
    _
  %s13 = ssub.s32 1, %s11
  %s14 = scalar_select 0, %s13, %s11
  %v15 = vstv %s9
  %16 = vst [vmem:[#allocation4] sm:$0x1] %v15
  $region1: #{tpu_custom_call.1} parent=0
    #allocation5 [shape = 'u8[512]{0}', space=smem, size = 0x200, scoped, tag = 'input window, operand 0, single buffered']
    #allocation6 [shape = 's32[2]{0}', space=sflag, size = 0x8, scoped, tag = 'scoped memory for tpu_custom_call.1']
    #allocation7 [shape = 's32[2]{0}', space=sflag, size = 0x8, scoped, tag = 'scoped memory for tpu_custom_call.1']
    #allocation8 [shape = 's32[2]{0}', space=sflag, size = 0x8, scoped, tag = 'scoped memory for tpu_custom_call.1']
    #allocation9 [shape = 'u8[393216]{0}', space=vmem, size = 0x60000, scoped, tag = 'input window, operand 1, single buffered']
    #allocation10 [shape = 'u8[2048]{0}', space=vmem, size = 0x800, scoped, tag = 'input window, operand 3, single buffered']
    #allocation11 [shape = 's32[1]{0}', space=sflag, size = 0x4, scoped, tag = 'scoped memory for tpu_custom_call.1']
    #allocation12 [shape = 'u8[262144]{0}', space=vmem, size = 0x40000, scoped, tag = 'input window, operand 4, single buffered']
    #allocation13 [shape = 'u8[65536]{0}', space=vmem, size = 0x10000, scoped, tag = 'input window, operand 6, single buffered']
    #allocation14 [shape = 's32[1]{0}', space=sflag, size = 0x4, scoped, tag = 'scoped memory for tpu_custom_call.1']
    #allocation15 [shape = 'u8[1024]{0}', space=vmem, size = 0x400, scoped, tag = 'output window, operand 0']
    %17 = vsyncpa [#allocation8], 0
    %18 = vsyncpa [#allocation6], 0
    %19 = vsyncpa [#allocation11], 0
    %20 = vsyncpa [#allocation14], 0
    %21 = vsyncpa [#allocation7], 0
    %s22 = scalar_lea.sflag [#allocation7], 1
    %23 = vsyncpa %s22, 0
    loop: start=0, step=1, limit=5
    $region2: #{tpu_custom_call.1} parent=1 // loop_pre_header
      _
    $region3: #{tpu_custom_call.1} parent=1 // loop_header
      %s25 = sphi 0, %s29
      %p26 = scmp.ge.s32.totalorder %s25, 5
      %s33 = sphi 0, %s33
      %s35 = sphi 0, %s33
      %s36 = sphi 0, %s35
      %s50 = sphi 0, %s36
      %s54 = sphi 0, %s54
      %s56 = sphi 0, %s54
      %s57 = sphi 0, %s56
      %s71 = sphi 0, %s57
      %s75 = sphi 0, %s75
      %s77 = sphi 0, %s75
      %s78 = sphi 0, %s77
      %s92 = sphi 0, %s78
      %s96 = sphi 0, %s96
      %s98 = sphi 0, %s96
      %s99 = sphi 0, %s98
      %s113 = sphi 0, %s99
      %s117 = sphi 0, %s117
      %s119 = sphi 0, %s117
      %s120 = sphi 0, %s119
      %s134 = sphi 0, %s120
      %s138 = sphi 0, %s138
      %s140 = sphi 0, %s138
      %s141 = sphi 0, %s140
      %s155 = sphi 0, %s141
      %s159 = sphi 0, %s159
      %s161 = sphi 0, %s159
      %s162 = sphi 0, %s161
      %s176 = sphi 0, %s162
      %s180 = sphi 0, %s180
      %s182 = sphi 0, %s180
      %s183 = sphi 0, %s182
      %s197 = sphi 0, %s183
      %s201 = sphi 0, %s201
      %s203 = sphi 0, %s201
      %s204 = sphi 0, %s203
      %s218 = sphi 0, %s204
      %s222 = sphi 0, %s222
      %s224 = sphi 0, %s222
      %s225 = sphi 0, %s224
      %s239 = sphi 0, %s225
      %s245 = sphi 0, %s247
      %s248 = sphi 0, %s245
      %s249 = sphi 0, %s248
      %s265 = sphi 0, %s249
    $region4: #{tpu_custom_call.1} parent=1 // loop_header_branch
      %28 = sbr.rel (%p26) target = $region8
    $region5: #{tpu_custom_call.1} parent=1 // loop_body
      %s30 = ssub.s32 %s25, 1
      %s31 = ssub.s32 %s25, 2
      %s32 = sadd.s32 %s25, 1
      %s34 = sadd.s32 %s33, 1
      %p37 = scmp.eq.s32.totalorder %s25, 2
      %p38 = scmp.ne.s32.totalorder %s33, %s35
      %p39 = scmp.eq.s32.totalorder %s25, 0
      %p40 = por %p38, %p39
      %p41 = scmp.ne.s32.totalorder %s33, %s35
      %p42 = scmp.eq.s32.totalorder %s30, 2
      %p43 = por %p41, %p42
      %p44 = scmp.ne.s32.totalorder %s35, %s36
      %p45 = scmp.eq.s32.totalorder %s30, 0
      %p46 = por %p44, %p45
      %p47 = scmp.ne.s32.totalorder %s35, %s36
      %p48 = scmp.eq.s32.totalorder %s31, 2
      %p49 = por %p47, %p48
      %p51 = scmp.ne.s32.totalorder %s36, %s50
      %p52 = scmp.eq.s32.totalorder %s31, 0
      %p53 = por %p51, %p52
      %s55 = sadd.s32 %s54, 1
      %p58 = scmp.eq.s32.totalorder %s25, 2
      %p59 = scmp.ne.s32.totalorder %s54, %s56
      %p60 = scmp.eq.s32.totalorder %s25, 0
      %p61 = por %p59, %p60
      %p62 = scmp.ne.s32.totalorder %s54, %s56
      %p63 = scmp.eq.s32.totalorder %s30, 2
      %p64 = por %p62, %p63
      %p65 = scmp.ne.s32.totalorder %s56, %s57
      %p66 = scmp.eq.s32.totalorder %s30, 0
      %p67 = por %p65, %p66
      %p68 = scmp.ne.s32.totalorder %s56, %s57
      %p69 = scmp.eq.s32.totalorder %s31, 2
      %p70 = por %p68, %p69
      %p72 = scmp.ne.s32.totalorder %s57, %s71
      %p73 = scmp.eq.s32.totalorder %s31, 0
      %p74 = por %p72, %p73
      %s76 = sadd.s32 %s75, 1
      %p79 = scmp.eq.s32.totalorder %s25, 2
      %p80 = scmp.ne.s32.totalorder %s75, %s77
      %p81 = scmp.eq.s32.totalorder %s25, 0
      %p82 = por %p80, %p81
      %p83 = scmp.ne.s32.totalorder %s75, %s77
      %p84 = scmp.eq.s32.totalorder %s30, 2
      %p85 = por %p83, %p84
      %p86 = scmp.ne.s32.totalorder %s77, %s78
      %p87 = scmp.eq.s32.totalorder %s30, 0
      %p88 = por %p86, %p87
      %p89 = scmp.ne.s32.totalorder %s77, %s78
      %p90 = scmp.eq.s32.totalorder %s31, 2
      %p91 = por %p89, %p90
      %p93 = scmp.ne.s32.totalorder %s78, %s92
      %p94 = scmp.eq.s32.totalorder %s31, 0
      %p95 = por %p93, %p94
      %s97 = sadd.s32 %s96, 1
      %p100 = scmp.eq.s32.totalorder %s25, 2
      %p101 = scmp.ne.s32.totalorder %s96, %s98
      %p102 = scmp.eq.s32.totalorder %s25, 0
      %p103 = por %p101, %p102
      %p104 = scmp.ne.s32.totalorder %s96, %s98
      %p105 = scmp.eq.s32.totalorder %s30, 2
      %p106 = por %p104, %p105
      %p107 = scmp.ne.s32.totalorder %s98, %s99
      %p108 = scmp.eq.s32.totalorder %s30, 0
      %p109 = por %p107, %p108
      %p110 = scmp.ne.s32.totalorder %s98, %s99
      %p111 = scmp.eq.s32.totalorder %s31, 2
      %p112 = por %p110, %p111
      %p114 = scmp.ne.s32.totalorder %s99, %s113
      %p115 = scmp.eq.s32.totalorder %s31, 0
      %p116 = por %p114, %p115
      %s118 = sadd.s32 %s117, 1
      %p121 = scmp.eq.s32.totalorder %s25, 2
      %p122 = scmp.ne.s32.totalorder %s117, %s119
      %p123 = scmp.eq.s32.totalorder %s25, 0
      %p124 = por %p122, %p123
      %p125 = scmp.ne.s32.totalorder %s117, %s119
      %p126 = scmp.eq.s32.totalorder %s30, 2
      %p127 = por %p125, %p126
      %p128 = scmp.ne.s32.totalorder %s119, %s120
      %p129 = scmp.eq.s32.totalorder %s30, 0
      %p130 = por %p128, %p129
      %p131 = scmp.ne.s32.totalorder %s119, %s120
      %p132 = scmp.eq.s32.totalorder %s31, 2
      %p133 = por %p131, %p132
      %p135 = scmp.ne.s32.totalorder %s120, %s134
      %p136 = scmp.eq.s32.totalorder %s31, 0
      %p137 = por %p135, %p136
      %s139 = sadd.s32 %s138, 1
      %p142 = scmp.eq.s32.totalorder %s25, 2
      %p143 = scmp.ne.s32.totalorder %s138, %s140
      %p144 = scmp.eq.s32.totalorder %s25, 0
      %p145 = por %p143, %p144
      %p146 = scmp.ne.s32.totalorder %s138, %s140
      %p147 = scmp.eq.s32.totalorder %s30, 2
      %p148 = por %p146, %p147
      %p149 = scmp.ne.s32.totalorder %s140, %s141
      %p150 = scmp.eq.s32.totalorder %s30, 0
      %p151 = por %p149, %p150
      %p152 = scmp.ne.s32.totalorder %s140, %s141
      %p153 = scmp.eq.s32.totalorder %s31, 2
      %p154 = por %p152, %p153
      %p156 = scmp.ne.s32.totalorder %s141, %s155
      %p157 = scmp.eq.s32.totalorder %s31, 0
      %p158 = por %p156, %p157
      %s160 = sadd.s32 %s159, 1
      %p163 = scmp.eq.s32.totalorder %s25, 2
      %p164 = scmp.ne.s32.totalorder %s159, %s161
      %p165 = scmp.eq.s32.totalorder %s25, 0
      %p166 = por %p164, %p165
      %p167 = scmp.ne.s32.totalorder %s159, %s161
      %p168 = scmp.eq.s32.totalorder %s30, 2
      %p169 = por %p167, %p168
      %p170 = scmp.ne.s32.totalorder %s161, %s162
      %p171 = scmp.eq.s32.totalorder %s30, 0
      %p172 = por %p170, %p171
      %p173 = scmp.ne.s32.totalorder %s161, %s162
      %p174 = scmp.eq.s32.totalorder %s31, 2
      %p175 = por %p173, %p174
      %p177 = scmp.ne.s32.totalorder %s162, %s176
      %p178 = scmp.eq.s32.totalorder %s31, 0
      %p179 = por %p177, %p178
      %s181 = sadd.s32 %s180, 1
      %p184 = scmp.eq.s32.totalorder %s25, 2
      %p185 = scmp.ne.s32.totalorder %s180, %s182
      %p186 = scmp.eq.s32.totalorder %s25, 0
      %p187 = por %p185, %p186
      %p188 = scmp.ne.s32.totalorder %s180, %s182
      %p189 = scmp.eq.s32.totalorder %s30, 2
      %p190 = por %p188, %p189
      %p191 = scmp.ne.s32.totalorder %s182, %s183
      %p192 = scmp.eq.s32.totalorder %s30, 0
      %p193 = por %p191, %p192
      %p194 = scmp.ne.s32.totalorder %s182, %s183
      %p195 = scmp.eq.s32.totalorder %s31, 2
      %p196 = por %p194, %p195
      %p198 = scmp.ne.s32.totalorder %s183, %s197
      %p199 = scmp.eq.s32.totalorder %s31, 0
      %p200 = por %p198, %p199
      %s202 = sadd.s32 %s201, 1
      %p205 = scmp.eq.s32.totalorder %s25, 2
      %p206 = scmp.ne.s32.totalorder %s201, %s203
      %p207 = scmp.eq.s32.totalorder %s25, 0
      %p208 = por %p206, %p207
      %p209 = scmp.ne.s32.totalorder %s201, %s203
      %p210 = scmp.eq.s32.totalorder %s30, 2
      %p211 = por %p209, %p210
      %p212 = scmp.ne.s32.totalorder %s203, %s204
      %p213 = scmp.eq.s32.totalorder %s30, 0
      %p214 = por %p212, %p213
      %p215 = scmp.ne.s32.totalorder %s203, %s204
      %p216 = scmp.eq.s32.totalorder %s31, 2
      %p217 = por %p215, %p216
      %p219 = scmp.ne.s32.totalorder %s204, %s218
      %p220 = scmp.eq.s32.totalorder %s31, 0
      %p221 = por %p219, %p220
      %s223 = sadd.s32 %s222, 1
      %p226 = scmp.eq.s32.totalorder %s25, 2
      %p227 = scmp.ne.s32.totalorder %s222, %s224
      %p228 = scmp.eq.s32.totalorder %s25, 0
      %p229 = por %p227, %p228
      %p230 = scmp.ne.s32.totalorder %s222, %s224
      %p231 = scmp.eq.s32.totalorder %s30, 2
      %p232 = por %p230, %p231
      %p233 = scmp.ne.s32.totalorder %s224, %s225
      %p234 = scmp.eq.s32.totalorder %s30, 0
      %p235 = por %p233, %p234
      %p236 = scmp.ne.s32.totalorder %s224, %s225
      %p237 = scmp.eq.s32.totalorder %s31, 2
      %p238 = por %p236, %p237
      %p240 = scmp.ne.s32.totalorder %s225, %s239
      %p241 = scmp.eq.s32.totalorder %s31, 0
      %p242 = por %p240, %p241
      %s243 = ssub.s32 %s25, %s32
      %p244 = scmp.eq.s32.totalorder %s243, 0
      %s246 = sadd.s32 %s245, 1
      %s247 = scalar_select %p244, %s245, %s246
      %p250 = pneg %p244
      %p251 = scmp.eq.s32.totalorder %s25, 2
      %p252 = por %p250, %p251
      %p253 = scmp.ne.s32.totalorder %s245, %s248
      %p254 = scmp.eq.s32.totalorder %s25, 0
      %p255 = por %p253, %p254
      %p256 = scmp.ne.s32.totalorder %s245, %s248
      %p257 = scmp.eq.s32.totalorder %s30, 2
      %p258 = por %p256, %p257
      %p259 = scmp.ne.s32.totalorder %s248, %s249
      %p260 = scmp.eq.s32.totalorder %s30, 0
      %p261 = por %p259, %p260
      %p262 = scmp.ne.s32.totalorder %s248, %s249
      %p263 = scmp.eq.s32.totalorder %s31, 2
      %p264 = por %p262, %p263
      %p266 = scmp.ne.s32.totalorder %s249, %s265
      %p267 = scmp.eq.s32.totalorder %s31, 0
      %p268 = por %p266, %p267
      %p269 = scmp.le.s32.totalorder 1, %s25
      %p270 = scmp.lt.s32.totalorder %s25, 4
      %p271 = pnand %p269, %p270
      %p272 = pneg %p271
      // Predicated region
      $region9: #{tpu_custom_call.1} parent=5 // pred_check
        _
      $region10: #{tpu_custom_call.1} parent=5 // pred_check_branch
        %274 = sbr.rel (%p271) target = $region12
      $region11: #{tpu_custom_call.1} parent=5 // pred_region
        %s275 = ssub.s32 %s25, 1
        // Predicated region
        $region13: #{tpu_custom_call.1} parent=11 // pred_check
          %p276 = pneg %p46
        $region14: #{tpu_custom_call.1} parent=11 // pred_check_branch
          %278 = sbr.rel (%p276) target = $region16
        $region15: #{tpu_custom_call.1} parent=11 // pred_region
          %s280 = ssub.s32 16, 16
          %281 = vsyncadd [#allocation8], %s280
          %s283 = sshll.u32 %s0, 4
          %s284 = int_to_ptr.vmem [resolvable:$true] %s283
          %286 = dma.vmem_to_smem %s284, 16, [#allocation5], [#allocation8]
        $region16: #{tpu_custom_call.1} parent=11 // pred_fallthru
          _
        // Predicated region
        $region17: #{tpu_custom_call.1} parent=11 // pred_check
          %p287 = pneg %p67
        $region18: #{tpu_custom_call.1} parent=11 // pred_check_branch
          %289 = sbr.rel (%p287) target = $region20
        $region19: #{tpu_custom_call.1} parent=11 // pred_region
          %s291 = ssub.s32 12288, 12288
          %292 = vsyncadd [#allocation6], %s291
          %s293 = sshll.u32 [#allocation9], 4
          %s294 = int_to_ptr.vmem [resolvable:$true] %s293
          %299 = dma.hbm_to_vmem [thread:$0]  %s1, 12288, %s294, [#allocation6], 256, 256, 16
        $region20: #{tpu_custom_call.1} parent=11 // pred_fallthru
          _
        // Predicated region
        $region21: #{tpu_custom_call.1} parent=11 // pred_check
          %p300 = pneg %p88
        $region22: #{tpu_custom_call.1} parent=11 // pred_check_branch
          %302 = sbr.rel (%p300) target = $region24
        $region23: #{tpu_custom_call.1} parent=11 // pred_region
          _
        $region24: #{tpu_custom_call.1} parent=11 // pred_fallthru
          _
        // Predicated region
        $region25: #{tpu_custom_call.1} parent=11 // pred_check
          %p303 = pneg %p109
        $region26: #{tpu_custom_call.1} parent=11 // pred_check_branch
          %305 = sbr.rel (%p303) target = $region28
        $region27: #{tpu_custom_call.1} parent=11 // pred_region
          %s307 = ssub.s32 64, 64
          %308 = vsyncadd [#allocation11], %s307
          %s310 = sshll.u32 [#allocation10], 4
          %s311 = int_to_ptr.vmem [resolvable:$true] %s310
          %313 = dma.hbm_to_vmem [thread:$0]  %s3, 64, %s311, [#allocation11]
        $region28: #{tpu_custom_call.1} parent=11 // pred_fallthru
          _
        // Predicated region
        $region29: #{tpu_custom_call.1} parent=11 // pred_check
          %p314 = pneg %p130
        $region30: #{tpu_custom_call.1} parent=11 // pred_check_branch
          %316 = sbr.rel (%p314) target = $region32
        $region31: #{tpu_custom_call.1} parent=11 // pred_region
          %s318 = ssub.s32 8192, 8192
          %319 = vsyncadd [#allocation11], %s318
          %s320 = sshll.u32 [#allocation12], 4
          %s321 = int_to_ptr.vmem [resolvable:$true] %s320
          %326 = dma.hbm_to_vmem [thread:$0]  %s4, 8192, %s321, [#allocation11], 128, 128, 8
        $region32: #{tpu_custom_call.1} parent=11 // pred_fallthru
          _
        // Predicated region
        $region33: #{tpu_custom_call.1} parent=11 // pred_check
          %p327 = pneg %p151
        $region34: #{tpu_custom_call.1} parent=11 // pred_check_branch
          %329 = sbr.rel (%p327) target = $region36
        $region35: #{tpu_custom_call.1} parent=11 // pred_region
          _
        $region36: #{tpu_custom_call.1} parent=11 // pred_fallthru
          _
        // Predicated region
        $region37: #{tpu_custom_call.1} parent=11 // pred_check
          %p330 = pneg %p172
        $region38: #{tpu_custom_call.1} parent=11 // pred_check_branch
          %332 = sbr.rel (%p330) target = $region40
        $region39: #{tpu_custom_call.1} parent=11 // pred_region
          %s334 = ssub.s32 2048, 2048
          %335 = vsyncadd [#allocation14], %s334
          %s336 = sshll.u32 [#allocation13], 4
          %s337 = int_to_ptr.vmem [resolvable:$true] %s336
          %342 = dma.hbm_to_vmem [thread:$0]  %s6, 2048, %s337, [#allocation14], 64, 64, 4
        $region40: #{tpu_custom_call.1} parent=11 // pred_fallthru
          _
        // Predicated region
        $region41: #{tpu_custom_call.1} parent=11 // pred_check
          %p343 = pneg %p193
        $region42: #{tpu_custom_call.1} parent=11 // pred_check_branch
          %345 = sbr.rel (%p343) target = $region44
        $region43: #{tpu_custom_call.1} parent=11 // pred_region
          _
        $region44: #{tpu_custom_call.1} parent=11 // pred_fallthru
          _
        // Predicated region
        $region45: #{tpu_custom_call.1} parent=11 // pred_check
          %p346 = pneg %p214
        $region46: #{tpu_custom_call.1} parent=11 // pred_check_branch
          %348 = sbr.rel (%p346) target = $region48
        $region47: #{tpu_custom_call.1} parent=11 // pred_region
          _
        $region48: #{tpu_custom_call.1} parent=11 // pred_fallthru
          _
        // Predicated region
        $region49: #{tpu_custom_call.1} parent=11 // pred_check
          %p349 = pneg %p235
        $region50: #{tpu_custom_call.1} parent=11 // pred_check_branch
          %351 = sbr.rel (%p349) target = $region52
        $region51: #{tpu_custom_call.1} parent=11 // pred_region
          _
        $region52: #{tpu_custom_call.1} parent=11 // pred_fallthru
          _
      $region12: #{tpu_custom_call.1} parent=5 // pred_fallthru
        _
      %p352 = scmp.lt.s32.totalorder %s25, 3
      // Predicated region
      $region53: #{tpu_custom_call.1} parent=5 // pred_check
        %p353 = pneg %p352
      $region54: #{tpu_custom_call.1} parent=5 // pred_check_branch
        %355 = sbr.rel (%p353) target = $region56
      $region55: #{tpu_custom_call.1} parent=5 // pred_region
        _
      $region56: #{tpu_custom_call.1} parent=5 // pred_fallthru
        _
      %p356 = scmp.le.s32.totalorder 1, %s25
      %p357 = scmp.lt.s32.totalorder %s25, 4
      %p358 = pnand %p356, %p357
      %p359 = pneg %p358
      // Predicated region
      $region57: #{tpu_custom_call.1} parent=5 // pred_check
        _
      $region58: #{tpu_custom_call.1} parent=5 // pred_check_branch
        %361 = sbr.rel (%p358) target = $region60
      $region59: #{tpu_custom_call.1} parent=5 // pred_region
        %s362 = ssub.s32 %s25, 1
        // Predicated region
        $region61: #{tpu_custom_call.1} parent=59 // pred_check
          %p363 = pneg %p46
        $region62: #{tpu_custom_call.1} parent=59 // pred_check_branch
          %365 = sbr.rel (%p363) target = $region64
        $region63: #{tpu_custom_call.1} parent=59 // pred_region
          %366 = dma.done [#allocation8], 16
        $region64: #{tpu_custom_call.1} parent=59 // pred_fallthru
          _
        // Predicated region
        $region65: #{tpu_custom_call.1} parent=59 // pred_check
          %p367 = pneg %p67
        $region66: #{tpu_custom_call.1} parent=59 // pred_check_branch
          %369 = sbr.rel (%p367) target = $region68
        $region67: #{tpu_custom_call.1} parent=59 // pred_region
          %370 = dma.done [#allocation6], 12288
        $region68: #{tpu_custom_call.1} parent=59 // pred_fallthru
          _
        // Predicated region
        $region69: #{tpu_custom_call.1} parent=59 // pred_check
          %p371 = pneg %p109
        $region70: #{tpu_custom_call.1} parent=59 // pred_check_branch
          %373 = sbr.rel (%p371) target = $region72
        $region71: #{tpu_custom_call.1} parent=59 // pred_region
          %374 = dma.done [#allocation11], 64
        $region72: #{tpu_custom_call.1} parent=59 // pred_fallthru
          _
        // Predicated region
        $region73: #{tpu_custom_call.1} parent=59 // pred_check
          %p375 = pneg %p130
        $region74: #{tpu_custom_call.1} parent=59 // pred_check_branch
          %377 = sbr.rel (%p375) target = $region76
        $region75: #{tpu_custom_call.1} parent=59 // pred_region
          %378 = dma.done [#allocation11], 8192
        $region76: #{tpu_custom_call.1} parent=59 // pred_fallthru
          _
        // Predicated region
        $region77: #{tpu_custom_call.1} parent=59 // pred_check
          %p379 = pneg %p172
        $region78: #{tpu_custom_call.1} parent=59 // pred_check_branch
          %381 = sbr.rel (%p379) target = $region80
        $region79: #{tpu_custom_call.1} parent=59 // pred_region
          %382 = dma.done [#allocation14], 2048
        $region80: #{tpu_custom_call.1} parent=59 // pred_fallthru
          _
        %383 = sfence
        %p384 = pneg %p46
        %p385 = pneg %p43
        %p386 = pneg %p67
        %p387 = pneg %p64
        %p388 = pneg %p88
        %p389 = pneg %p85
        %p390 = pneg %p109
        %p391 = pneg %p106
        %p392 = pneg %p130
        %p393 = pneg %p127
        %p394 = pneg %p151
        %p395 = pneg %p148
        %p396 = pneg %p172
        %p397 = pneg %p169
        %p398 = pneg %p193
        %p399 = pneg %p190
        %p400 = pneg %p214
        %p401 = pneg %p211
        %p402 = pneg %p235
        %p403 = pneg %p232
        %p404 = pneg %p261
        %p405 = pneg %p258
        %s406 = sand.u32 %s248, 1
        %s407 = scalar_lea.sflag [#allocation7], %s406
        %s408 = sand.u32 %s248, 1
        %s409 = scalar_lea.vmem [#allocation15], %s408
        %p411 = scmp.eq.s32.totalorder %s30, 0
        // Predicated region
        $region81: #{tpu_custom_call.1} parent=59 // pred_check
          %p412 = pneg %p411
        $region82: #{tpu_custom_call.1} parent=59 // pred_check_branch
          %414 = sbr.rel (%p412) target = $region84
        $region83: #{tpu_custom_call.1} parent=59 // pred_region
          %s415 = sld [smem:[#allocation5]]
          %s416 = sld [smem:[#allocation5 + $0x1]]
          %v417 = vld [vmem:[#allocation9] sm:$0xff]
          %v418 = vld [vmem:[#allocation9 + $0x8] sm:$0xff]
          %v419 = vld [vmem:[#allocation9 + $0x10] sm:$0xff]
          %v420 = vld [vmem:[#allocation9 + $0x18] sm:$0xff]
          %v421 = vld [vmem:[#allocation9 + $0x20] sm:$0xff]
          %v422 = vld [vmem:[#allocation9 + $0x28] sm:$0xff]
          %v423 = vld [vmem:[#allocation9 + $0x30] sm:$0xff]
          %v424 = vld [vmem:[#allocation9 + $0x38] sm:$0xff]
          %v425 = vld [vmem:[#allocation9 + $0x40] sm:$0xff]
          %v426 = vld [vmem:[#allocation9 + $0x48] sm:$0xff]
          %v427 = vld [vmem:[#allocation9 + $0x50] sm:$0xff]
          %v428 = vld [vmem:[#allocation9 + $0x58] sm:$0xff]
          %v429 = vld [vmem:[#allocation9 + $0x60] sm:$0xff]
          %v430 = vld [vmem:[#allocation9 + $0x68] sm:$0xff]
          %v431 = vld [vmem:[#allocation9 + $0x70] sm:$0xff]
          %v432 = vld [vmem:[#allocation9 + $0x78] sm:$0xff]
          %v433 = vld [vmem:[#allocation9 + $0x80] sm:$0xff]
          %v434 = vld [vmem:[#allocation9 + $0x88] sm:$0xff]
          %v435 = vld [vmem:[#allocation9 + $0x90] sm:$0xff]
          %v436 = vld [vmem:[#allocation9 + $0x98] sm:$0xff]
          %v437 = vld [vmem:[#allocation9 + $0xa0] sm:$0xff]
          %v438 = vld [vmem:[#allocation9 + $0xa8] sm:$0xff]
          %v439 = vld [vmem:[#allocation9 + $0xb0] sm:$0xff]
          %v440 = vld [vmem:[#allocation9 + $0xb8] sm:$0xff]
          %v441 = vld [vmem:[#allocation9 + $0xc0] sm:$0xff]
          %v442 = vld [vmem:[#allocation9 + $0xc8] sm:$0xff]
          %v443 = vld [vmem:[#allocation9 + $0xd0] sm:$0xff]
          %v444 = vld [vmem:[#allocation9 + $0xd8] sm:$0xff]
          %v445 = vld [vmem:[#allocation9 + $0xe0] sm:$0xff]
          %v446 = vld [vmem:[#allocation9 + $0xe8] sm:$0xff]
          %v447 = vld [vmem:[#allocation9 + $0xf0] sm:$0xff]
          %v448 = vld [vmem:[#allocation9 + $0xf8] sm:$0xff]
          %v449 = vld [vmem:[#allocation9 + $0x100] sm:$0xff]
          %v450 = vld [vmem:[#allocation9 + $0x108] sm:$0xff]
          %v451 = vld [vmem:[#allocation9 + $0x110] sm:$0xff]
          %v452 = vld [vmem:[#allocation9 + $0x118] sm:$0xff]
          %v453 = vld [vmem:[#allocation9 + $0x120] sm:$0xff]
          %v454 = vld [vmem:[#allocation9 + $0x128] sm:$0xff]
          %v455 = vld [vmem:[#allocation9 + $0x130] sm:$0xff]
          %v456 = vld [vmem:[#allocation9 + $0x138] sm:$0xff]
          %v457 = vld [vmem:[#allocation9 + $0x140] sm:$0xff]
          %v458 = vld [vmem:[#allocation9 + $0x148] sm:$0xff]
          %v459 = vld [vmem:[#allocation9 + $0x150] sm:$0xff]
          %v460 = vld [vmem:[#allocation9 + $0x158] sm:$0xff]
          %v461 = vld [vmem:[#allocation9 + $0x160] sm:$0xff]
          %v462 = vld [vmem:[#allocation9 + $0x168] sm:$0xff]
          %v463 = vld [vmem:[#allocation9 + $0x170] sm:$0xff]
          %v464 = vld [vmem:[#allocation9 + $0x178] sm:$0xff]
          %v465 = vld [vmem:[#allocation9 + $0x180] sm:$0xff]
          %v466 = vld [vmem:[#allocation9 + $0x188] sm:$0xff]
          %v467 = vld [vmem:[#allocation9 + $0x190] sm:$0xff]
          %v468 = vld [vmem:[#allocation9 + $0x198] sm:$0xff]
          %v469 = vld [vmem:[#allocation9 + $0x1a0] sm:$0xff]
          %v470 = vld [vmem:[#allocation9 + $0x1a8] sm:$0xff]
          %v471 = vld [vmem:[#allocation9 + $0x1b0] sm:$0xff]
          %v472 = vld [vmem:[#allocation9 + $0x1b8] sm:$0xff]
          %v473 = vld [vmem:[#allocation9 + $0x1c0] sm:$0xff]
          %v474 = vld [vmem:[#allocation9 + $0x1c8] sm:$0xff]
          %v475 = vld [vmem:[#allocation9 + $0x1d0] sm:$0xff]
          %v476 = vld [vmem:[#allocation9 + $0x1d8] sm:$0xff]
          %v477 = vld [vmem:[#allocation9 + $0x1e0] sm:$0xff]
          %v478 = vld [vmem:[#allocation9 + $0x1e8] sm:$0xff]
          %v479 = vld [vmem:[#allocation9 + $0x1f0] sm:$0xff]
          %v480 = vld [vmem:[#allocation9 + $0x1f8] sm:$0xff]
          %v481 = vld [vmem:[#allocation9 + $0x200] sm:$0xff]
          %v482 = vld [vmem:[#allocation9 + $0x208] sm:$0xff]
          %v483 = vld [vmem:[#allocation9 + $0x210] sm:$0xff]
          %v484 = vld [vmem:[#allocation9 + $0x218] sm:$0xff]
          %v485 = vld [vmem:[#allocation9 + $0x220] sm:$0xff]
          %v486 = vld [vmem:[#allocation9 + $0x228] sm:$0xff]
          %v487 = vld [vmem:[#allocation9 + $0x230] sm:$0xff]
          %v488 = vld [vmem:[#allocation9 + $0x238] sm:$0xff]
          %v489 = vld [vmem:[#allocation9 + $0x240] sm:$0xff]
          %v490 = vld [vmem:[#allocation9 + $0x248] sm:$0xff]
          %v491 = vld [vmem:[#allocation9 + $0x250] sm:$0xff]
          %v492 = vld [vmem:[#allocation9 + $0x258] sm:$0xff]
          %v493 = vld [vmem:[#allocation9 + $0x260] sm:$0xff]
          %v494 = vld [vmem:[#allocation9 + $0x268] sm:$0xff]
          %v495 = vld [vmem:[#allocation9 + $0x270] sm:$0xff]
          %v496 = vld [vmem:[#allocation9 + $0x278] sm:$0xff]
          %v497 = vld [vmem:[#allocation9 + $0x280] sm:$0xff]
          %v498 = vld [vmem:[#allocation9 + $0x288] sm:$0xff]
          %v499 = vld [vmem:[#allocation9 + $0x290] sm:$0xff]
          %v500 = vld [vmem:[#allocation9 + $0x298] sm:$0xff]
          %v501 = vld [vmem:[#allocation9 + $0x2a0] sm:$0xff]
          %v502 = vld [vmem:[#allocation9 + $0x2a8] sm:$0xff]
          %v503 = vld [vmem:[#allocation9 + $0x2b0] sm:$0xff]
          %v504 = vld [vmem:[#allocation9 + $0x2b8] sm:$0xff]
          %v505 = vld [vmem:[#allocation9 + $0x2c0] sm:$0xff]
          %v506 = vld [vmem:[#allocation9 + $0x2c8] sm:$0xff]
          %v507 = vld [vmem:[#allocation9 + $0x2d0] sm:$0xff]
          %v508 = vld [vmem:[#allocation9 + $0x2d8] sm:$0xff]
          %v509 = vld [vmem:[#allocation9 + $0x2e0] sm:$0xff]
          %v510 = vld [vmem:[#allocation9 + $0x2e8] sm:$0xff]
          %v511 = vld [vmem:[#allocation9 + $0x2f0] sm:$0xff]
          %v512 = vld [vmem:[#allocation9 + $0x2f8] sm:$0xff]
          %v513 = vunpack.c.l.bf16 %v417
          %v514 = vunpack.c.h.bf16 %v417
          %v515 = vunpack.c.l.bf16 %v418
          %v516 = vunpack.c.h.bf16 %v418
          %v517 = vunpack.c.l.bf16 %v419
          %v518 = vunpack.c.h.bf16 %v419
          %v519 = vunpack.c.l.bf16 %v420
          %v520 = vunpack.c.h.bf16 %v420
          %v521 = vunpack.c.l.bf16 %v421
          %v522 = vunpack.c.h.bf16 %v421
          %v523 = vunpack.c.l.bf16 %v422
          %v524 = vunpack.c.h.bf16 %v422
          %v525 = vunpack.c.l.bf16 %v423
          %v526 = vunpack.c.h.bf16 %v423
          %v527 = vunpack.c.l.bf16 %v424
          %v528 = vunpack.c.h.bf16 %v424
          %v529 = vunpack.c.l.bf16 %v425
          %v530 = vunpack.c.h.bf16 %v425
          %v531 = vunpack.c.l.bf16 %v426
          %v532 = vunpack.c.h.bf16 %v426
          %v533 = vunpack.c.l.bf16 %v427
          %v534 = vunpack.c.h.bf16 %v427
          %v535 = vunpack.c.l.bf16 %v428
          %v536 = vunpack.c.h.bf16 %v428
          %v537 = vunpack.c.l.bf16 %v429
          %v538 = vunpack.c.h.bf16 %v429
          %v539 = vunpack.c.l.bf16 %v430
          %v540 = vunpack.c.h.bf16 %v430
          %v541 = vunpack.c.l.bf16 %v431
          %v542 = vunpack.c.h.bf16 %v431
          %v543 = vunpack.c.l.bf16 %v432
          %v544 = vunpack.c.h.bf16 %v432
          %v545 = vunpack.c.l.bf16 %v433
          %v546 = vunpack.c.h.bf16 %v433
          %v547 = vunpack.c.l.bf16 %v434
          %v548 = vunpack.c.h.bf16 %v434
          %v549 = vunpack.c.l.bf16 %v435
          %v550 = vunpack.c.h.bf16 %v435
          %v551 = vunpack.c.l.bf16 %v436
          %v552 = vunpack.c.h.bf16 %v436
          %v553 = vunpack.c.l.bf16 %v437
          %v554 = vunpack.c.h.bf16 %v437
          %v555 = vunpack.c.l.bf16 %v438
          %v556 = vunpack.c.h.bf16 %v438
          %v557 = vunpack.c.l.bf16 %v439
          %v558 = vunpack.c.h.bf16 %v439
          %v559 = vunpack.c.l.bf16 %v440
          %v560 = vunpack.c.h.bf16 %v440
          %v561 = vunpack.c.l.bf16 %v441
          %v562 = vunpack.c.h.bf16 %v441
          %v563 = vunpack.c.l.bf16 %v442
          %v564 = vunpack.c.h.bf16 %v442
          %v565 = vunpack.c.l.bf16 %v443
          %v566 = vunpack.c.h.bf16 %v443
          %v567 = vunpack.c.l.bf16 %v444
          %v568 = vunpack.c.h.bf16 %v444
          %v569 = vunpack.c.l.bf16 %v445
          %v570 = vunpack.c.h.bf16 %v445
          %v571 = vunpack.c.l.bf16 %v446
          %v572 = vunpack.c.h.bf16 %v446
          %v573 = vunpack.c.l.bf16 %v447
          %v574 = vunpack.c.h.bf16 %v447
          %v575 = vunpack.c.l.bf16 %v448
          %v576 = vunpack.c.h.bf16 %v448
          %v577 = vunpack.c.l.bf16 %v449
          %v578 = vunpack.c.h.bf16 %v449
          %v579 = vunpack.c.l.bf16 %v450
          %v580 = vunpack.c.h.bf16 %v450
          %v581 = vunpack.c.l.bf16 %v451
          %v582 = vunpack.c.h.bf16 %v451
          %v583 = vunpack.c.l.bf16 %v452
          %v584 = vunpack.c.h.bf16 %v452
          %v585 = vunpack.c.l.bf16 %v453
          %v586 = vunpack.c.h.bf16 %v453
          %v587 = vunpack.c.l.bf16 %v454
          %v588 = vunpack.c.h.bf16 %v454
          %v589 = vunpack.c.l.bf16 %v455
          %v590 = vunpack.c.h.bf16 %v455
          %v591 = vunpack.c.l.bf16 %v456
          %v592 = vunpack.c.h.bf16 %v456
          %v593 = vunpack.c.l.bf16 %v457
          %v594 = vunpack.c.h.bf16 %v457
          %v595 = vunpack.c.l.bf16 %v458
          %v596 = vunpack.c.h.bf16 %v458
          %v597 = vunpack.c.l.bf16 %v459
          %v598 = vunpack.c.h.bf16 %v459
          %v599 = vunpack.c.l.bf16 %v460
          %v600 = vunpack.c.h.bf16 %v460
          %v601 = vunpack.c.l.bf16 %v461
          %v602 = vunpack.c.h.bf16 %v461
          %v603 = vunpack.c.l.bf16 %v462
          %v604 = vunpack.c.h.bf16 %v462
          %v605 = vunpack.c.l.bf16 %v463
          %v606 = vunpack.c.h.bf16 %v463
          %v607 = vunpack.c.l.bf16 %v464
          %v608 = vunpack.c.h.bf16 %v464
          %v609 = vunpack.c.l.bf16 %v465
          %v610 = vunpack.c.h.bf16 %v465
          %v611 = vunpack.c.l.bf16 %v466
          %v612 = vunpack.c.h.bf16 %v466
          %v613 = vunpack.c.l.bf16 %v467
          %v614 = vunpack.c.h.bf16 %v467
          %v615 = vunpack.c.l.bf16 %v468
          %v616 = vunpack.c.h.bf16 %v468
          %v617 = vunpack.c.l.bf16 %v469
          %v618 = vunpack.c.h.bf16 %v469
          %v619 = vunpack.c.l.bf16 %v470
          %v620 = vunpack.c.h.bf16 %v470
          %v621 = vunpack.c.l.bf16 %v471
          %v622 = vunpack.c.h.bf16 %v471
          %v623 = vunpack.c.l.bf16 %v472
          %v624 = vunpack.c.h.bf16 %v472
          %v625 = vunpack.c.l.bf16 %v473
          %v626 = vunpack.c.h.bf16 %v473
          %v627 = vunpack.c.l.bf16 %v474
          %v628 = vunpack.c.h.bf16 %v474
          %v629 = vunpack.c.l.bf16 %v475
          %v630 = vunpack.c.h.bf16 %v475
          %v631 = vunpack.c.l.bf16 %v476
          %v632 = vunpack.c.h.bf16 %v476
          %v633 = vunpack.c.l.bf16 %v477
          %v634 = vunpack.c.h.bf16 %v477
          %v635 = vunpack.c.l.bf16 %v478
          %v636 = vunpack.c.h.bf16 %v478
          %v637 = vunpack.c.l.bf16 %v479
          %v638 = vunpack.c.h.bf16 %v479
          %v639 = vunpack.c.l.bf16 %v480
          %v640 = vunpack.c.h.bf16 %v480
          %v641 = vunpack.c.l.bf16 %v481
          %v642 = vunpack.c.h.bf16 %v481
          %v643 = vunpack.c.l.bf16 %v482
          %v644 = vunpack.c.h.bf16 %v482
          %v645 = vunpack.c.l.bf16 %v483
          %v646 = vunpack.c.h.bf16 %v483
          %v647 = vunpack.c.l.bf16 %v484
          %v648 = vunpack.c.h.bf16 %v484
          %v649 = vunpack.c.l.bf16 %v485
          %v650 = vunpack.c.h.bf16 %v485
          %v651 = vunpack.c.l.bf16 %v486
          %v652 = vunpack.c.h.bf16 %v486
          %v653 = vunpack.c.l.bf16 %v487
          %v654 = vunpack.c.h.bf16 %v487
          %v655 = vunpack.c.l.bf16 %v488
          %v656 = vunpack.c.h.bf16 %v488
          %v657 = vunpack.c.l.bf16 %v489
          %v658 = vunpack.c.h.bf16 %v489
          %v659 = vunpack.c.l.bf16 %v490
          %v660 = vunpack.c.h.bf16 %v490
          %v661 = vunpack.c.l.bf16 %v491
          %v662 = vunpack.c.h.bf16 %v491
          %v663 = vunpack.c.l.bf16 %v492
          %v664 = vunpack.c.h.bf16 %v492
          %v665 = vunpack.c.l.bf16 %v493
          %v666 = vunpack.c.h.bf16 %v493
          %v667 = vunpack.c.l.bf16 %v494
          %v668 = vunpack.c.h.bf16 %v494
          %v669 = vunpack.c.l.bf16 %v495
          %v670 = vunpack.c.h.bf16 %v495
          %v671 = vunpack.c.l.bf16 %v496
          %v672 = vunpack.c.h.bf16 %v496
          %v673 = vunpack.c.l.bf16 %v497
          %v674 = vunpack.c.h.bf16 %v497
          %v675 = vunpack.c.l.bf16 %v498
          %v676 = vunpack.c.h.bf16 %v498
          %v677 = vunpack.c.l.bf16 %v499
          %v678 = vunpack.c.h.bf16 %v499
          %v679 = vunpack.c.l.bf16 %v500
          %v680 = vunpack.c.h.bf16 %v500
          %v681 = vunpack.c.l.bf16 %v501
          %v682 = vunpack.c.h.bf16 %v501
          %v683 = vunpack.c.l.bf16 %v502
          %v684 = vunpack.c.h.bf16 %v502
          %v685 = vunpack.c.l.bf16 %v503
          %v686 = vunpack.c.h.bf16 %v503
          %v687 = vunpack.c.l.bf16 %v504
          %v688 = vunpack.c.h.bf16 %v504
          %v689 = vunpack.c.l.bf16 %v505
          %v690 = vunpack.c.h.bf16 %v505
          %v691 = vunpack.c.l.bf16 %v506
          %v692 = vunpack.c.h.bf16 %v506
          %v693 = vunpack.c.l.bf16 %v507
          %v694 = vunpack.c.h.bf16 %v507
          %v695 = vunpack.c.l.bf16 %v508
          %v696 = vunpack.c.h.bf16 %v508
          %v697 = vunpack.c.l.bf16 %v509
          %v698 = vunpack.c.h.bf16 %v509
          %v699 = vunpack.c.l.bf16 %v510
          %v700 = vunpack.c.h.bf16 %v510
          %v701 = vunpack.c.l.bf16 %v511
          %v702 = vunpack.c.h.bf16 %v511
          %v703 = vunpack.c.l.bf16 %v512
          %v704 = vunpack.c.h.bf16 %v512
          %v705 = vadd.f32 %v513, %v517
          %v706 = vadd.f32 %v705, %v521
          %v707 = vadd.f32 %v706, %v525
          %v708 = vadd.f32 %v707, %v529
          %v709 = vadd.f32 %v708, %v533
          %v710 = vadd.f32 %v709, %v537
          %v711 = vadd.f32 %v710, %v541
          %v712 = vadd.f32 %v711, %v545
          %v713 = vadd.f32 %v712, %v549
          %v714 = vadd.f32 %v713, %v553
          %v715 = vadd.f32 %v714, %v557
          %v716 = vadd.f32 %v715, %v561
          %v717 = vadd.f32 %v716, %v565
          %v718 = vadd.f32 %v717, %v569
          %v719 = vadd.f32 %v718, %v573
          %v720 = vadd.f32 %v719, %v577
          %v721 = vadd.f32 %v720, %v581
          %v722 = vadd.f32 %v721, %v585
          %v723 = vadd.f32 %v722, %v589
          %v724 = vadd.f32 %v723, %v593
          %v725 = vadd.f32 %v724, %v597
          %v726 = vadd.f32 %v725, %v601
          %v727 = vadd.f32 %v726, %v605
          %v728 = vadd.f32 %v727, %v609
          %v729 = vadd.f32 %v728, %v613
          %v730 = vadd.f32 %v729, %v617
          %v731 = vadd.f32 %v730, %v621
          %v732 = vadd.f32 %v731, %v625
          %v733 = vadd.f32 %v732, %v629
          %v734 = vadd.f32 %v733, %v633
          %v735 = vadd.f32 %v734, %v637
          %v736 = vadd.f32 %v735, %v641
          %v737 = vadd.f32 %v736, %v645
          %v738 = vadd.f32 %v737, %v649
          %v739 = vadd.f32 %v738, %v653
          %v740 = vadd.f32 %v739, %v657
          %v741 = vadd.f32 %v740, %v661
          %v742 = vadd.f32 %v741, %v665
          %v743 = vadd.f32 %v742, %v669
          %v744 = vadd.f32 %v743, %v673
          %v745 = vadd.f32 %v744, %v677
          %v746 = vadd.f32 %v745, %v681
          %v747 = vadd.f32 %v746, %v685
          %v748 = vadd.f32 %v747, %v689
          %v749 = vadd.f32 %v748, %v693
          %v750 = vadd.f32 %v749, %v697
          %v751 = vadd.f32 %v750, %v701
          %v752 = vrot.slane %v751, 4
          %v753 = vadd.f32 %v751, %v752
          %v754 = vrot.slane %v753, 2
          %v755 = vadd.f32 %v753, %v754
          %v756 = vrot.slane %v755, 1
          %v757 = vadd.f32 %v755, %v756
          %v758 = vadd.f32 %v514, %v518
          %v759 = vadd.f32 %v758, %v522
          %v760 = vadd.f32 %v759, %v526
          %v761 = vadd.f32 %v760, %v530
          %v762 = vadd.f32 %v761, %v534
          %v763 = vadd.f32 %v762, %v538
          %v764 = vadd.f32 %v763, %v542
          %v765 = vadd.f32 %v764, %v546
          %v766 = vadd.f32 %v765, %v550
          %v767 = vadd.f32 %v766, %v554
          %v768 = vadd.f32 %v767, %v558
          %v769 = vadd.f32 %v768, %v562
          %v770 = vadd.f32 %v769, %v566
          %v771 = vadd.f32 %v770, %v570
          %v772 = vadd.f32 %v771, %v574
          %v773 = vadd.f32 %v772, %v578
          %v774 = vadd.f32 %v773, %v582
          %v775 = vadd.f32 %v774, %v586
          %v776 = vadd.f32 %v775, %v590
          %v777 = vadd.f32 %v776, %v594
          %v778 = vadd.f32 %v777, %v598
          %v779 = vadd.f32 %v778, %v602
          %v780 = vadd.f32 %v779, %v606
          %v781 = vadd.f32 %v780, %v610
          %v782 = vadd.f32 %v781, %v614
          %v783 = vadd.f32 %v782, %v618
          %v784 = vadd.f32 %v783, %v622
          %v785 = vadd.f32 %v784, %v626
          %v786 = vadd.f32 %v785, %v630
          %v787 = vadd.f32 %v786, %v634
          %v788 = vadd.f32 %v787, %v638
          %v789 = vadd.f32 %v788, %v642
          %v790 = vadd.f32 %v789, %v646
          %v791 = vadd.f32 %v790, %v650
          %v792 = vadd.f32 %v791, %v654
          %v793 = vadd.f32 %v792, %v658
          %v794 = vadd.f32 %v793, %v662
          %v795 = vadd.f32 %v794, %v666
          %v796 = vadd.f32 %v795, %v670
          %v797 = vadd.f32 %v796, %v674
          %v798 = vadd.f32 %v797, %v678
          %v799 = vadd.f32 %v798, %v682
          %v800 = vadd.f32 %v799, %v686
          %v801 = vadd.f32 %v800, %v690
          %v802 = vadd.f32 %v801, %v694
          %v803 = vadd.f32 %v802, %v698
          %v804 = vadd.f32 %v803, %v702
          %v805 = vrot.slane %v804, 4
          %v806 = vadd.f32 %v804, %v805
          %v807 = vrot.slane %v806, 2
          %v808 = vadd.f32 %v806, %v807
          %v809 = vrot.slane %v808, 1
          %v810 = vadd.f32 %v808, %v809
          %v811 = vadd.f32 %v515, %v519
          %v812 = vadd.f32 %v811, %v523
          %v813 = vadd.f32 %v812, %v527
          %v814 = vadd.f32 %v813, %v531
          %v815 = vadd.f32 %v814, %v535
          %v816 = vadd.f32 %v815, %v539
          %v817 = vadd.f32 %v816, %v543
          %v818 = vadd.f32 %v817, %v547
          %v819 = vadd.f32 %v818, %v551
          %v820 = vadd.f32 %v819, %v555
          %v821 = vadd.f32 %v820, %v559
          %v822 = vadd.f32 %v821, %v563
          %v823 = vadd.f32 %v822, %v567
          %v824 = vadd.f32 %v823, %v571
          %v825 = vadd.f32 %v824, %v575
          %v826 = vadd.f32 %v825, %v579
          %v827 = vadd.f32 %v826, %v583
          %v828 = vadd.f32 %v827, %v587
          %v829 = vadd.f32 %v828, %v591
          %v830 = vadd.f32 %v829, %v595
          %v831 = vadd.f32 %v830, %v599
          %v832 = vadd.f32 %v831, %v603
          %v833 = vadd.f32 %v832, %v607
          %v834 = vadd.f32 %v833, %v611
          %v835 = vadd.f32 %v834, %v615
          %v836 = vadd.f32 %v835, %v619
          %v837 = vadd.f32 %v836, %v623
          %v838 = vadd.f32 %v837, %v627
          %v839 = vadd.f32 %v838, %v631
          %v840 = vadd.f32 %v839, %v635
          %v841 = vadd.f32 %v840, %v639
          %v842 = vadd.f32 %v841, %v643
          %v843 = vadd.f32 %v842, %v647
          %v844 = vadd.f32 %v843, %v651
          %v845 = vadd.f32 %v844, %v655
          %v846 = vadd.f32 %v845, %v659
          %v847 = vadd.f32 %v846, %v663
          %v848 = vadd.f32 %v847, %v667
          %v849 = vadd.f32 %v848, %v671
          %v850 = vadd.f32 %v849, %v675
          %v851 = vadd.f32 %v850, %v679
          %v852 = vadd.f32 %v851, %v683
          %v853 = vadd.f32 %v852, %v687
          %v854 = vadd.f32 %v853, %v691
          %v855 = vadd.f32 %v854, %v695
          %v856 = vadd.f32 %v855, %v699
          %v857 = vadd.f32 %v856, %v703
          %v858 = vrot.slane %v857, 4
          %v859 = vadd.f32 %v857, %v858
          %v860 = vrot.slane %v859, 2
          %v861 = vadd.f32 %v859, %v860
          %v862 = vrot.slane %v861, 1
          %v863 = vadd.f32 %v861, %v862
          %v864 = vadd.f32 %v516, %v520
          %v865 = vadd.f32 %v864, %v524
          %v866 = vadd.f32 %v865, %v528
          %v867 = vadd.f32 %v866, %v532
          %v868 = vadd.f32 %v867, %v536
          %v869 = vadd.f32 %v868, %v540
          %v870 = vadd.f32 %v869, %v544
          %v871 = vadd.f32 %v870, %v548
          %v872 = vadd.f32 %v871, %v552
          %v873 = vadd.f32 %v872, %v556
          %v874 = vadd.f32 %v873, %v560
          %v875 = vadd.f32 %v874, %v564
          %v876 = vadd.f32 %v875, %v568
          %v877 = vadd.f32 %v876, %v572
          %v878 = vadd.f32 %v877, %v576
          %v879 = vadd.f32 %v878, %v580
          %v880 = vadd.f32 %v879, %v584
          %v881 = vadd.f32 %v880, %v588
          %v882 = vadd.f32 %v881, %v592
          %v883 = vadd.f32 %v882, %v596
          %v884 = vadd.f32 %v883, %v600
          %v885 = vadd.f32 %v884, %v604
          %v886 = vadd.f32 %v885, %v608
          %v887 = vadd.f32 %v886, %v612
          %v888 = vadd.f32 %v887, %v616
          %v889 = vadd.f32 %v888, %v620
          %v890 = vadd.f32 %v889, %v624
          %v891 = vadd.f32 %v890, %v628
          %v892 = vadd.f32 %v891, %v632
          %v893 = vadd.f32 %v892, %v636
          %v894 = vadd.f32 %v893, %v640
          %v895 = vadd.f32 %v894, %v644
          %v896 = vadd.f32 %v895, %v648
          %v897 = vadd.f32 %v896, %v652
          %v898 = vadd.f32 %v897, %v656
          %v899 = vadd.f32 %v898, %v660
          %v900 = vadd.f32 %v899, %v664
          %v901 = vadd.f32 %v900, %v668
          %v902 = vadd.f32 %v901, %v672
          %v903 = vadd.f32 %v902, %v676
          %v904 = vadd.f32 %v903, %v680
          %v905 = vadd.f32 %v904, %v684
          %v906 = vadd.f32 %v905, %v688
          %v907 = vadd.f32 %v906, %v692
          %v908 = vadd.f32 %v907, %v696
          %v909 = vadd.f32 %v908, %v700
          %v910 = vadd.f32 %v909, %v704
          %v911 = vrot.slane %v910, 4
          %v912 = vadd.f32 %v910, %v911
          %v913 = vrot.slane %v912, 2
          %v914 = vadd.f32 %v912, %v913
          %v915 = vrot.slane %v914, 1
          %v916 = vadd.f32 %v914, %v915
          %v917 = vstv %s415
          %v918 = vmul.f32 %v757, %v917
          %v919 = vmul.f32 %v810, %v917
          %v920 = vmul.f32 %v863, %v917
          %v921 = vmul.f32 %v916, %v917
          %v922 = vsub.f32 %v513, %v918
          %v923 = vsub.f32 %v514, %v919
          %v924 = vsub.f32 %v515, %v920
          %v925 = vsub.f32 %v516, %v921
          %v926 = vsub.f32 %v517, %v918
          %v927 = vsub.f32 %v518, %v919
          %v928 = vsub.f32 %v519, %v920
          %v929 = vsub.f32 %v520, %v921
          %v930 = vsub.f32 %v521, %v918
          %v931 = vsub.f32 %v522, %v919
          %v932 = vsub.f32 %v523, %v920
          %v933 = vsub.f32 %v524, %v921
          %v934 = vsub.f32 %v525, %v918
          %v935 = vsub.f32 %v526, %v919
          %v936 = vsub.f32 %v527, %v920
          %v937 = vsub.f32 %v528, %v921
          %v938 = vsub.f32 %v529, %v918
          %v939 = vsub.f32 %v530, %v919
          %v940 = vsub.f32 %v531, %v920
          %v941 = vsub.f32 %v532, %v921
          %v942 = vsub.f32 %v533, %v918
          %v943 = vsub.f32 %v534, %v919
          %v944 = vsub.f32 %v535, %v920
          %v945 = vsub.f32 %v536, %v921
          %v946 = vsub.f32 %v537, %v918
          %v947 = vsub.f32 %v538, %v919
          %v948 = vsub.f32 %v539, %v920
          %v949 = vsub.f32 %v540, %v921
          %v950 = vsub.f32 %v541, %v918
          %v951 = vsub.f32 %v542, %v919
          %v952 = vsub.f32 %v543, %v920
          %v953 = vsub.f32 %v544, %v921
          %v954 = vsub.f32 %v545, %v918
          %v955 = vsub.f32 %v546, %v919
          %v956 = vsub.f32 %v547, %v920
          %v957 = vsub.f32 %v548, %v921
          %v958 = vsub.f32 %v549, %v918
          %v959 = vsub.f32 %v550, %v919
          %v960 = vsub.f32 %v551, %v920
          %v961 = vsub.f32 %v552, %v921
          %v962 = vsub.f32 %v553, %v918
          %v963 = vsub.f32 %v554, %v919
          %v964 = vsub.f32 %v555, %v920
          %v965 = vsub.f32 %v556, %v921
          %v966 = vsub.f32 %v557, %v918
          %v967 = vsub.f32 %v558, %v919
          %v968 = vsub.f32 %v559, %v920
          %v969 = vsub.f32 %v560, %v921
          %v970 = vsub.f32 %v561, %v918
          %v971 = vsub.f32 %v562, %v919
          %v972 = vsub.f32 %v563, %v920
          %v973 = vsub.f32 %v564, %v921
          %v974 = vsub.f32 %v565, %v918
          %v975 = vsub.f32 %v566, %v919
          %v976 = vsub.f32 %v567, %v920
          %v977 = vsub.f32 %v568, %v921
          %v978 = vsub.f32 %v569, %v918
          %v979 = vsub.f32 %v570, %v919
          %v980 = vsub.f32 %v571, %v920
          %v981 = vsub.f32 %v572, %v921
          %v982 = vsub.f32 %v573, %v918
          %v983 = vsub.f32 %v574, %v919
          %v984 = vsub.f32 %v575, %v920
          %v985 = vsub.f32 %v576, %v921
          %v986 = vsub.f32 %v577, %v918
          %v987 = vsub.f32 %v578, %v919
          %v988 = vsub.f32 %v579, %v920
          %v989 = vsub.f32 %v580, %v921
          %v990 = vsub.f32 %v581, %v918
          %v991 = vsub.f32 %v582, %v919
          %v992 = vsub.f32 %v583, %v920
          %v993 = vsub.f32 %v584, %v921
          %v994 = vsub.f32 %v585, %v918
          %v995 = vsub.f32 %v586, %v919
          %v996 = vsub.f32 %v587, %v920
          %v997 = vsub.f32 %v588, %v921
          %v998 = vsub.f32 %v589, %v918
          %v999 = vsub.f32 %v590, %v919
          %v1000 = vsub.f32 %v591, %v920
          %v1001 = vsub.f32 %v592, %v921
          %v1002 = vsub.f32 %v593, %v918
          %v1003 = vsub.f32 %v594, %v919
          %v1004 = vsub.f32 %v595, %v920
          %v1005 = vsub.f32 %v596, %v921
          %v1006 = vsub.f32 %v597, %v918
          %v1007 = vsub.f32 %v598, %v919
          %v1008 = vsub.f32 %v599, %v920
          %v1009 = vsub.f32 %v600, %v921
          %v1010 = vsub.f32 %v601, %v918
          %v1011 = vsub.f32 %v602, %v919
          %v1012 = vsub.f32 %v603, %v920
          %v1013 = vsub.f32 %v604, %v921
          %v1014 = vsub.f32 %v605, %v918
          %v1015 = vsub.f32 %v606, %v919
          %v1016 = vsub.f32 %v607, %v920
          %v1017 = vsub.f32 %v608, %v921
          %v1018 = vsub.f32 %v609, %v918
          %v1019 = vsub.f32 %v610, %v919
          %v1020 = vsub.f32 %v611, %v920
          %v1021 = vsub.f32 %v612, %v921
          %v1022 = vsub.f32 %v613, %v918
          %v1023 = vsub.f32 %v614, %v919
          %v1024 = vsub.f32 %v615, %v920
          %v1025 = vsub.f32 %v616, %v921
          %v1026 = vsub.f32 %v617, %v918
          %v1027 = vsub.f32 %v618, %v919
          %v1028 = vsub.f32 %v619, %v920
          %v1029 = vsub.f32 %v620, %v921
          %v1030 = vsub.f32 %v621, %v918
          %v1031 = vsub.f32 %v622, %v919
          %v1032 = vsub.f32 %v623, %v920
          %v1033 = vsub.f32 %v624, %v921
          %v1034 = vsub.f32 %v625, %v918
          %v1035 = vsub.f32 %v626, %v919
          %v1036 = vsub.f32 %v627, %v920
          %v1037 = vsub.f32 %v628, %v921
          %v1038 = vsub.f32 %v629, %v918
          %v1039 = vsub.f32 %v630, %v919
          %v1040 = vsub.f32 %v631, %v920
          %v1041 = vsub.f32 %v632, %v921
          %v1042 = vsub.f32 %v633, %v918
          %v1043 = vsub.f32 %v634, %v919
          %v1044 = vsub.f32 %v635, %v920
          %v1045 = vsub.f32 %v636, %v921
          %v1046 = vsub.f32 %v637, %v918
          %v1047 = vsub.f32 %v638, %v919
          %v1048 = vsub.f32 %v639, %v920
          %v1049 = vsub.f32 %v640, %v921
          %v1050 = vsub.f32 %v641, %v918
          %v1051 = vsub.f32 %v642, %v919
          %v1052 = vsub.f32 %v643, %v920
          %v1053 = vsub.f32 %v644, %v921
          %v1054 = vsub.f32 %v645, %v918
          %v1055 = vsub.f32 %v646, %v919
          %v1056 = vsub.f32 %v647, %v920
          %v1057 = vsub.f32 %v648, %v921
          %v1058 = vsub.f32 %v649, %v918
          %v1059 = vsub.f32 %v650, %v919
          %v1060 = vsub.f32 %v651, %v920
          %v1061 = vsub.f32 %v652, %v921
          %v1062 = vsub.f32 %v653, %v918
          %v1063 = vsub.f32 %v654, %v919
          %v1064 = vsub.f32 %v655, %v920
          %v1065 = vsub.f32 %v656, %v921
          %v1066 = vsub.f32 %v657, %v918
          %v1067 = vsub.f32 %v658, %v919
          %v1068 = vsub.f32 %v659, %v920
          %v1069 = vsub.f32 %v660, %v921
          %v1070 = vsub.f32 %v661, %v918
          %v1071 = vsub.f32 %v662, %v919
          %v1072 = vsub.f32 %v663, %v920
          %v1073 = vsub.f32 %v664, %v921
          %v1074 = vsub.f32 %v665, %v918
          %v1075 = vsub.f32 %v666, %v919
          %v1076 = vsub.f32 %v667, %v920
          %v1077 = vsub.f32 %v668, %v921
          %v1078 = vsub.f32 %v669, %v918
          %v1079 = vsub.f32 %v670, %v919
          %v1080 = vsub.f32 %v671, %v920
          %v1081 = vsub.f32 %v672, %v921
          %v1082 = vsub.f32 %v673, %v918
          %v1083 = vsub.f32 %v674, %v919
          %v1084 = vsub.f32 %v675, %v920
          %v1085 = vsub.f32 %v676, %v921
          %v1086 = vsub.f32 %v677, %v918
          %v1087 = vsub.f32 %v678, %v919
          %v1088 = vsub.f32 %v679, %v920
          %v1089 = vsub.f32 %v680, %v921
          %v1090 = vsub.f32 %v681, %v918
          %v1091 = vsub.f32 %v682, %v919
          %v1092 = vsub.f32 %v683, %v920
          %v1093 = vsub.f32 %v684, %v921
          %v1094 = vsub.f32 %v685, %v918
          %v1095 = vsub.f32 %v686, %v919
          %v1096 = vsub.f32 %v687, %v920
          %v1097 = vsub.f32 %v688, %v921
          %v1098 = vsub.f32 %v689, %v918
          %v1099 = vsub.f32 %v690, %v919
          %v1100 = vsub.f32 %v691, %v920
          %v1101 = vsub.f32 %v692, %v921
          %v1102 = vsub.f32 %v693, %v918
          %v1103 = vsub.f32 %v694, %v919
          %v1104 = vsub.f32 %v695, %v920
          %v1105 = vsub.f32 %v696, %v921
          %v1106 = vsub.f32 %v697, %v918
          %v1107 = vsub.f32 %v698, %v919
          %v1108 = vsub.f32 %v699, %v920
          %v1109 = vsub.f32 %v700, %v921
          %v1110 = vsub.f32 %v701, %v918
          %v1111 = vsub.f32 %v702, %v919
          %v1112 = vsub.f32 %v703, %v920
          %v1113 = vsub.f32 %v704, %v921
          %v1114 = vmul.f32 %v922, %v922
          %v1115 = vmul.f32 %v923, %v923
          %v1116 = vmul.f32 %v924, %v924
          %v1117 = vmul.f32 %v925, %v925
          %v1118 = vmul.f32 %v926, %v926
          %v1119 = vmul.f32 %v927, %v927
          %v1120 = vmul.f32 %v928, %v928
          %v1121 = vmul.f32 %v929, %v929
          %v1122 = vmul.f32 %v930, %v930
          %v1123 = vmul.f32 %v931, %v931
          %v1124 = vmul.f32 %v932, %v932
          %v1125 = vmul.f32 %v933, %v933
          %v1126 = vmul.f32 %v934, %v934
          %v1127 = vmul.f32 %v935, %v935
          %v1128 = vmul.f32 %v936, %v936
          %v1129 = vmul.f32 %v937, %v937
          %v1130 = vmul.f32 %v938, %v938
          %v1131 = vmul.f32 %v939, %v939
          %v1132 = vmul.f32 %v940, %v940
          %v1133 = vmul.f32 %v941, %v941
          %v1134 = vmul.f32 %v942, %v942
          %v1135 = vmul.f32 %v943, %v943
          %v1136 = vmul.f32 %v944, %v944
          %v1137 = vmul.f32 %v945, %v945
          %v1138 = vmul.f32 %v946, %v946
          %v1139 = vmul.f32 %v947, %v947
          %v1140 = vmul.f32 %v948, %v948
          %v1141 = vmul.f32 %v949, %v949
          %v1142 = vmul.f32 %v950, %v950
          %v1143 = vmul.f32 %v951, %v951
          %v1144 = vmul.f32 %v952, %v952
          %v1145 = vmul.f32 %v953, %v953
          %v1146 = vmul.f32 %v954, %v954
          %v1147 = vmul.f32 %v955, %v955
          %v1148 = vmul.f32 %v956, %v956
          %v1149 = vmul.f32 %v957, %v957
          %v1150 = vmul.f32 %v958, %v958
          %v1151 = vmul.f32 %v959, %v959
          %v1152 = vmul.f32 %v960, %v960
          %v1153 = vmul.f32 %v961, %v961
          %v1154 = vmul.f32 %v962, %v962
          %v1155 = vmul.f32 %v963, %v963
          %v1156 = vmul.f32 %v964, %v964
          %v1157 = vmul.f32 %v965, %v965
          %v1158 = vmul.f32 %v966, %v966
          %v1159 = vmul.f32 %v967, %v967
          %v1160 = vmul.f32 %v968, %v968
          %v1161 = vmul.f32 %v969, %v969
          %v1162 = vmul.f32 %v970, %v970
          %v1163 = vmul.f32 %v971, %v971
          %v1164 = vmul.f32 %v972, %v972
          %v1165 = vmul.f32 %v973, %v973
          %v1166 = vmul.f32 %v974, %v974
          %v1167 = vmul.f32 %v975, %v975
          %v1168 = vmul.f32 %v976, %v976
          %v1169 = vmul.f32 %v977, %v977
          %v1170 = vmul.f32 %v978, %v978
          %v1171 = vmul.f32 %v979, %v979
          %v1172 = vmul.f32 %v980, %v980
          %v1173 = vmul.f32 %v981, %v981
          %v1174 = vmul.f32 %v982, %v982
          %v1175 = vmul.f32 %v983, %v983
          %v1176 = vmul.f32 %v984, %v984
          %v1177 = vmul.f32 %v985, %v985
          %v1178 = vmul.f32 %v986, %v986
          %v1179 = vmul.f32 %v987, %v987
          %v1180 = vmul.f32 %v988, %v988
          %v1181 = vmul.f32 %v989, %v989
          %v1182 = vmul.f32 %v990, %v990
          %v1183 = vmul.f32 %v991, %v991
          %v1184 = vmul.f32 %v992, %v992
          %v1185 = vmul.f32 %v993, %v993
          %v1186 = vmul.f32 %v994, %v994
          %v1187 = vmul.f32 %v995, %v995
          %v1188 = vmul.f32 %v996, %v996
          %v1189 = vmul.f32 %v997, %v997
          %v1190 = vmul.f32 %v998, %v998
          %v1191 = vmul.f32 %v999, %v999
          %v1192 = vmul.f32 %v1000, %v1000
          %v1193 = vmul.f32 %v1001, %v1001
          %v1194 = vmul.f32 %v1002, %v1002
          %v1195 = vmul.f32 %v1003, %v1003
          %v1196 = vmul.f32 %v1004, %v1004
          %v1197 = vmul.f32 %v1005, %v1005
          %v1198 = vmul.f32 %v1006, %v1006
          %v1199 = vmul.f32 %v1007, %v1007
          %v1200 = vmul.f32 %v1008, %v1008
          %v1201 = vmul.f32 %v1009, %v1009
          %v1202 = vmul.f32 %v1010, %v1010
          %v1203 = vmul.f32 %v1011, %v1011
          %v1204 = vmul.f32 %v1012, %v1012
          %v1205 = vmul.f32 %v1013, %v1013
          %v1206 = vmul.f32 %v1014, %v1014
          %v1207 = vmul.f32 %v1015, %v1015
          %v1208 = vmul.f32 %v1016, %v1016
          %v1209 = vmul.f32 %v1017, %v1017
          %v1210 = vmul.f32 %v1018, %v1018
          %v1211 = vmul.f32 %v1019, %v1019
          %v1212 = vmul.f32 %v1020, %v1020
          %v1213 = vmul.f32 %v1021, %v1021
          %v1214 = vmul.f32 %v1022, %v1022
          %v1215 = vmul.f32 %v1023, %v1023
          %v1216 = vmul.f32 %v1024, %v1024
          %v1217 = vmul.f32 %v1025, %v1025
          %v1218 = vmul.f32 %v1026, %v1026
          %v1219 = vmul.f32 %v1027, %v1027
          %v1220 = vmul.f32 %v1028, %v1028
          %v1221 = vmul.f32 %v1029, %v1029
          %v1222 = vmul.f32 %v1030, %v1030
          %v1223 = vmul.f32 %v1031, %v1031
          %v1224 = vmul.f32 %v1032, %v1032
          %v1225 = vmul.f32 %v1033, %v1033
          %v1226 = vmul.f32 %v1034, %v1034
          %v1227 = vmul.f32 %v1035, %v1035
          %v1228 = vmul.f32 %v1036, %v1036
          %v1229 = vmul.f32 %v1037, %v1037
          %v1230 = vmul.f32 %v1038, %v1038
          %v1231 = vmul.f32 %v1039, %v1039
          %v1232 = vmul.f32 %v1040, %v1040
          %v1233 = vmul.f32 %v1041, %v1041
          %v1234 = vmul.f32 %v1042, %v1042
          %v1235 = vmul.f32 %v1043, %v1043
          %v1236 = vmul.f32 %v1044, %v1044
          %v1237 = vmul.f32 %v1045, %v1045
          %v1238 = vmul.f32 %v1046, %v1046
          %v1239 = vmul.f32 %v1047, %v1047
          %v1240 = vmul.f32 %v1048, %v1048
          %v1241 = vmul.f32 %v1049, %v1049
          %v1242 = vmul.f32 %v1050, %v1050
          %v1243 = vmul.f32 %v1051, %v1051
          %v1244 = vmul.f32 %v1052, %v1052
          %v1245 = vmul.f32 %v1053, %v1053
          %v1246 = vmul.f32 %v1054, %v1054
          %v1247 = vmul.f32 %v1055, %v1055
          %v1248 = vmul.f32 %v1056, %v1056
          %v1249 = vmul.f32 %v1057, %v1057
          %v1250 = vmul.f32 %v1058, %v1058
          %v1251 = vmul.f32 %v1059, %v1059
          %v1252 = vmul.f32 %v1060, %v1060
          %v1253 = vmul.f32 %v1061, %v1061
          %v1254 = vmul.f32 %v1062, %v1062
          %v1255 = vmul.f32 %v1063, %v1063
          %v1256 = vmul.f32 %v1064, %v1064
          %v1257 = vmul.f32 %v1065, %v1065
          %v1258 = vmul.f32 %v1066, %v1066
          %v1259 = vmul.f32 %v1067, %v1067
          %v1260 = vmul.f32 %v1068, %v1068
          %v1261 = vmul.f32 %v1069, %v1069
          %v1262 = vmul.f32 %v1070, %v1070
          %v1263 = vmul.f32 %v1071, %v1071
          %v1264 = vmul.f32 %v1072, %v1072
          %v1265 = vmul.f32 %v1073, %v1073
          %v1266 = vmul.f32 %v1074, %v1074
          %v1267 = vmul.f32 %v1075, %v1075
          %v1268 = vmul.f32 %v1076, %v1076
          %v1269 = vmul.f32 %v1077, %v1077
          %v1270 = vmul.f32 %v1078, %v1078
          %v1271 = vmul.f32 %v1079, %v1079
          %v1272 = vmul.f32 %v1080, %v1080
          %v1273 = vmul.f32 %v1081, %v1081
          %v1274 = vmul.f32 %v1082, %v1082
          %v1275 = vmul.f32 %v1083, %v1083
          %v1276 = vmul.f32 %v1084, %v1084
          %v1277 = vmul.f32 %v1085, %v1085
          %v1278 = vmul.f32 %v1086, %v1086
          %v1279 = vmul.f32 %v1087, %v1087
          %v1280 = vmul.f32 %v1088, %v1088
          %v1281 = vmul.f32 %v1089, %v1089
          %v1282 = vmul.f32 %v1090, %v1090
          %v1283 = vmul.f32 %v1091, %v1091
          %v1284 = vmul.f32 %v1092, %v1092
          %v1285 = vmul.f32 %v1093, %v1093
          %v1286 = vmul.f32 %v1094, %v1094
          %v1287 = vmul.f32 %v1095, %v1095
          %v1288 = vmul.f32 %v1096, %v1096
          %v1289 = vmul.f32 %v1097, %v1097
          %v1290 = vmul.f32 %v1098, %v1098
          %v1291 = vmul.f32 %v1099, %v1099
          %v1292 = vmul.f32 %v1100, %v1100
          %v1293 = vmul.f32 %v1101, %v1101
          %v1294 = vmul.f32 %v1102, %v1102
          %v1295 = vmul.f32 %v1103, %v1103
          %v1296 = vmul.f32 %v1104, %v1104
          %v1297 = vmul.f32 %v1105, %v1105
          %v1298 = vmul.f32 %v1106, %v1106
          %v1299 = vmul.f32 %v1107, %v1107
          %v1300 = vmul.f32 %v1108, %v1108
          %v1301 = vmul.f32 %v1109, %v1109
          %v1302 = vmul.f32 %v1110, %v1110
          %v1303 = vmul.f32 %v1111, %v1111
          %v1304 = vmul.f32 %v1112, %v1112
          %v1305 = vmul.f32 %v1113, %v1113
          %v1306 = vadd.f32 %v1114, %v1118
          %v1307 = vadd.f32 %v1306, %v1122
          %v1308 = vadd.f32 %v1307, %v1126
          %v1309 = vadd.f32 %v1308, %v1130
          %v1310 = vadd.f32 %v1309, %v1134
          %v1311 = vadd.f32 %v1310, %v1138
          %v1312 = vadd.f32 %v1311, %v1142
          %v1313 = vadd.f32 %v1312, %v1146
          %v1314 = vadd.f32 %v1313, %v1150
          %v1315 = vadd.f32 %v1314, %v1154
          %v1316 = vadd.f32 %v1315, %v1158
          %v1317 = vadd.f32 %v1316, %v1162
          %v1318 = vadd.f32 %v1317, %v1166
          %v1319 = vadd.f32 %v1318, %v1170
          %v1320 = vadd.f32 %v1319, %v1174
          %v1321 = vadd.f32 %v1320, %v1178
          %v1322 = vadd.f32 %v1321, %v1182
          %v1323 = vadd.f32 %v1322, %v1186
          %v1324 = vadd.f32 %v1323, %v1190
          %v1325 = vadd.f32 %v1324, %v1194
          %v1326 = vadd.f32 %v1325, %v1198
          %v1327 = vadd.f32 %v1326, %v1202
          %v1328 = vadd.f32 %v1327, %v1206
          %v1329 = vadd.f32 %v1328, %v1210
          %v1330 = vadd.f32 %v1329, %v1214
          %v1331 = vadd.f32 %v1330, %v1218
          %v1332 = vadd.f32 %v1331, %v1222
          %v1333 = vadd.f32 %v1332, %v1226
          %v1334 = vadd.f32 %v1333, %v1230
          %v1335 = vadd.f32 %v1334, %v1234
          %v1336 = vadd.f32 %v1335, %v1238
          %v1337 = vadd.f32 %v1336, %v1242
          %v1338 = vadd.f32 %v1337, %v1246
          %v1339 = vadd.f32 %v1338, %v1250
          %v1340 = vadd.f32 %v1339, %v1254
          %v1341 = vadd.f32 %v1340, %v1258
          %v1342 = vadd.f32 %v1341, %v1262
          %v1343 = vadd.f32 %v1342, %v1266
          %v1344 = vadd.f32 %v1343, %v1270
          %v1345 = vadd.f32 %v1344, %v1274
          %v1346 = vadd.f32 %v1345, %v1278
          %v1347 = vadd.f32 %v1346, %v1282
          %v1348 = vadd.f32 %v1347, %v1286
          %v1349 = vadd.f32 %v1348, %v1290
          %v1350 = vadd.f32 %v1349, %v1294
          %v1351 = vadd.f32 %v1350, %v1298
          %v1352 = vadd.f32 %v1351, %v1302
          %v1353 = vrot.slane %v1352, 4
          %v1354 = vadd.f32 %v1352, %v1353
          %v1355 = vrot.slane %v1354, 2
          %v1356 = vadd.f32 %v1354, %v1355
          %v1357 = vrot.slane %v1356, 1
          %v1358 = vadd.f32 %v1356, %v1357
          %v1359 = vadd.f32 %v1115, %v1119
          %v1360 = vadd.f32 %v1359, %v1123
          %v1361 = vadd.f32 %v1360, %v1127
          %v1362 = vadd.f32 %v1361, %v1131
          %v1363 = vadd.f32 %v1362, %v1135
          %v1364 = vadd.f32 %v1363, %v1139
          %v1365 = vadd.f32 %v1364, %v1143
          %v1366 = vadd.f32 %v1365, %v1147
          %v1367 = vadd.f32 %v1366, %v1151
          %v1368 = vadd.f32 %v1367, %v1155
          %v1369 = vadd.f32 %v1368, %v1159
          %v1370 = vadd.f32 %v1369, %v1163
          %v1371 = vadd.f32 %v1370, %v1167
          %v1372 = vadd.f32 %v1371, %v1171
          %v1373 = vadd.f32 %v1372, %v1175
          %v1374 = vadd.f32 %v1373, %v1179
          %v1375 = vadd.f32 %v1374, %v1183
          %v1376 = vadd.f32 %v1375, %v1187
          %v1377 = vadd.f32 %v1376, %v1191
          %v1378 = vadd.f32 %v1377, %v1195
          %v1379 = vadd.f32 %v1378, %v1199
          %v1380 = vadd.f32 %v1379, %v1203
          %v1381 = vadd.f32 %v1380, %v1207
          %v1382 = vadd.f32 %v1381, %v1211
          %v1383 = vadd.f32 %v1382, %v1215
          %v1384 = vadd.f32 %v1383, %v1219
          %v1385 = vadd.f32 %v1384, %v1223
          %v1386 = vadd.f32 %v1385, %v1227
          %v1387 = vadd.f32 %v1386, %v1231
          %v1388 = vadd.f32 %v1387, %v1235
          %v1389 = vadd.f32 %v1388, %v1239
          %v1390 = vadd.f32 %v1389, %v1243
          %v1391 = vadd.f32 %v1390, %v1247
          %v1392 = vadd.f32 %v1391, %v1251
          %v1393 = vadd.f32 %v1392, %v1255
          %v1394 = vadd.f32 %v1393, %v1259
          %v1395 = vadd.f32 %v1394, %v1263
          %v1396 = vadd.f32 %v1395, %v1267
          %v1397 = vadd.f32 %v1396, %v1271
          %v1398 = vadd.f32 %v1397, %v1275
          %v1399 = vadd.f32 %v1398, %v1279
          %v1400 = vadd.f32 %v1399, %v1283
          %v1401 = vadd.f32 %v1400, %v1287
          %v1402 = vadd.f32 %v1401, %v1291
          %v1403 = vadd.f32 %v1402, %v1295
          %v1404 = vadd.f32 %v1403, %v1299
          %v1405 = vadd.f32 %v1404, %v1303
          %v1406 = vrot.slane %v1405, 4
          %v1407 = vadd.f32 %v1405, %v1406
          %v1408 = vrot.slane %v1407, 2
          %v1409 = vadd.f32 %v1407, %v1408
          %v1410 = vrot.slane %v1409, 1
          %v1411 = vadd.f32 %v1409, %v1410
          %v1412 = vadd.f32 %v1116, %v1120
          %v1413 = vadd.f32 %v1412, %v1124
          %v1414 = vadd.f32 %v1413, %v1128
          %v1415 = vadd.f32 %v1414, %v1132
          %v1416 = vadd.f32 %v1415, %v1136
          %v1417 = vadd.f32 %v1416, %v1140
          %v1418 = vadd.f32 %v1417, %v1144
          %v1419 = vadd.f32 %v1418, %v1148
          %v1420 = vadd.f32 %v1419, %v1152
          %v1421 = vadd.f32 %v1420, %v1156
          %v1422 = vadd.f32 %v1421, %v1160
          %v1423 = vadd.f32 %v1422, %v1164
          %v1424 = vadd.f32 %v1423, %v1168
          %v1425 = vadd.f32 %v1424, %v1172
          %v1426 = vadd.f32 %v1425, %v1176
          %v1427 = vadd.f32 %v1426, %v1180
          %v1428 = vadd.f32 %v1427, %v1184
          %v1429 = vadd.f32 %v1428, %v1188
          %v1430 = vadd.f32 %v1429, %v1192
          %v1431 = vadd.f32 %v1430, %v1196
          %v1432 = vadd.f32 %v1431, %v1200
          %v1433 = vadd.f32 %v1432, %v1204
          %v1434 = vadd.f32 %v1433, %v1208
          %v1435 = vadd.f32 %v1434, %v1212
          %v1436 = vadd.f32 %v1435, %v1216
          %v1437 = vadd.f32 %v1436, %v1220
          %v1438 = vadd.f32 %v1437, %v1224
          %v1439 = vadd.f32 %v1438, %v1228
          %v1440 = vadd.f32 %v1439, %v1232
          %v1441 = vadd.f32 %v1440, %v1236
          %v1442 = vadd.f32 %v1441, %v1240
          %v1443 = vadd.f32 %v1442, %v1244
          %v1444 = vadd.f32 %v1443, %v1248
          %v1445 = vadd.f32 %v1444, %v1252
          %v1446 = vadd.f32 %v1445, %v1256
          %v1447 = vadd.f32 %v1446, %v1260
          %v1448 = vadd.f32 %v1447, %v1264
          %v1449 = vadd.f32 %v1448, %v1268
          %v1450 = vadd.f32 %v1449, %v1272
          %v1451 = vadd.f32 %v1450, %v1276
          %v1452 = vadd.f32 %v1451, %v1280
          %v1453 = vadd.f32 %v1452, %v1284
          %v1454 = vadd.f32 %v1453, %v1288
          %v1455 = vadd.f32 %v1454, %v1292
          %v1456 = vadd.f32 %v1455, %v1296
          %v1457 = vadd.f32 %v1456, %v1300
          %v1458 = vadd.f32 %v1457, %v1304
          %v1459 = vrot.slane %v1458, 4
          %v1460 = vadd.f32 %v1458, %v1459
          %v1461 = vrot.slane %v1460, 2
          %v1462 = vadd.f32 %v1460, %v1461
          %v1463 = vrot.slane %v1462, 1
          %v1464 = vadd.f32 %v1462, %v1463
          %v1465 = vadd.f32 %v1117, %v1121
          %v1466 = vadd.f32 %v1465, %v1125
          %v1467 = vadd.f32 %v1466, %v1129
          %v1468 = vadd.f32 %v1467, %v1133
          %v1469 = vadd.f32 %v1468, %v1137
          %v1470 = vadd.f32 %v1469, %v1141
          %v1471 = vadd.f32 %v1470, %v1145
          %v1472 = vadd.f32 %v1471, %v1149
          %v1473 = vadd.f32 %v1472, %v1153
          %v1474 = vadd.f32 %v1473, %v1157
          %v1475 = vadd.f32 %v1474, %v1161
          %v1476 = vadd.f32 %v1475, %v1165
          %v1477 = vadd.f32 %v1476, %v1169
          %v1478 = vadd.f32 %v1477, %v1173
          %v1479 = vadd.f32 %v1478, %v1177
          %v1480 = vadd.f32 %v1479, %v1181
          %v1481 = vadd.f32 %v1480, %v1185
          %v1482 = vadd.f32 %v1481, %v1189
          %v1483 = vadd.f32 %v1482, %v1193
          %v1484 = vadd.f32 %v1483, %v1197
          %v1485 = vadd.f32 %v1484, %v1201
          %v1486 = vadd.f32 %v1485, %v1205
          %v1487 = vadd.f32 %v1486, %v1209
          %v1488 = vadd.f32 %v1487, %v1213
          %v1489 = vadd.f32 %v1488, %v1217
          %v1490 = vadd.f32 %v1489, %v1221
          %v1491 = vadd.f32 %v1490, %v1225
          %v1492 = vadd.f32 %v1491, %v1229
          %v1493 = vadd.f32 %v1492, %v1233
          %v1494 = vadd.f32 %v1493, %v1237
          %v1495 = vadd.f32 %v1494, %v1241
          %v1496 = vadd.f32 %v1495, %v1245
          %v1497 = vadd.f32 %v1496, %v1249
          %v1498 = vadd.f32 %v1497, %v1253
          %v1499 = vadd.f32 %v1498, %v1257
          %v1500 = vadd.f32 %v1499, %v1261
          %v1501 = vadd.f32 %v1500, %v1265
          %v1502 = vadd.f32 %v1501, %v1269
          %v1503 = vadd.f32 %v1502, %v1273
          %v1504 = vadd.f32 %v1503, %v1277
          %v1505 = vadd.f32 %v1504, %v1281
          %v1506 = vadd.f32 %v1505, %v1285
          %v1507 = vadd.f32 %v1506, %v1289
          %v1508 = vadd.f32 %v1507, %v1293
          %v1509 = vadd.f32 %v1508, %v1297
          %v1510 = vadd.f32 %v1509, %v1301
          %v1511 = vadd.f32 %v1510, %v1305
          %v1512 = vrot.slane %v1511, 4
          %v1513 = vadd.f32 %v1511, %v1512
          %v1514 = vrot.slane %v1513, 2
          %v1515 = vadd.f32 %v1513, %v1514
          %v1516 = vrot.slane %v1515, 1
          %v1517 = vadd.f32 %v1515, %v1516
          %v1518 = vstv %s416
          %v1519 = vmul.f32 %v1518, %v918
          %v1520 = vmul.f32 %v1518, %v919
          %v1521 = vmul.f32 %v1518, %v920
          %v1522 = vmul.f32 %v1518, %v921
          %v1523 = vmul.f32 %v1519, %v918
          %v1524 = vmul.f32 %v1520, %v919
          %v1525 = vmul.f32 %v1521, %v920
          %v1526 = vmul.f32 %v1522, %v921
          %v1527 = vsub.f32 %v1358, %v1523
          %v1528 = vsub.f32 %v1411, %v1524
          %v1529 = vsub.f32 %v1464, %v1525
          %v1530 = vsub.f32 %v1517, %v1526
          %v1531 = vmul.f32 %v1527, %v917
          %v1532 = vmul.f32 %v1528, %v917
          %v1533 = vmul.f32 %v1529, %v917
          %v1534 = vmul.f32 %v1530, %v917
          %v1535 = vld [vmem:[%s2] sm:$0xf]
          %v1536 = vadd.f32 %v1531, 1e-05
          %v1537 = vadd.f32 %v1532, 1e-05
          %v1538 = vadd.f32 %v1533, 1e-05
          %v1539 = vadd.f32 %v1534, 1e-05
          %v1540 = vrsqrt.pop %v1536
          %v1541 = vrsqrt.pop %v1537
          %v1542 = vrsqrt.pop %v1538
          %v1543 = vrsqrt.pop %v1539
          %v1548 = vcombine.low %v1540, %v1541
          %v1549 = vcombine.low %v1542, %v1543
          %v1551 = vunpack.c.l.s4 1966171168
          %v1552 = vunpack.c.0.s8 %v1551
          %v1553 = vlaneseq
          %v1554 = vshrl.u32 %v1553, 7
          %v1555 = vsub.s32 %v1552, %v1554
          %v1556 = vrot.slane %v1548, %v1555
          %v1558 = vunpack.c.l.s4 1966171168
          %v1559 = vunpack.c.0.s8 %v1558
          %v1560 = vlaneseq
          %v1561 = vshrl.u32 %v1560, 7
          %v1562 = vsub.s32 %v1559, %v1561
          %v1563 = vrot.slane %v1549, %v1562
          %v1564 = vcombine.low %v1556, %v1563
          %v1566 = vunpack.c.l.s4 1966171168
          %v1567 = vunpack.c.0.s8 %v1566
          %v1568 = vlaneseq
          %v1569 = vshrl.u32 %v1568, 7
          %v1570 = vsub.s32 %v1567, %v1569
          %v1571 = vrot.slane %v1564, %v1570
          %v1573 = vmul.f32 %v1535, %v1571
          %v1574 = vlaneseq
          %vm1575 = vcmp.ge.s32.totalorder %v1574, 0
          %vm1576 = vcmp.lt.s32.totalorder %v1574, 512
          %vm1577 = vmand %vm1575, %vm1576
          %1578 = vst.msk [vmem:[#allocation2] sm:$0xf] %vm1577, %v1573
          %v1579 = vld [vmem:[#allocation10] sm:$0xf]
          %v1581 = vlaneseq
          %v1582 = vshrl.u32 %v1581, 7
          %v1583 = vsub.s32 0, %v1582
          %v1584 = vrot.slane %v1573, %v1583
          %v1585 = vlaneseq
          %v1586 = vshrl.u32 %v1585, 7
          %v1587 = vsub.s32 1, %v1586
          %v1588 = vrot.slane %v1573, %v1587
          %v1589 = vlaneseq
          %v1590 = vshrl.u32 %v1589, 7
          %v1591 = vsub.s32 2, %v1590
          %v1592 = vrot.slane %v1573, %v1591
          %v1593 = vlaneseq
          %v1594 = vshrl.u32 %v1593, 7
          %v1595 = vsub.s32 3, %v1594
          %v1596 = vrot.slane %v1573, %v1595
          %v1601 = vmul.f32 %v918, %v1584
          %v1602 = vmul.f32 %v919, %v1588
          %v1603 = vmul.f32 %v920, %v1592
          %v1604 = vmul.f32 %v921, %v1596
          %v1609 = vcombine.low %v1601, %v1602
          %v1610 = vcombine.low %v1603, %v1604
          %v1612 = vunpack.c.l.s4 1966171168
          %v1613 = vunpack.c.0.s8 %v1612
          %v1614 = vlaneseq
          %v1615 = vshrl.u32 %v1614, 7
          %v1616 = vsub.s32 %v1613, %v1615
          %v1617 = vrot.slane %v1609, %v1616
          %v1619 = vunpack.c.l.s4 1966171168
          %v1620 = vunpack.c.0.s8 %v1619
          %v1621 = vlaneseq
          %v1622 = vshrl.u32 %v1621, 7
          %v1623 = vsub.s32 %v1620, %v1622
          %v1624 = vrot.slane %v1610, %v1623
          %v1625 = vcombine.low %v1617, %v1624
          %v1627 = vunpack.c.l.s4 1966171168
          %v1628 = vunpack.c.0.s8 %v1627
          %v1629 = vlaneseq
          %v1630 = vshrl.u32 %v1629, 7
          %v1631 = vsub.s32 %v1628, %v1630
          %v1632 = vrot.slane %v1625, %v1631
          %v1634 = vsub.f32 %v1579, %v1632
          %1635 = vst.msk [vmem:[#allocation3] sm:$0xf] %vm1577, %v1634
        $region84: #{tpu_custom_call.1} parent=59 // pred_fallthru
          _
        %s1636 = smul.u32 %s30, 128
        %s1637 = sshra.s32 %s1636, 3
        %s1638 = sand.u32 %s1636, 7
        %s1639 = smul.u32 %s1637, 4
        %s1640 = smul.addr %s1639, 4
        %s1641 = scalar_lea.vmem [#allocation9], %s1640
        %v1642 = vld [vmem:[%s1641] sm:$0xff]
        %v1643 = vld [vmem:[%s1641 + $0x8] sm:$0xff]
        %v1644 = vld [vmem:[%s1641 + $0x10] sm:$0xff]
        %v1645 = vld [vmem:[%s1641 + $0x18] sm:$0xff]
        %v1646 = vld [vmem:[%s1641 + $0x20] sm:$0xff]
        %v1647 = vld [vmem:[%s1641 + $0x28] sm:$0xff]
        %v1648 = vld [vmem:[%s1641 + $0x30] sm:$0xff]
        %v1649 = vld [vmem:[%s1641 + $0x38] sm:$0xff]
        %v1650 = vld [vmem:[%s1641 + $0x40] sm:$0xff]
        %v1651 = vld [vmem:[%s1641 + $0x48] sm:$0xff]
        %v1652 = vld [vmem:[%s1641 + $0x50] sm:$0xff]
        %v1653 = vld [vmem:[%s1641 + $0x58] sm:$0xff]
        %v1654 = vld [vmem:[%s1641 + $0x60] sm:$0xff]
        %v1655 = vld [vmem:[%s1641 + $0x68] sm:$0xff]
        %v1656 = vld [vmem:[%s1641 + $0x70] sm:$0xff]
        %v1657 = vld [vmem:[%s1641 + $0x78] sm:$0xff]
        %v1658 = vld [vmem:[%s1641 + $0x80] sm:$0xff]
        %v1659 = vld [vmem:[%s1641 + $0x88] sm:$0xff]
        %v1660 = vld [vmem:[%s1641 + $0x90] sm:$0xff]
        %v1661 = vld [vmem:[%s1641 + $0x98] sm:$0xff]
        %v1662 = vld [vmem:[%s1641 + $0xa0] sm:$0xff]
        %v1663 = vld [vmem:[%s1641 + $0xa8] sm:$0xff]
        %v1664 = vld [vmem:[%s1641 + $0xb0] sm:$0xff]
        %v1665 = vld [vmem:[%s1641 + $0xb8] sm:$0xff]
        %v1666 = vld [vmem:[%s1641 + $0xc0] sm:$0xff]
        %v1667 = vld [vmem:[%s1641 + $0xc8] sm:$0xff]
        %v1668 = vld [vmem:[%s1641 + $0xd0] sm:$0xff]
        %v1669 = vld [vmem:[%s1641 + $0xd8] sm:$0xff]
        %v1670 = vld [vmem:[%s1641 + $0xe0] sm:$0xff]
        %v1671 = vld [vmem:[%s1641 + $0xe8] sm:$0xff]
        %v1672 = vld [vmem:[%s1641 + $0xf0] sm:$0xff]
        %v1673 = vld [vmem:[%s1641 + $0xf8] sm:$0xff]
        %v1674 = vunpack.c.l.bf16 %v1642
        %v1675 = vunpack.c.h.bf16 %v1642
        %v1676 = vunpack.c.l.bf16 %v1643
        %v1677 = vunpack.c.h.bf16 %v1643
        %v1678 = vunpack.c.l.bf16 %v1644
        %v1679 = vunpack.c.h.bf16 %v1644
        %v1680 = vunpack.c.l.bf16 %v1645
        %v1681 = vunpack.c.h.bf16 %v1645
        %v1682 = vunpack.c.l.bf16 %v1646
        %v1683 = vunpack.c.h.bf16 %v1646
        %v1684 = vunpack.c.l.bf16 %v1647
        %v1685 = vunpack.c.h.bf16 %v1647
        %v1686 = vunpack.c.l.bf16 %v1648
        %v1687 = vunpack.c.h.bf16 %v1648
        %v1688 = vunpack.c.l.bf16 %v1649
        %v1689 = vunpack.c.h.bf16 %v1649
        %v1690 = vunpack.c.l.bf16 %v1650
        %v1691 = vunpack.c.h.bf16 %v1650
        %v1692 = vunpack.c.l.bf16 %v1651
        %v1693 = vunpack.c.h.bf16 %v1651
        %v1694 = vunpack.c.l.bf16 %v1652
        %v1695 = vunpack.c.h.bf16 %v1652
        %v1696 = vunpack.c.l.bf16 %v1653
        %v1697 = vunpack.c.h.bf16 %v1653
        %v1698 = vunpack.c.l.bf16 %v1654
        %v1699 = vunpack.c.h.bf16 %v1654
        %v1700 = vunpack.c.l.bf16 %v1655
        %v1701 = vunpack.c.h.bf16 %v1655
        %v1702 = vunpack.c.l.bf16 %v1656
        %v1703 = vunpack.c.h.bf16 %v1656
        %v1704 = vunpack.c.l.bf16 %v1657
        %v1705 = vunpack.c.h.bf16 %v1657
        %v1706 = vunpack.c.l.bf16 %v1658
        %v1707 = vunpack.c.h.bf16 %v1658
        %v1708 = vunpack.c.l.bf16 %v1659
        %v1709 = vunpack.c.h.bf16 %v1659
        %v1710 = vunpack.c.l.bf16 %v1660
        %v1711 = vunpack.c.h.bf16 %v1660
        %v1712 = vunpack.c.l.bf16 %v1661
        %v1713 = vunpack.c.h.bf16 %v1661
        %v1714 = vunpack.c.l.bf16 %v1662
        %v1715 = vunpack.c.h.bf16 %v1662
        %v1716 = vunpack.c.l.bf16 %v1663
        %v1717 = vunpack.c.h.bf16 %v1663
        %v1718 = vunpack.c.l.bf16 %v1664
        %v1719 = vunpack.c.h.bf16 %v1664
        %v1720 = vunpack.c.l.bf16 %v1665
        %v1721 = vunpack.c.h.bf16 %v1665
        %v1722 = vunpack.c.l.bf16 %v1666
        %v1723 = vunpack.c.h.bf16 %v1666
        %v1724 = vunpack.c.l.bf16 %v1667
        %v1725 = vunpack.c.h.bf16 %v1667
        %v1726 = vunpack.c.l.bf16 %v1668
        %v1727 = vunpack.c.h.bf16 %v1668
        %v1728 = vunpack.c.l.bf16 %v1669
        %v1729 = vunpack.c.h.bf16 %v1669
        %v1730 = vunpack.c.l.bf16 %v1670
        %v1731 = vunpack.c.h.bf16 %v1670
        %v1732 = vunpack.c.l.bf16 %v1671
        %v1733 = vunpack.c.h.bf16 %v1671
        %v1734 = vunpack.c.l.bf16 %v1672
        %v1735 = vunpack.c.h.bf16 %v1672
        %v1736 = vunpack.c.l.bf16 %v1673
        %v1737 = vunpack.c.h.bf16 %v1673
        %v1738 = vld [vmem:[#allocation2] sm:$0xf]
        %v1740 = vlaneseq
        %v1741 = vshrl.u32 %v1740, 7
        %v1742 = vsub.s32 0, %v1741
        %v1743 = vrot.slane %v1738, %v1742
        %v1744 = vlaneseq
        %v1745 = vshrl.u32 %v1744, 7
        %v1746 = vsub.s32 1, %v1745
        %v1747 = vrot.slane %v1738, %v1746
        %v1748 = vlaneseq
        %v1749 = vshrl.u32 %v1748, 7
        %v1750 = vsub.s32 2, %v1749
        %v1751 = vrot.slane %v1738, %v1750
        %v1752 = vlaneseq
        %v1753 = vshrl.u32 %v1752, 7
        %v1754 = vsub.s32 3, %v1753
        %v1755 = vrot.slane %v1738, %v1754
        %v1760 = vmul.f32 %v1674, %v1743
        %v1761 = vmul.f32 %v1675, %v1747
        %v1762 = vmul.f32 %v1676, %v1751
        %v1763 = vmul.f32 %v1677, %v1755
        %v1764 = vmul.f32 %v1678, %v1743
        %v1765 = vmul.f32 %v1679, %v1747
        %v1766 = vmul.f32 %v1680, %v1751
        %v1767 = vmul.f32 %v1681, %v1755
        %v1768 = vmul.f32 %v1682, %v1743
        %v1769 = vmul.f32 %v1683, %v1747
        %v1770 = vmul.f32 %v1684, %v1751
        %v1771 = vmul.f32 %v1685, %v1755
        %v1772 = vmul.f32 %v1686, %v1743
        %v1773 = vmul.f32 %v1687, %v1747
        %v1774 = vmul.f32 %v1688, %v1751
        %v1775 = vmul.f32 %v1689, %v1755
        %v1776 = vmul.f32 %v1690, %v1743
        %v1777 = vmul.f32 %v1691, %v1747
        %v1778 = vmul.f32 %v1692, %v1751
        %v1779 = vmul.f32 %v1693, %v1755
        %v1780 = vmul.f32 %v1694, %v1743
        %v1781 = vmul.f32 %v1695, %v1747
        %v1782 = vmul.f32 %v1696, %v1751
        %v1783 = vmul.f32 %v1697, %v1755
        %v1784 = vmul.f32 %v1698, %v1743
        %v1785 = vmul.f32 %v1699, %v1747
        %v1786 = vmul.f32 %v1700, %v1751
        %v1787 = vmul.f32 %v1701, %v1755
        %v1788 = vmul.f32 %v1702, %v1743
        %v1789 = vmul.f32 %v1703, %v1747
        %v1790 = vmul.f32 %v1704, %v1751
        %v1791 = vmul.f32 %v1705, %v1755
        %v1792 = vmul.f32 %v1706, %v1743
        %v1793 = vmul.f32 %v1707, %v1747
        %v1794 = vmul.f32 %v1708, %v1751
        %v1795 = vmul.f32 %v1709, %v1755
        %v1796 = vmul.f32 %v1710, %v1743
        %v1797 = vmul.f32 %v1711, %v1747
        %v1798 = vmul.f32 %v1712, %v1751
        %v1799 = vmul.f32 %v1713, %v1755
        %v1800 = vmul.f32 %v1714, %v1743
        %v1801 = vmul.f32 %v1715, %v1747
        %v1802 = vmul.f32 %v1716, %v1751
        %v1803 = vmul.f32 %v1717, %v1755
        %v1804 = vmul.f32 %v1718, %v1743
        %v1805 = vmul.f32 %v1719, %v1747
        %v1806 = vmul.f32 %v1720, %v1751
        %v1807 = vmul.f32 %v1721, %v1755
        %v1808 = vmul.f32 %v1722, %v1743
        %v1809 = vmul.f32 %v1723, %v1747
        %v1810 = vmul.f32 %v1724, %v1751
        %v1811 = vmul.f32 %v1725, %v1755
        %v1812 = vmul.f32 %v1726, %v1743
        %v1813 = vmul.f32 %v1727, %v1747
        %v1814 = vmul.f32 %v1728, %v1751
        %v1815 = vmul.f32 %v1729, %v1755
        %v1816 = vmul.f32 %v1730, %v1743
        %v1817 = vmul.f32 %v1731, %v1747
        %v1818 = vmul.f32 %v1732, %v1751
        %v1819 = vmul.f32 %v1733, %v1755
        %v1820 = vmul.f32 %v1734, %v1743
        %v1821 = vmul.f32 %v1735, %v1747
        %v1822 = vmul.f32 %v1736, %v1751
        %v1823 = vmul.f32 %v1737, %v1755
        %v1824 = vld [vmem:[#allocation3] sm:$0xf]
        %v1826 = vlaneseq
        %v1827 = vshrl.u32 %v1826, 7
        %v1828 = vsub.s32 0, %v1827
        %v1829 = vrot.slane %v1824, %v1828
        %v1830 = vlaneseq
        %v1831 = vshrl.u32 %v1830, 7
        %v1832 = vsub.s32 1, %v1831
        %v1833 = vrot.slane %v1824, %v1832
        %v1834 = vlaneseq
        %v1835 = vshrl.u32 %v1834, 7
        %v1836 = vsub.s32 2, %v1835
        %v1837 = vrot.slane %v1824, %v1836
        %v1838 = vlaneseq
        %v1839 = vshrl.u32 %v1838, 7
        %v1840 = vsub.s32 3, %v1839
        %v1841 = vrot.slane %v1824, %v1840
        %v1846 = vadd.f32 %v1760, %v1829
        %v1847 = vadd.f32 %v1761, %v1833
        %v1848 = vadd.f32 %v1762, %v1837
        %v1849 = vadd.f32 %v1763, %v1841
        %v1850 = vadd.f32 %v1764, %v1829
        %v1851 = vadd.f32 %v1765, %v1833
        %v1852 = vadd.f32 %v1766, %v1837
        %v1853 = vadd.f32 %v1767, %v1841
        %v1854 = vadd.f32 %v1768, %v1829
        %v1855 = vadd.f32 %v1769, %v1833
        %v1856 = vadd.f32 %v1770, %v1837
        %v1857 = vadd.f32 %v1771, %v1841
        %v1858 = vadd.f32 %v1772, %v1829
        %v1859 = vadd.f32 %v1773, %v1833
        %v1860 = vadd.f32 %v1774, %v1837
        %v1861 = vadd.f32 %v1775, %v1841
        %v1862 = vadd.f32 %v1776, %v1829
        %v1863 = vadd.f32 %v1777, %v1833
        %v1864 = vadd.f32 %v1778, %v1837
        %v1865 = vadd.f32 %v1779, %v1841
        %v1866 = vadd.f32 %v1780, %v1829
        %v1867 = vadd.f32 %v1781, %v1833
        %v1868 = vadd.f32 %v1782, %v1837
        %v1869 = vadd.f32 %v1783, %v1841
        %v1870 = vadd.f32 %v1784, %v1829
        %v1871 = vadd.f32 %v1785, %v1833
        %v1872 = vadd.f32 %v1786, %v1837
        %v1873 = vadd.f32 %v1787, %v1841
        %v1874 = vadd.f32 %v1788, %v1829
        %v1875 = vadd.f32 %v1789, %v1833
        %v1876 = vadd.f32 %v1790, %v1837
        %v1877 = vadd.f32 %v1791, %v1841
        %v1878 = vadd.f32 %v1792, %v1829
        %v1879 = vadd.f32 %v1793, %v1833
        %v1880 = vadd.f32 %v1794, %v1837
        %v1881 = vadd.f32 %v1795, %v1841
        %v1882 = vadd.f32 %v1796, %v1829
        %v1883 = vadd.f32 %v1797, %v1833
        %v1884 = vadd.f32 %v1798, %v1837
        %v1885 = vadd.f32 %v1799, %v1841
        %v1886 = vadd.f32 %v1800, %v1829
        %v1887 = vadd.f32 %v1801, %v1833
        %v1888 = vadd.f32 %v1802, %v1837
        %v1889 = vadd.f32 %v1803, %v1841
        %v1890 = vadd.f32 %v1804, %v1829
        %v1891 = vadd.f32 %v1805, %v1833
        %v1892 = vadd.f32 %v1806, %v1837
        %v1893 = vadd.f32 %v1807, %v1841
        %v1894 = vadd.f32 %v1808, %v1829
        %v1895 = vadd.f32 %v1809, %v1833
        %v1896 = vadd.f32 %v1810, %v1837
        %v1897 = vadd.f32 %v1811, %v1841
        %v1898 = vadd.f32 %v1812, %v1829
        %v1899 = vadd.f32 %v1813, %v1833
        %v1900 = vadd.f32 %v1814, %v1837
        %v1901 = vadd.f32 %v1815, %v1841
        %v1902 = vadd.f32 %v1816, %v1829
        %v1903 = vadd.f32 %v1817, %v1833
        %v1904 = vadd.f32 %v1818, %v1837
        %v1905 = vadd.f32 %v1819, %v1841
        %v1906 = vadd.f32 %v1820, %v1829
        %v1907 = vadd.f32 %v1821, %v1833
        %v1908 = vadd.f32 %v1822, %v1837
        %v1909 = vadd.f32 %v1823, %v1841
        %v1910 = vpack.c.bf16 %v1850, %v1846
        %v1911 = vpack.c.bf16 %v1851, %v1847
        %v1912 = vpack.c.bf16 %v1852, %v1848
        %v1913 = vpack.c.bf16 %v1853, %v1849
        %v1914 = vpack.c.bf16 %v1858, %v1854
        %v1915 = vpack.c.bf16 %v1859, %v1855
        %v1916 = vpack.c.bf16 %v1860, %v1856
        %v1917 = vpack.c.bf16 %v1861, %v1857
        %v1918 = vpack.c.bf16 %v1866, %v1862
        %v1919 = vpack.c.bf16 %v1867, %v1863
        %v1920 = vpack.c.bf16 %v1868, %v1864
        %v1921 = vpack.c.bf16 %v1869, %v1865
        %v1922 = vpack.c.bf16 %v1874, %v1870
        %v1923 = vpack.c.bf16 %v1875, %v1871
        %v1924 = vpack.c.bf16 %v1876, %v1872
        %v1925 = vpack.c.bf16 %v1877, %v1873
        %v1926 = vpack.c.bf16 %v1882, %v1878
        %v1927 = vpack.c.bf16 %v1883, %v1879
        %v1928 = vpack.c.bf16 %v1884, %v1880
        %v1929 = vpack.c.bf16 %v1885, %v1881
        %v1930 = vpack.c.bf16 %v1890, %v1886
        %v1931 = vpack.c.bf16 %v1891, %v1887
        %v1932 = vpack.c.bf16 %v1892, %v1888
        %v1933 = vpack.c.bf16 %v1893, %v1889
        %v1934 = vpack.c.bf16 %v1898, %v1894
        %v1935 = vpack.c.bf16 %v1899, %v1895
        %v1936 = vpack.c.bf16 %v1900, %v1896
        %v1937 = vpack.c.bf16 %v1901, %v1897
        %v1938 = vpack.c.bf16 %v1906, %v1902
        %v1939 = vpack.c.bf16 %v1907, %v1903
        %v1940 = vpack.c.bf16 %v1908, %v1904
        %v1941 = vpack.c.bf16 %v1909, %v1905
        %v1942 = vld [vmem:[#allocation12] sm:$0xff]
        %v1943 = vld [vmem:[#allocation12 + $0x8] sm:$0xff]
        %v1944 = vld [vmem:[#allocation12 + $0x10] sm:$0xff]
        %v1945 = vld [vmem:[#allocation12 + $0x18] sm:$0xff]
        %v1946 = vld [vmem:[#allocation12 + $0x20] sm:$0xff]
        %v1947 = vld [vmem:[#allocation12 + $0x28] sm:$0xff]
        %v1948 = vld [vmem:[#allocation12 + $0x30] sm:$0xff]
        %v1949 = vld [vmem:[#allocation12 + $0x38] sm:$0xff]
        %v1950 = vld [vmem:[#allocation12 + $0x40] sm:$0xff]
        %v1951 = vld [vmem:[#allocation12 + $0x48] sm:$0xff]
        %v1952 = vld [vmem:[#allocation12 + $0x50] sm:$0xff]
        %v1953 = vld [vmem:[#allocation12 + $0x58] sm:$0xff]
        %v1954 = vld [vmem:[#allocation12 + $0x60] sm:$0xff]
        %v1955 = vld [vmem:[#allocation12 + $0x68] sm:$0xff]
        %v1956 = vld [vmem:[#allocation12 + $0x70] sm:$0xff]
        %v1957 = vld [vmem:[#allocation12 + $0x78] sm:$0xff]
        %v1958 = vld [vmem:[#allocation12 + $0x80] sm:$0xff]
        %v1959 = vld [vmem:[#allocation12 + $0x88] sm:$0xff]
        %v1960 = vld [vmem:[#allocation12 + $0x90] sm:$0xff]
        %v1961 = vld [vmem:[#allocation12 + $0x98] sm:$0xff]
        %v1962 = vld [vmem:[#allocation12 + $0xa0] sm:$0xff]
        %v1963 = vld [vmem:[#allocation12 + $0xa8] sm:$0xff]
        %v1964 = vld [vmem:[#allocation12 + $0xb0] sm:$0xff]
        %v1965 = vld [vmem:[#allocation12 + $0xb8] sm:$0xff]
        %v1966 = vld [vmem:[#allocation12 + $0xc0] sm:$0xff]
        %v1967 = vld [vmem:[#allocation12 + $0xc8] sm:$0xff]
        %v1968 = vld [vmem:[#allocation12 + $0xd0] sm:$0xff]
        %v1969 = vld [vmem:[#allocation12 + $0xd8] sm:$0xff]
        %v1970 = vld [vmem:[#allocation12 + $0xe0] sm:$0xff]
        %v1971 = vld [vmem:[#allocation12 + $0xe8] sm:$0xff]
        %v1972 = vld [vmem:[#allocation12 + $0xf0] sm:$0xff]
        %v1973 = vld [vmem:[#allocation12 + $0xf8] sm:$0xff]
        %v1974 = vld [vmem:[#allocation12 + $0x100] sm:$0xff]
        %v1975 = vld [vmem:[#allocation12 + $0x108] sm:$0xff]
        %v1976 = vld [vmem:[#allocation12 + $0x110] sm:$0xff]
        %v1977 = vld [vmem:[#allocation12 + $0x118] sm:$0xff]
        %v1978 = vld [vmem:[#allocation12 + $0x120] sm:$0xff]
        %v1979 = vld [vmem:[#allocation12 + $0x128] sm:$0xff]
        %v1980 = vld [vmem:[#allocation12 + $0x130] sm:$0xff]
        %v1981 = vld [vmem:[#allocation12 + $0x138] sm:$0xff]
        %v1982 = vld [vmem:[#allocation12 + $0x140] sm:$0xff]
        %v1983 = vld [vmem:[#allocation12 + $0x148] sm:$0xff]
        %v1984 = vld [vmem:[#allocation12 + $0x150] sm:$0xff]
        %v1985 = vld [vmem:[#allocation12 + $0x158] sm:$0xff]
        %v1986 = vld [vmem:[#allocation12 + $0x160] sm:$0xff]
        %v1987 = vld [vmem:[#allocation12 + $0x168] sm:$0xff]
        %v1988 = vld [vmem:[#allocation12 + $0x170] sm:$0xff]
        %v1989 = vld [vmem:[#allocation12 + $0x178] sm:$0xff]
        %v1990 = vld [vmem:[#allocation12 + $0x180] sm:$0xff]
        %v1991 = vld [vmem:[#allocation12 + $0x188] sm:$0xff]
        %v1992 = vld [vmem:[#allocation12 + $0x190] sm:$0xff]
        %v1993 = vld [vmem:[#allocation12 + $0x198] sm:$0xff]
        %v1994 = vld [vmem:[#allocation12 + $0x1a0] sm:$0xff]
        %v1995 = vld [vmem:[#allocation12 + $0x1a8] sm:$0xff]
        %v1996 = vld [vmem:[#allocation12 + $0x1b0] sm:$0xff]
        %v1997 = vld [vmem:[#allocation12 + $0x1b8] sm:$0xff]
        %v1998 = vld [vmem:[#allocation12 + $0x1c0] sm:$0xff]
        %v1999 = vld [vmem:[#allocation12 + $0x1c8] sm:$0xff]
        %v2000 = vld [vmem:[#allocation12 + $0x1d0] sm:$0xff]
        %v2001 = vld [vmem:[#allocation12 + $0x1d8] sm:$0xff]
        %v2002 = vld [vmem:[#allocation12 + $0x1e0] sm:$0xff]
        %v2003 = vld [vmem:[#allocation12 + $0x1e8] sm:$0xff]
        %v2004 = vld [vmem:[#allocation12 + $0x1f0] sm:$0xff]
        %v2005 = vld [vmem:[#allocation12 + $0x1f8] sm:$0xff]
        %v2006 = vld [vmem:[%s5] sm:$0x3]
        %v2008 = vlaneseq
        %v2009 = vshrl.u32 %v2008, 7
        %v2010 = vsub.s32 0, %v2009
        %v2011 = vrot.slane %v2006, %v2010
        %v2012 = vlaneseq
        %v2013 = vshrl.u32 %v2012, 7
        %v2014 = vsub.s32 1, %v2013
        %v2015 = vrot.slane %v2006, %v2014
        %v2082 = vunpack.c.l.b16 %v1942
        %v2083 = vunpack.c.h.b16 %v1942
        %v2084 = vunpack.c.l.b16 %v1943
        %v2085 = vunpack.c.h.b16 %v1943
        %v2086 = vunpack.c.l.b16 %v1944
        %v2087 = vunpack.c.h.b16 %v1944
        %v2088 = vunpack.c.l.b16 %v1945
        %v2089 = vunpack.c.h.b16 %v1945
        %v2090 = vunpack.c.l.b16 %v1946
        %v2091 = vunpack.c.h.b16 %v1946
        %v2092 = vunpack.c.l.b16 %v1947
        %v2093 = vunpack.c.h.b16 %v1947
        %v2094 = vunpack.c.l.b16 %v1948
        %v2095 = vunpack.c.h.b16 %v1948
        %v2096 = vunpack.c.l.b16 %v1949
        %v2097 = vunpack.c.h.b16 %v1949
        %v2098 = vunpack.c.l.b16 %v1950
        %v2099 = vunpack.c.h.b16 %v1950
        %v2100 = vunpack.c.l.b16 %v1951
        %v2101 = vunpack.c.h.b16 %v1951
        %v2102 = vunpack.c.l.b16 %v1952
        %v2103 = vunpack.c.h.b16 %v1952
        %v2104 = vunpack.c.l.b16 %v1953
        %v2105 = vunpack.c.h.b16 %v1953
        %v2106 = vunpack.c.l.b16 %v1954
        %v2107 = vunpack.c.h.b16 %v1954
        %v2108 = vunpack.c.l.b16 %v1955
        %v2109 = vunpack.c.h.b16 %v1955
        %v2110 = vunpack.c.l.b16 %v1956
        %v2111 = vunpack.c.h.b16 %v1956
        %v2112 = vunpack.c.l.b16 %v1957
        %v2113 = vunpack.c.h.b16 %v1957
        %v2114 = vunpack.c.l.b16 %v1958
        %v2115 = vunpack.c.h.b16 %v1958
        %v2116 = vunpack.c.l.b16 %v1959
        %v2117 = vunpack.c.h.b16 %v1959
        %v2118 = vunpack.c.l.b16 %v1960
        %v2119 = vunpack.c.h.b16 %v1960
        %v2120 = vunpack.c.l.b16 %v1961
        %v2121 = vunpack.c.h.b16 %v1961
        %v2122 = vunpack.c.l.b16 %v1962
        %v2123 = vunpack.c.h.b16 %v1962
        %v2124 = vunpack.c.l.b16 %v1963
        %v2125 = vunpack.c.h.b16 %v1963
        %v2126 = vunpack.c.l.b16 %v1964
        %v2127 = vunpack.c.h.b16 %v1964
        %v2128 = vunpack.c.l.b16 %v1965
        %v2129 = vunpack.c.h.b16 %v1965
        %v2130 = vunpack.c.l.b16 %v1966
        %v2131 = vunpack.c.h.b16 %v1966
        %v2132 = vunpack.c.l.b16 %v1967
        %v2133 = vunpack.c.h.b16 %v1967
        %v2134 = vunpack.c.l.b16 %v1968
        %v2135 = vunpack.c.h.b16 %v1968
        %v2136 = vunpack.c.l.b16 %v1969
        %v2137 = vunpack.c.h.b16 %v1969
        %v2138 = vunpack.c.l.b16 %v1970
        %v2139 = vunpack.c.h.b16 %v1970
        %v2140 = vunpack.c.l.b16 %v1971
        %v2141 = vunpack.c.h.b16 %v1971
        %v2142 = vunpack.c.l.b16 %v1972
        %v2143 = vunpack.c.h.b16 %v1972
        %v2144 = vunpack.c.l.b16 %v1973
        %v2145 = vunpack.c.h.b16 %v1973
        %v2146 = vunpack.c.l.b16 %v1974
        %v2147 = vunpack.c.h.b16 %v1974
        %v2148 = vunpack.c.l.b16 %v1975
        %v2149 = vunpack.c.h.b16 %v1975
        %v2150 = vunpack.c.l.b16 %v1976
        %v2151 = vunpack.c.h.b16 %v1976
        %v2152 = vunpack.c.l.b16 %v1977
        %v2153 = vunpack.c.h.b16 %v1977
        %v2154 = vunpack.c.l.b16 %v1978
        %v2155 = vunpack.c.h.b16 %v1978
        %v2156 = vunpack.c.l.b16 %v1979
        %v2157 = vunpack.c.h.b16 %v1979
        %v2158 = vunpack.c.l.b16 %v1980
        %v2159 = vunpack.c.h.b16 %v1980
        %v2160 = vunpack.c.l.b16 %v1981
        %v2161 = vunpack.c.h.b16 %v1981
        %v2162 = vunpack.c.l.b16 %v1982
        %v2163 = vunpack.c.h.b16 %v1982
        %v2164 = vunpack.c.l.b16 %v1983
        %v2165 = vunpack.c.h.b16 %v1983
        %v2166 = vunpack.c.l.b16 %v1984
        %v2167 = vunpack.c.h.b16 %v1984
        %v2168 = vunpack.c.l.b16 %v1985
        %v2169 = vunpack.c.h.b16 %v1985
        %v2170 = vunpack.c.l.b16 %v1986
        %v2171 = vunpack.c.h.b16 %v1986
        %v2172 = vunpack.c.l.b16 %v1987
        %v2173 = vunpack.c.h.b16 %v1987
        %v2174 = vunpack.c.l.b16 %v1988
        %v2175 = vunpack.c.h.b16 %v1988
        %v2176 = vunpack.c.l.b16 %v1989
        %v2177 = vunpack.c.h.b16 %v1989
        %v2178 = vunpack.c.l.b16 %v1990
        %v2179 = vunpack.c.h.b16 %v1990
        %v2180 = vunpack.c.l.b16 %v1991
        %v2181 = vunpack.c.h.b16 %v1991
        %v2182 = vunpack.c.l.b16 %v1992
        %v2183 = vunpack.c.h.b16 %v1992
        %v2184 = vunpack.c.l.b16 %v1993
        %v2185 = vunpack.c.h.b16 %v1993
        %v2186 = vunpack.c.l.b16 %v1994
        %v2187 = vunpack.c.h.b16 %v1994
        %v2188 = vunpack.c.l.b16 %v1995
        %v2189 = vunpack.c.h.b16 %v1995
        %v2190 = vunpack.c.l.b16 %v1996
        %v2191 = vunpack.c.h.b16 %v1996
        %v2192 = vunpack.c.l.b16 %v1997
        %v2193 = vunpack.c.h.b16 %v1997
        %v2194 = vunpack.c.l.b16 %v1998
        %v2195 = vunpack.c.h.b16 %v1998
        %v2196 = vunpack.c.l.b16 %v1999
        %v2197 = vunpack.c.h.b16 %v1999
        %v2198 = vunpack.c.l.b16 %v2000
        %v2199 = vunpack.c.h.b16 %v2000
        %v2200 = vunpack.c.l.b16 %v2001
        %v2201 = vunpack.c.h.b16 %v2001
        %v2202 = vunpack.c.l.b16 %v2002
        %v2203 = vunpack.c.h.b16 %v2002
        %v2204 = vunpack.c.l.b16 %v2003
        %v2205 = vunpack.c.h.b16 %v2003
        %v2206 = vunpack.c.l.b16 %v2004
        %v2207 = vunpack.c.h.b16 %v2004
        %v2208 = vunpack.c.l.b16 %v2005
        %v2209 = vunpack.c.h.b16 %v2005
        %v2210 = vpack.c.b16 %v2084, %v2082
        %v2211 = vpack.c.b16 %v2085, %v2083
        %v2212 = vpack.c.b16 %v2088, %v2086
        %v2213 = vpack.c.b16 %v2089, %v2087
        %v2214 = vpack.c.b16 %v2092, %v2090
        %v2215 = vpack.c.b16 %v2093, %v2091
        %v2216 = vpack.c.b16 %v2096, %v2094
        %v2217 = vpack.c.b16 %v2097, %v2095
        %v2218 = vpack.c.b16 %v2100, %v2098
        %v2219 = vpack.c.b16 %v2101, %v2099
        %v2220 = vpack.c.b16 %v2104, %v2102
        %v2221 = vpack.c.b16 %v2105, %v2103
        %v2222 = vpack.c.b16 %v2108, %v2106
        %v2223 = vpack.c.b16 %v2109, %v2107
        %v2224 = vpack.c.b16 %v2112, %v2110
        %v2225 = vpack.c.b16 %v2113, %v2111
        %v2226 = vpack.c.b16 %v2116, %v2114
        %v2227 = vpack.c.b16 %v2117, %v2115
        %v2228 = vpack.c.b16 %v2120, %v2118
        %v2229 = vpack.c.b16 %v2121, %v2119
        %v2230 = vpack.c.b16 %v2124, %v2122
        %v2231 = vpack.c.b16 %v2125, %v2123
        %v2232 = vpack.c.b16 %v2128, %v2126
        %v2233 = vpack.c.b16 %v2129, %v2127
        %v2234 = vpack.c.b16 %v2132, %v2130
        %v2235 = vpack.c.b16 %v2133, %v2131
        %v2236 = vpack.c.b16 %v2136, %v2134
        %v2237 = vpack.c.b16 %v2137, %v2135
        %v2238 = vpack.c.b16 %v2140, %v2138
        %v2239 = vpack.c.b16 %v2141, %v2139
        %v2240 = vpack.c.b16 %v2144, %v2142
        %v2241 = vpack.c.b16 %v2145, %v2143
        %v2242 = vpack.c.b16 %v2148, %v2146
        %v2243 = vpack.c.b16 %v2149, %v2147
        %v2244 = vpack.c.b16 %v2152, %v2150
        %v2245 = vpack.c.b16 %v2153, %v2151
        %v2246 = vpack.c.b16 %v2156, %v2154
        %v2247 = vpack.c.b16 %v2157, %v2155
        %v2248 = vpack.c.b16 %v2160, %v2158
        %v2249 = vpack.c.b16 %v2161, %v2159
        %v2250 = vpack.c.b16 %v2164, %v2162
        %v2251 = vpack.c.b16 %v2165, %v2163
        %v2252 = vpack.c.b16 %v2168, %v2166
        %v2253 = vpack.c.b16 %v2169, %v2167
        %v2254 = vpack.c.b16 %v2172, %v2170
        %v2255 = vpack.c.b16 %v2173, %v2171
        %v2256 = vpack.c.b16 %v2176, %v2174
        %v2257 = vpack.c.b16 %v2177, %v2175
        %v2258 = vpack.c.b16 %v2180, %v2178
        %v2259 = vpack.c.b16 %v2181, %v2179
        %v2260 = vpack.c.b16 %v2184, %v2182
        %v2261 = vpack.c.b16 %v2185, %v2183
        %v2262 = vpack.c.b16 %v2188, %v2186
        %v2263 = vpack.c.b16 %v2189, %v2187
        %v2264 = vpack.c.b16 %v2192, %v2190
        %v2265 = vpack.c.b16 %v2193, %v2191
        %v2266 = vpack.c.b16 %v2196, %v2194
        %v2267 = vpack.c.b16 %v2197, %v2195
        %v2268 = vpack.c.b16 %v2200, %v2198
        %v2269 = vpack.c.b16 %v2201, %v2199
        %v2270 = vpack.c.b16 %v2204, %v2202
        %v2271 = vpack.c.b16 %v2205, %v2203
        %v2272 = vpack.c.b16 %v2208, %v2206
        %v2273 = vpack.c.b16 %v2209, %v2207
        %2338 = vmatprep.subr.bf16.mxu0 %v2225
        %2339 = vmatpush1.bf16.msra.mxu0 %v2224
        %2340 = vmatprep.subr.bf16.mxu0 %v2223
        %2341 = vmatpush1.bf16.msra.mxu0 %v2222
        %2342 = vmatprep.subr.bf16.mxu0 %v2221
        %2343 = vmatpush1.bf16.msra.mxu0 %v2220
        %2344 = vmatprep.subr.bf16.mxu0 %v2219
        %2345 = vmatpush1.bf16.msra.mxu0 %v2218
        %2346 = vmatprep.subr.bf16.mxu0 %v2217
        %2347 = vmatpush1.bf16.msra.mxu0 %v2216
        %2348 = vmatprep.subr.bf16.mxu0 %v2215
        %2349 = vmatpush1.bf16.msra.mxu0 %v2214
        %2350 = vmatprep.subr.bf16.mxu0 %v2213
        %2351 = vmatpush1.bf16.msra.mxu0 %v2212
        %2352 = vmatprep.subr.bf16.mxu0 %v2211
        %2353 = vmatpush1.bf16.msra.mxu0 %v2210
        %2354 = vmatprep.subr.bf16.mxu0 %v2241
        %2355 = vmatpush2.bf16.msra.mxu0 %v2240
        %2356 = vmatprep.subr.bf16.mxu0 %v2239
        %2357 = vmatpush2.bf16.msra.mxu0 %v2238
        %2358 = vmatprep.subr.bf16.mxu0 %v2237
        %2359 = vmatpush2.bf16.msra.mxu0 %v2236
        %2360 = vmatprep.subr.bf16.mxu0 %v2235
        %2361 = vmatpush2.bf16.msra.mxu0 %v2234
        %2362 = vmatprep.subr.bf16.mxu0 %v2233
        %2363 = vmatpush2.bf16.msra.mxu0 %v2232
        %2364 = vmatprep.subr.bf16.mxu0 %v2231
        %2365 = vmatpush2.bf16.msra.mxu0 %v2230
        %2366 = vmatprep.subr.bf16.mxu0 %v2229
        %2367 = vmatpush2.bf16.msra.mxu0 %v2228
        %2368 = vmatprep.subr.bf16.mxu0 %v2227
        %2369 = vmatpush2.bf16.msra.mxu0 %v2226
        %2370 = vmatprep.mubr.bf16.mxu0 %v1911
        %2371 = vmatmul.mubr.bf16.gmra.mxu0 %v1910
        %v2372 = vpop.f32.mrf.mxu0
        %v2373 = vadd.f32 %v2011, %v2372
        %v2374 = vpop.f32.mrf.mxu0
        %v2375 = vadd.f32 %v2015, %v2374
        %v2376 = vpop.f32.mrf.mxu0
        %v2377 = vadd.f32 %v2011, %v2376
        %v2378 = vpop.f32.mrf.mxu0
        %v2379 = vadd.f32 %v2015, %v2378
        %2380 = vmatprep.mubr.bf16.mxu0 %v1915
        %2381 = vmatmul.mubr.bf16.gmra.mxu0 %v1914
        %v2382 = vpop.f32.mrf.mxu0
        %v2383 = vadd.f32 %v2011, %v2382
        %v2384 = vpop.f32.mrf.mxu0
        %v2385 = vadd.f32 %v2015, %v2384
        %v2386 = vpop.f32.mrf.mxu0
        %v2387 = vadd.f32 %v2011, %v2386
        %v2388 = vpop.f32.mrf.mxu0
        %v2389 = vadd.f32 %v2015, %v2388
        %2390 = vmatprep.mubr.bf16.mxu0 %v1919
        %2391 = vmatmul.mubr.bf16.gmra.mxu0 %v1918
        %v2392 = vpop.f32.mrf.mxu0
        %v2393 = vadd.f32 %v2011, %v2392
        %v2394 = vpop.f32.mrf.mxu0
        %v2395 = vadd.f32 %v2015, %v2394
        %v2396 = vpop.f32.mrf.mxu0
        %v2397 = vadd.f32 %v2011, %v2396
        %v2398 = vpop.f32.mrf.mxu0
        %v2399 = vadd.f32 %v2015, %v2398
        %2400 = vmatprep.mubr.bf16.mxu0 %v1923
        %2401 = vmatmul.mubr.bf16.gmra.mxu0 %v1922
        %v2402 = vpop.f32.mrf.mxu0
        %v2403 = vadd.f32 %v2011, %v2402
        %v2404 = vpop.f32.mrf.mxu0
        %v2405 = vadd.f32 %v2015, %v2404
        %v2406 = vpop.f32.mrf.mxu0
        %v2407 = vadd.f32 %v2011, %v2406
        %v2408 = vpop.f32.mrf.mxu0
        %v2409 = vadd.f32 %v2015, %v2408
        %2410 = vmatprep.mubr.bf16.mxu0 %v1927
        %2411 = vmatmul.mubr.bf16.gmra.mxu0 %v1926
        %v2412 = vpop.f32.mrf.mxu0
        %v2413 = vadd.f32 %v2011, %v2412
        %v2414 = vpop.f32.mrf.mxu0
        %v2415 = vadd.f32 %v2015, %v2414
        %v2416 = vpop.f32.mrf.mxu0
        %v2417 = vadd.f32 %v2011, %v2416
        %v2418 = vpop.f32.mrf.mxu0
        %v2419 = vadd.f32 %v2015, %v2418
        %2420 = vmatprep.mubr.bf16.mxu0 %v1931
        %2421 = vmatmul.mubr.bf16.gmra.mxu0 %v1930
        %v2422 = vpop.f32.mrf.mxu0
        %v2423 = vadd.f32 %v2011, %v2422
        %v2424 = vpop.f32.mrf.mxu0
        %v2425 = vadd.f32 %v2015, %v2424
        %v2426 = vpop.f32.mrf.mxu0
        %v2427 = vadd.f32 %v2011, %v2426
        %v2428 = vpop.f32.mrf.mxu0
        %v2429 = vadd.f32 %v2015, %v2428
        %2430 = vmatprep.mubr.bf16.mxu0 %v1935
        %2431 = vmatmul.mubr.bf16.gmra.mxu0 %v1934
        %v2432 = vpop.f32.mrf.mxu0
        %v2433 = vadd.f32 %v2011, %v2432
        %v2434 = vpop.f32.mrf.mxu0
        %v2435 = vadd.f32 %v2015, %v2434
        %v2436 = vpop.f32.mrf.mxu0
        %v2437 = vadd.f32 %v2011, %v2436
        %v2438 = vpop.f32.mrf.mxu0
        %v2439 = vadd.f32 %v2015, %v2438
        %2440 = vmatprep.mubr.bf16.mxu0 %v1939
        %2441 = vmatmul.mubr.bf16.gmra.mxu0 %v1938
        %v2442 = vpop.f32.mrf.mxu0
        %v2443 = vadd.f32 %v2011, %v2442
        %v2444 = vpop.f32.mrf.mxu0
        %v2445 = vadd.f32 %v2015, %v2444
        %v2446 = vpop.f32.mrf.mxu0
        %v2447 = vadd.f32 %v2011, %v2446
        %v2448 = vpop.f32.mrf.mxu0
        %v2449 = vadd.f32 %v2015, %v2448
        %2450 = vdwg.mxu0
        %2451 = vmatprep.subr.bf16.mxu0 %v2257
        %2452 = vmatpush1.bf16.msra.mxu0 %v2256
        %2453 = vmatprep.subr.bf16.mxu0 %v2255
        %2454 = vmatpush1.bf16.msra.mxu0 %v2254
        %2455 = vmatprep.subr.bf16.mxu0 %v2253
        %2456 = vmatpush1.bf16.msra.mxu0 %v2252
        %2457 = vmatprep.subr.bf16.mxu0 %v2251
        %2458 = vmatpush1.bf16.msra.mxu0 %v2250
        %2459 = vmatprep.subr.bf16.mxu0 %v2249
        %2460 = vmatpush1.bf16.msra.mxu0 %v2248
        %2461 = vmatprep.subr.bf16.mxu0 %v2247
        %2462 = vmatpush1.bf16.msra.mxu0 %v2246
        %2463 = vmatprep.subr.bf16.mxu0 %v2245
        %2464 = vmatpush1.bf16.msra.mxu0 %v2244
        %2465 = vmatprep.subr.bf16.mxu0 %v2243
        %2466 = vmatpush1.bf16.msra.mxu0 %v2242
        %2467 = vmatprep.subr.bf16.mxu0 %v2273
        %2468 = vmatpush2.bf16.msra.mxu0 %v2272
        %2469 = vmatprep.subr.bf16.mxu0 %v2271
        %2470 = vmatpush2.bf16.msra.mxu0 %v2270
        %2471 = vmatprep.subr.bf16.mxu0 %v2269
        %2472 = vmatpush2.bf16.msra.mxu0 %v2268
        %2473 = vmatprep.subr.bf16.mxu0 %v2267
        %2474 = vmatpush2.bf16.msra.mxu0 %v2266
        %2475 = vmatprep.subr.bf16.mxu0 %v2265
        %2476 = vmatpush2.bf16.msra.mxu0 %v2264
        %2477 = vmatprep.subr.bf16.mxu0 %v2263
        %2478 = vmatpush2.bf16.msra.mxu0 %v2262
        %2479 = vmatprep.subr.bf16.mxu0 %v2261
        %2480 = vmatpush2.bf16.msra.mxu0 %v2260
        %2481 = vmatprep.subr.bf16.mxu0 %v2259
        %2482 = vmatpush2.bf16.msra.mxu0 %v2258
        %2483 = vmatprep.mubr.bf16.mxu0 %v1913
        %2484 = vmatmul.mubr.bf16.gmra.mxu0 %v1912
        %v2485 = vpop.f32.mrf.mxu0
        %v2486 = vadd.f32 %v2373, %v2485
        %v2487 = vpop.f32.mrf.mxu0
        %v2488 = vadd.f32 %v2375, %v2487
        %v2489 = vpop.f32.mrf.mxu0
        %v2490 = vadd.f32 %v2377, %v2489
        %v2491 = vpop.f32.mrf.mxu0
        %v2492 = vadd.f32 %v2379, %v2491
        %2493 = vmatprep.mubr.bf16.mxu0 %v1917
        %2494 = vmatmul.mubr.bf16.gmra.mxu0 %v1916
        %v2495 = vpop.f32.mrf.mxu0
        %v2496 = vadd.f32 %v2383, %v2495
        %v2497 = vpop.f32.mrf.mxu0
        %v2498 = vadd.f32 %v2385, %v2497
        %v2499 = vpop.f32.mrf.mxu0
        %v2500 = vadd.f32 %v2387, %v2499
        %v2501 = vpop.f32.mrf.mxu0
        %v2502 = vadd.f32 %v2389, %v2501
        %2503 = vmatprep.mubr.bf16.mxu0 %v1921
        %2504 = vmatmul.mubr.bf16.gmra.mxu0 %v1920
        %v2505 = vpop.f32.mrf.mxu0
        %v2506 = vadd.f32 %v2393, %v2505
        %v2507 = vpop.f32.mrf.mxu0
        %v2508 = vadd.f32 %v2395, %v2507
        %v2509 = vpop.f32.mrf.mxu0
        %v2510 = vadd.f32 %v2397, %v2509
        %v2511 = vpop.f32.mrf.mxu0
        %v2512 = vadd.f32 %v2399, %v2511
        %2513 = vmatprep.mubr.bf16.mxu0 %v1925
        %2514 = vmatmul.mubr.bf16.gmra.mxu0 %v1924
        %v2515 = vpop.f32.mrf.mxu0
        %v2516 = vadd.f32 %v2403, %v2515
        %v2517 = vpop.f32.mrf.mxu0
        %v2518 = vadd.f32 %v2405, %v2517
        %v2519 = vpop.f32.mrf.mxu0
        %v2520 = vadd.f32 %v2407, %v2519
        %v2521 = vpop.f32.mrf.mxu0
        %v2522 = vadd.f32 %v2409, %v2521
        %2523 = vmatprep.mubr.bf16.mxu0 %v1929
        %2524 = vmatmul.mubr.bf16.gmra.mxu0 %v1928
        %v2525 = vpop.f32.mrf.mxu0
        %v2526 = vadd.f32 %v2413, %v2525
        %v2527 = vpop.f32.mrf.mxu0
        %v2528 = vadd.f32 %v2415, %v2527
        %v2529 = vpop.f32.mrf.mxu0
        %v2530 = vadd.f32 %v2417, %v2529
        %v2531 = vpop.f32.mrf.mxu0
        %v2532 = vadd.f32 %v2419, %v2531
        %2533 = vmatprep.mubr.bf16.mxu0 %v1933
        %2534 = vmatmul.mubr.bf16.gmra.mxu0 %v1932
        %v2535 = vpop.f32.mrf.mxu0
        %v2536 = vadd.f32 %v2423, %v2535
        %v2537 = vpop.f32.mrf.mxu0
        %v2538 = vadd.f32 %v2425, %v2537
        %v2539 = vpop.f32.mrf.mxu0
        %v2540 = vadd.f32 %v2427, %v2539
        %v2541 = vpop.f32.mrf.mxu0
        %v2542 = vadd.f32 %v2429, %v2541
        %2543 = vmatprep.mubr.bf16.mxu0 %v1937
        %2544 = vmatmul.mubr.bf16.gmra.mxu0 %v1936
        %v2545 = vpop.f32.mrf.mxu0
        %v2546 = vadd.f32 %v2433, %v2545
        %v2547 = vpop.f32.mrf.mxu0
        %v2548 = vadd.f32 %v2435, %v2547
        %v2549 = vpop.f32.mrf.mxu0
        %v2550 = vadd.f32 %v2437, %v2549
        %v2551 = vpop.f32.mrf.mxu0
        %v2552 = vadd.f32 %v2439, %v2551
        %2553 = vmatprep.mubr.bf16.mxu0 %v1941
        %2554 = vmatmul.mubr.bf16.gmra.mxu0 %v1940
        %v2555 = vpop.f32.mrf.mxu0
        %v2556 = vadd.f32 %v2443, %v2555
        %v2557 = vpop.f32.mrf.mxu0
        %v2558 = vadd.f32 %v2445, %v2557
        %v2559 = vpop.f32.mrf.mxu0
        %v2560 = vadd.f32 %v2447, %v2559
        %v2561 = vpop.f32.mrf.mxu0
        %v2562 = vadd.f32 %v2449, %v2561
        %2563 = vdwg.mxu0
        %v2564 = vmax.f32 %v2486, 0.0
        %v2565 = vmax.f32 %v2488, 0.0
        %v2566 = vmax.f32 %v2490, 0.0
        %v2567 = vmax.f32 %v2492, 0.0
        %v2568 = vmax.f32 %v2496, 0.0
        %v2569 = vmax.f32 %v2498, 0.0
        %v2570 = vmax.f32 %v2500, 0.0
        %v2571 = vmax.f32 %v2502, 0.0
        %v2572 = vmax.f32 %v2506, 0.0
        %v2573 = vmax.f32 %v2508, 0.0
        %v2574 = vmax.f32 %v2510, 0.0
        %v2575 = vmax.f32 %v2512, 0.0
        %v2576 = vmax.f32 %v2516, 0.0
        %v2577 = vmax.f32 %v2518, 0.0
        %v2578 = vmax.f32 %v2520, 0.0
        %v2579 = vmax.f32 %v2522, 0.0
        %v2580 = vmax.f32 %v2526, 0.0
        %v2581 = vmax.f32 %v2528, 0.0
        %v2582 = vmax.f32 %v2530, 0.0
        %v2583 = vmax.f32 %v2532, 0.0
        %v2584 = vmax.f32 %v2536, 0.0
        %v2585 = vmax.f32 %v2538, 0.0
        %v2586 = vmax.f32 %v2540, 0.0
        %v2587 = vmax.f32 %v2542, 0.0
        %v2588 = vmax.f32 %v2546, 0.0
        %v2589 = vmax.f32 %v2548, 0.0
        %v2590 = vmax.f32 %v2550, 0.0
        %v2591 = vmax.f32 %v2552, 0.0
        %v2592 = vmax.f32 %v2556, 0.0
        %v2593 = vmax.f32 %v2558, 0.0
        %v2594 = vmax.f32 %v2560, 0.0
        %v2595 = vmax.f32 %v2562, 0.0
        %v2596 = vpack.c.bf16 %v2566, %v2564
        %v2597 = vpack.c.bf16 %v2567, %v2565
        %v2598 = vpack.c.bf16 %v2570, %v2568
        %v2599 = vpack.c.bf16 %v2571, %v2569
        %v2600 = vpack.c.bf16 %v2574, %v2572
        %v2601 = vpack.c.bf16 %v2575, %v2573
        %v2602 = vpack.c.bf16 %v2578, %v2576
        %v2603 = vpack.c.bf16 %v2579, %v2577
        %v2604 = vpack.c.bf16 %v2582, %v2580
        %v2605 = vpack.c.bf16 %v2583, %v2581
        %v2606 = vpack.c.bf16 %v2586, %v2584
        %v2607 = vpack.c.bf16 %v2587, %v2585
        %v2608 = vpack.c.bf16 %v2590, %v2588
        %v2609 = vpack.c.bf16 %v2591, %v2589
        %v2610 = vpack.c.bf16 %v2594, %v2592
        %v2611 = vpack.c.bf16 %v2595, %v2593
        %v2612 = vld [vmem:[#allocation13] sm:$0xf]
        %v2613 = vld [vmem:[#allocation13 + $0x4] sm:$0xf]
        %v2614 = vld [vmem:[#allocation13 + $0x8] sm:$0xf]
        %v2615 = vld [vmem:[#allocation13 + $0xc] sm:$0xf]
        %v2616 = vld [vmem:[#allocation13 + $0x10] sm:$0xf]
        %v2617 = vld [vmem:[#allocation13 + $0x14] sm:$0xf]
        %v2618 = vld [vmem:[#allocation13 + $0x18] sm:$0xf]
        %v2619 = vld [vmem:[#allocation13 + $0x1c] sm:$0xf]
        %v2620 = vld [vmem:[#allocation13 + $0x20] sm:$0xf]
        %v2621 = vld [vmem:[#allocation13 + $0x24] sm:$0xf]
        %v2622 = vld [vmem:[#allocation13 + $0x28] sm:$0xf]
        %v2623 = vld [vmem:[#allocation13 + $0x2c] sm:$0xf]
        %v2624 = vld [vmem:[#allocation13 + $0x30] sm:$0xf]
        %v2625 = vld [vmem:[#allocation13 + $0x34] sm:$0xf]
        %v2626 = vld [vmem:[#allocation13 + $0x38] sm:$0xf]
        %v2627 = vld [vmem:[#allocation13 + $0x3c] sm:$0xf]
        %v2628 = vld [vmem:[#allocation13 + $0x40] sm:$0xf]
        %v2629 = vld [vmem:[#allocation13 + $0x44] sm:$0xf]
        %v2630 = vld [vmem:[#allocation13 + $0x48] sm:$0xf]
        %v2631 = vld [vmem:[#allocation13 + $0x4c] sm:$0xf]
        %v2632 = vld [vmem:[#allocation13 + $0x50] sm:$0xf]
        %v2633 = vld [vmem:[#allocation13 + $0x54] sm:$0xf]
        %v2634 = vld [vmem:[#allocation13 + $0x58] sm:$0xf]
        %v2635 = vld [vmem:[#allocation13 + $0x5c] sm:$0xf]
        %v2636 = vld [vmem:[#allocation13 + $0x60] sm:$0xf]
        %v2637 = vld [vmem:[#allocation13 + $0x64] sm:$0xf]
        %v2638 = vld [vmem:[#allocation13 + $0x68] sm:$0xf]
        %v2639 = vld [vmem:[#allocation13 + $0x6c] sm:$0xf]
        %v2640 = vld [vmem:[#allocation13 + $0x70] sm:$0xf]
        %v2641 = vld [vmem:[#allocation13 + $0x74] sm:$0xf]
        %v2642 = vld [vmem:[#allocation13 + $0x78] sm:$0xf]
        %v2643 = vld [vmem:[#allocation13 + $0x7c] sm:$0xf]
        %v2644 = vld [vmem:[%s7] sm:$0x1]
        %v2646 = vlaneseq
        %v2647 = vshrl.u32 %v2646, 7
        %v2648 = vsub.s32 0, %v2647
        %v2649 = vrot.slane %v2644, %v2648
        %v2683 = vunpack.c.l.b16 %v2612
        %v2684 = vunpack.c.l.b16 %v2613
        %v2685 = vunpack.c.l.b16 %v2614
        %v2686 = vunpack.c.l.b16 %v2615
        %v2687 = vunpack.c.l.b16 %v2616
        %v2688 = vunpack.c.l.b16 %v2617
        %v2689 = vunpack.c.l.b16 %v2618
        %v2690 = vunpack.c.l.b16 %v2619
        %v2691 = vunpack.c.l.b16 %v2620
        %v2692 = vunpack.c.l.b16 %v2621
        %v2693 = vunpack.c.l.b16 %v2622
        %v2694 = vunpack.c.l.b16 %v2623
        %v2695 = vunpack.c.l.b16 %v2624
        %v2696 = vunpack.c.l.b16 %v2625
        %v2697 = vunpack.c.l.b16 %v2626
        %v2698 = vunpack.c.l.b16 %v2627
        %v2699 = vunpack.c.l.b16 %v2628
        %v2700 = vunpack.c.l.b16 %v2629
        %v2701 = vunpack.c.l.b16 %v2630
        %v2702 = vunpack.c.l.b16 %v2631
        %v2703 = vunpack.c.l.b16 %v2632
        %v2704 = vunpack.c.l.b16 %v2633
        %v2705 = vunpack.c.l.b16 %v2634
        %v2706 = vunpack.c.l.b16 %v2635
        %v2707 = vunpack.c.l.b16 %v2636
        %v2708 = vunpack.c.l.b16 %v2637
        %v2709 = vunpack.c.l.b16 %v2638
        %v2710 = vunpack.c.l.b16 %v2639
        %v2711 = vunpack.c.l.b16 %v2640
        %v2712 = vunpack.c.l.b16 %v2641
        %v2713 = vunpack.c.l.b16 %v2642
        %v2714 = vunpack.c.l.b16 %v2643
        %v2715 = vpack.c.b16 %v2684, %v2683
        %v2716 = vpack.c.b16 %v2686, %v2685
        %v2717 = vpack.c.b16 %v2688, %v2687
        %v2718 = vpack.c.b16 %v2690, %v2689
        %v2719 = vpack.c.b16 %v2692, %v2691
        %v2720 = vpack.c.b16 %v2694, %v2693
        %v2721 = vpack.c.b16 %v2696, %v2695
        %v2722 = vpack.c.b16 %v2698, %v2697
        %v2723 = vpack.c.b16 %v2700, %v2699
        %v2724 = vpack.c.b16 %v2702, %v2701
        %v2725 = vpack.c.b16 %v2704, %v2703
        %v2726 = vpack.c.b16 %v2706, %v2705
        %v2727 = vpack.c.b16 %v2708, %v2707
        %v2728 = vpack.c.b16 %v2710, %v2709
        %v2729 = vpack.c.b16 %v2712, %v2711
        %v2730 = vpack.c.b16 %v2714, %v2713
        %2747 = vmatprep.subr.bf16.mxu0 0
        %2748 = vmatpush1.bf16.msra.mxu0 %v2722
        %2749 = vmatprep.subr.bf16.mxu0 0
        %2750 = vmatpush1.bf16.msra.mxu0 %v2721
        %2751 = vmatprep.subr.bf16.mxu0 0
        %2752 = vmatpush1.bf16.msra.mxu0 %v2720
        %2753 = vmatprep.subr.bf16.mxu0 0
        %2754 = vmatpush1.bf16.msra.mxu0 %v2719
        %2755 = vmatprep.subr.bf16.mxu0 0
        %2756 = vmatpush1.bf16.msra.mxu0 %v2718
        %2757 = vmatprep.subr.bf16.mxu0 0
        %2758 = vmatpush1.bf16.msra.mxu0 %v2717
        %2759 = vmatprep.subr.bf16.mxu0 0
        %2760 = vmatpush1.bf16.msra.mxu0 %v2716
        %2761 = vmatprep.subr.bf16.mxu0 0
        %2762 = vmatpush1.bf16.msra.mxu0 %v2715
        %2763 = vmatprep.subr.bf16.mxu0 0
        %2764 = vmatpush2.bf16.msra.mxu0 %v2730
        %2765 = vmatprep.subr.bf16.mxu0 0
        %2766 = vmatpush2.bf16.msra.mxu0 %v2729
        %2767 = vmatprep.subr.bf16.mxu0 0
        %2768 = vmatpush2.bf16.msra.mxu0 %v2728
        %2769 = vmatprep.subr.bf16.mxu0 0
        %2770 = vmatpush2.bf16.msra.mxu0 %v2727
        %2771 = vmatprep.subr.bf16.mxu0 0
        %2772 = vmatpush2.bf16.msra.mxu0 %v2726
        %2773 = vmatprep.subr.bf16.mxu0 0
        %2774 = vmatpush2.bf16.msra.mxu0 %v2725
        %2775 = vmatprep.subr.bf16.mxu0 0
        %2776 = vmatpush2.bf16.msra.mxu0 %v2724
        %2777 = vmatprep.subr.bf16.mxu0 0
        %2778 = vmatpush2.bf16.msra.mxu0 %v2723
        %2779 = vmatprep.mubr.bf16.mxu0 %v2597
        %2780 = vmatmul.mubr.bf16.gmra.mxu0 %v2596
        %v2781 = vpop.f32.mrf.mxu0
        %v2782 = vadd.f32 %v2649, %v2781
        %v2783 = vpop.f32.mrf.mxu0
        %v2784 = vpop.f32.mrf.mxu0
        %v2785 = vadd.f32 %v2649, %v2784
        %v2786 = vpop.f32.mrf.mxu0
        %2787 = vmatprep.mubr.bf16.mxu0 %v2599
        %2788 = vmatmul.mubr.bf16.gmra.mxu0 %v2598
        %v2789 = vpop.f32.mrf.mxu0
        %v2790 = vadd.f32 %v2649, %v2789
        %v2791 = vpop.f32.mrf.mxu0
        %v2792 = vpop.f32.mrf.mxu0
        %v2793 = vadd.f32 %v2649, %v2792
        %v2794 = vpop.f32.mrf.mxu0
        %2795 = vmatprep.mubr.bf16.mxu0 %v2601
        %2796 = vmatmul.mubr.bf16.gmra.mxu0 %v2600
        %v2797 = vpop.f32.mrf.mxu0
        %v2798 = vadd.f32 %v2649, %v2797
        %v2799 = vpop.f32.mrf.mxu0
        %v2800 = vpop.f32.mrf.mxu0
        %v2801 = vadd.f32 %v2649, %v2800
        %v2802 = vpop.f32.mrf.mxu0
        %2803 = vmatprep.mubr.bf16.mxu0 %v2603
        %2804 = vmatmul.mubr.bf16.gmra.mxu0 %v2602
        %v2805 = vpop.f32.mrf.mxu0
        %v2806 = vadd.f32 %v2649, %v2805
        %v2807 = vpop.f32.mrf.mxu0
        %v2808 = vpop.f32.mrf.mxu0
        %v2809 = vadd.f32 %v2649, %v2808
        %v2810 = vpop.f32.mrf.mxu0
        %2811 = vmatprep.mubr.bf16.mxu0 %v2605
        %2812 = vmatmul.mubr.bf16.gmra.mxu0 %v2604
        %v2813 = vpop.f32.mrf.mxu0
        %v2814 = vadd.f32 %v2649, %v2813
        %v2815 = vpop.f32.mrf.mxu0
        %v2816 = vpop.f32.mrf.mxu0
        %v2817 = vadd.f32 %v2649, %v2816
        %v2818 = vpop.f32.mrf.mxu0
        %2819 = vmatprep.mubr.bf16.mxu0 %v2607
        %2820 = vmatmul.mubr.bf16.gmra.mxu0 %v2606
        %v2821 = vpop.f32.mrf.mxu0
        %v2822 = vadd.f32 %v2649, %v2821
        %v2823 = vpop.f32.mrf.mxu0
        %v2824 = vpop.f32.mrf.mxu0
        %v2825 = vadd.f32 %v2649, %v2824
        %v2826 = vpop.f32.mrf.mxu0
        %2827 = vmatprep.mubr.bf16.mxu0 %v2609
        %2828 = vmatmul.mubr.bf16.gmra.mxu0 %v2608
        %v2829 = vpop.f32.mrf.mxu0
        %v2830 = vadd.f32 %v2649, %v2829
        %v2831 = vpop.f32.mrf.mxu0
        %v2832 = vpop.f32.mrf.mxu0
        %v2833 = vadd.f32 %v2649, %v2832
        %v2834 = vpop.f32.mrf.mxu0
        %2835 = vmatprep.mubr.bf16.mxu0 %v2611
        %2836 = vmatmul.mubr.bf16.gmra.mxu0 %v2610
        %v2837 = vpop.f32.mrf.mxu0
        %v2838 = vadd.f32 %v2649, %v2837
        %v2839 = vpop.f32.mrf.mxu0
        %v2840 = vpop.f32.mrf.mxu0
        %v2841 = vadd.f32 %v2649, %v2840
        %v2842 = vpop.f32.mrf.mxu0
        %2843 = vdwg.mxu0
        %v2844 = vmax.f32 %v2782, 0.0
        %v2845 = vmax.f32 %v2785, 0.0
        %v2846 = vmax.f32 %v2790, 0.0
        %v2847 = vmax.f32 %v2793, 0.0
        %v2848 = vmax.f32 %v2798, 0.0
        %v2849 = vmax.f32 %v2801, 0.0
        %v2850 = vmax.f32 %v2806, 0.0
        %v2851 = vmax.f32 %v2809, 0.0
        %v2852 = vmax.f32 %v2814, 0.0
        %v2853 = vmax.f32 %v2817, 0.0
        %v2854 = vmax.f32 %v2822, 0.0
        %v2855 = vmax.f32 %v2825, 0.0
        %v2856 = vmax.f32 %v2830, 0.0
        %v2857 = vmax.f32 %v2833, 0.0
        %v2858 = vmax.f32 %v2838, 0.0
        %v2859 = vmax.f32 %v2841, 0.0
        %v2860 = vld [vmem:[%s8] sm:$0x1]
        %v2862 = vlaneseq
        %v2863 = vshrl.u32 %v2862, 7
        %v2864 = vsub.s32 0, %v2863
        %v2865 = vrot.slane %v2860, %v2864
        %v2867 = vmul.f32 %v2844, %v2865
        %v2868 = vmul.f32 %v2845, %v2865
        %v2869 = vmul.f32 %v2846, %v2865
        %v2870 = vmul.f32 %v2847, %v2865
        %v2871 = vmul.f32 %v2848, %v2865
        %v2872 = vmul.f32 %v2849, %v2865
        %v2873 = vmul.f32 %v2850, %v2865
        %v2874 = vmul.f32 %v2851, %v2865
        %v2875 = vmul.f32 %v2852, %v2865
        %v2876 = vmul.f32 %v2853, %v2865
        %v2877 = vmul.f32 %v2854, %v2865
        %v2878 = vmul.f32 %v2855, %v2865
        %v2879 = vmul.f32 %v2856, %v2865
        %v2880 = vmul.f32 %v2857, %v2865
        %v2881 = vmul.f32 %v2858, %v2865
        %v2882 = vmul.f32 %v2859, %v2865
        %2883 = vadd.xlane.f32.xlu0 %v2867
        %v2884 = vpop.xlane.xlu0 %2883
        %2885 = vadd.xlane.f32.xlu0 %v2868
        %v2886 = vpop.xlane.xlu0 %2885
        %2887 = vadd.xlane.f32.xlu0 %v2869
        %v2888 = vpop.xlane.xlu0 %2887
        %2889 = vadd.xlane.f32.xlu0 %v2870
        %v2890 = vpop.xlane.xlu0 %2889
        %2891 = vadd.xlane.f32.xlu0 %v2871
        %v2892 = vpop.xlane.xlu0 %2891
        %2893 = vadd.xlane.f32.xlu0 %v2872
        %v2894 = vpop.xlane.xlu0 %2893
        %2895 = vadd.xlane.f32.xlu0 %v2873
        %v2896 = vpop.xlane.xlu0 %2895
        %2897 = vadd.xlane.f32.xlu0 %v2874
        %v2898 = vpop.xlane.xlu0 %2897
        %2899 = vadd.xlane.f32.xlu0 %v2875
        %v2900 = vpop.xlane.xlu0 %2899
        %2901 = vadd.xlane.f32.xlu0 %v2876
        %v2902 = vpop.xlane.xlu0 %2901
        %2903 = vadd.xlane.f32.xlu0 %v2877
        %v2904 = vpop.xlane.xlu0 %2903
        %2905 = vadd.xlane.f32.xlu0 %v2878
        %v2906 = vpop.xlane.xlu0 %2905
        %2907 = vadd.xlane.f32.xlu0 %v2879
        %v2908 = vpop.xlane.xlu0 %2907
        %2909 = vadd.xlane.f32.xlu0 %v2880
        %v2910 = vpop.xlane.xlu0 %2909
        %2911 = vadd.xlane.f32.xlu0 %v2881
        %v2912 = vpop.xlane.xlu0 %2911
        %2913 = vadd.xlane.f32.xlu0 %v2882
        %v2914 = vpop.xlane.xlu0 %2913
        %v2915 = vld [vmem:[#allocation4] sm:$0x1]
        %2917 = vset.pattern.permute.xlu0 0
        %2918 = vperm.xlu0 %2917, %v2915
        %v2919 = vpop.permute.xlu0 %2918
        %v2921 = vlaneseq
        %v2922 = vshrl.u32 %v2921, 7
        %v2923 = vsub.s32 0, %v2922
        %v2924 = vrot.slane %v2919, %v2923
        %v2925 = vadd.f32 %v2884, %v2924
        %v2926 = vadd.f32 %v2886, %v2924
        %v2927 = vadd.f32 %v2888, %v2924
        %v2928 = vadd.f32 %v2890, %v2924
        %v2929 = vadd.f32 %v2892, %v2924
        %v2930 = vadd.f32 %v2894, %v2924
        %v2931 = vadd.f32 %v2896, %v2924
        %v2932 = vadd.f32 %v2898, %v2924
        %v2933 = vadd.f32 %v2900, %v2924
        %v2934 = vadd.f32 %v2902, %v2924
        %v2935 = vadd.f32 %v2904, %v2924
        %v2936 = vadd.f32 %v2906, %v2924
        %v2937 = vadd.f32 %v2908, %v2924
        %v2938 = vadd.f32 %v2910, %v2924
        %v2939 = vadd.f32 %v2912, %v2924
        %v2940 = vadd.f32 %v2914, %v2924
        %v2957 = vlaneseq
        %v2958 = vand.u32 %v2957, 127
        %v2959 = vlaneseq
        %v2960 = vshrl.u32 %v2959, 7
        %v2961 = vsub.s32 %v2958, %v2960
        %v2962 = vrot.slane %v2925, %v2961
        %v2963 = vadd.s32 %v2958, 4294967288
        %v2964 = vlaneseq
        %v2965 = vshrl.u32 %v2964, 7
        %v2966 = vsub.s32 %v2963, %v2965
        %v2967 = vrot.slane %v2926, %v2966
        %vm2968 = vcmask 130112
        %v2969 = vsel %vm2968, %v2967, %v2962
        %v2970 = vadd.s32 %v2958, 4294967280
        %v2971 = vlaneseq
        %v2972 = vshrl.u32 %v2971, 7
        %v2973 = vsub.s32 %v2970, %v2972
        %v2974 = vrot.slane %v2927, %v2973
        %vm2975 = vcmask 195712
        %v2976 = vsel %vm2975, %v2974, %v2969
        %v2977 = vadd.s32 %v2958, 4294967272
        %v2978 = vlaneseq
        %v2979 = vshrl.u32 %v2978, 7
        %v2980 = vsub.s32 %v2977, %v2979
        %v2981 = vrot.slane %v2928, %v2980
        %vm2982 = vcmask 261312
        %v2983 = vsel %vm2982, %v2981, %v2976
        %v2984 = vadd.s32 %v2958, 4294967264
        %v2985 = vlaneseq
        %v2986 = vshrl.u32 %v2985, 7
        %v2987 = vsub.s32 %v2984, %v2986
        %v2988 = vrot.slane %v2929, %v2987
        %vm2989 = vcmask 326912
        %v2990 = vsel %vm2989, %v2988, %v2983
        %v2991 = vadd.s32 %v2958, 4294967256
        %v2992 = vlaneseq
        %v2993 = vshrl.u32 %v2992, 7
        %v2994 = vsub.s32 %v2991, %v2993
        %v2995 = vrot.slane %v2930, %v2994
        %vm2996 = vcmask 392512
        %v2997 = vsel %vm2996, %v2995, %v2990
        %v2998 = vadd.s32 %v2958, 4294967248
        %v2999 = vlaneseq
        %v3000 = vshrl.u32 %v2999, 7
        %v3001 = vsub.s32 %v2998, %v3000
        %v3002 = vrot.slane %v2931, %v3001
        %vm3003 = vcmask 458112
        %v3004 = vsel %vm3003, %v3002, %v2997
        %v3005 = vadd.s32 %v2958, 4294967240
        %v3006 = vlaneseq
        %v3007 = vshrl.u32 %v3006, 7
        %v3008 = vsub.s32 %v3005, %v3007
        %v3009 = vrot.slane %v2932, %v3008
        %vm3010 = vcmask 523712
        %v3011 = vsel %vm3010, %v3009, %v3004
        %v3012 = vadd.s32 %v2958, 4294967232
        %v3013 = vlaneseq
        %v3014 = vshrl.u32 %v3013, 7
        %v3015 = vsub.s32 %v3012, %v3014
        %v3016 = vrot.slane %v2933, %v3015
        %vm3017 = vcmask 589312
        %v3018 = vsel %vm3017, %v3016, %v3011
        %v3019 = vadd.s32 %v2958, 4294967224
        %v3020 = vlaneseq
        %v3021 = vshrl.u32 %v3020, 7
        %v3022 = vsub.s32 %v3019, %v3021
        %v3023 = vrot.slane %v2934, %v3022
        %vm3024 = vcmask 654912
        %v3025 = vsel %vm3024, %v3023, %v3018
        %v3026 = vadd.s32 %v2958, 4294967216
        %v3027 = vlaneseq
        %v3028 = vshrl.u32 %v3027, 7
        %v3029 = vsub.s32 %v3026, %v3028
        %v3030 = vrot.slane %v2935, %v3029
        %vm3031 = vcmask 720512
        %v3032 = vsel %vm3031, %v3030, %v3025
        %v3033 = vadd.s32 %v2958, 4294967208
        %v3034 = vlaneseq
        %v3035 = vshrl.u32 %v3034, 7
        %v3036 = vsub.s32 %v3033, %v3035
        %v3037 = vrot.slane %v2936, %v3036
        %vm3038 = vcmask 786112
        %v3039 = vsel %vm3038, %v3037, %v3032
        %v3040 = vadd.s32 %v2958, 4294967200
        %v3041 = vlaneseq
        %v3042 = vshrl.u32 %v3041, 7
        %v3043 = vsub.s32 %v3040, %v3042
        %v3044 = vrot.slane %v2937, %v3043
        %vm3045 = vcmask 851712
        %v3046 = vsel %vm3045, %v3044, %v3039
        %v3047 = vadd.s32 %v2958, 4294967192
        %v3048 = vlaneseq
        %v3049 = vshrl.u32 %v3048, 7
        %v3050 = vsub.s32 %v3047, %v3049
        %v3051 = vrot.slane %v2938, %v3050
        %vm3052 = vcmask 917312
        %v3053 = vsel %vm3052, %v3051, %v3046
        %v3054 = vadd.s32 %v2958, 4294967184
        %v3055 = vlaneseq
        %v3056 = vshrl.u32 %v3055, 7
        %v3057 = vsub.s32 %v3054, %v3056
        %v3058 = vrot.slane %v2939, %v3057
        %vm3059 = vcmask 982912
        %v3060 = vsel %vm3059, %v3058, %v3053
        %v3061 = vadd.s32 %v2958, 4294967176
        %v3062 = vlaneseq
        %v3063 = vshrl.u32 %v3062, 7
        %v3064 = vsub.s32 %v3061, %v3063
        %v3065 = vrot.slane %v2940, %v3064
        %vm3066 = vcmask 1048512
        %v3067 = vsel %vm3066, %v3065, %v3060
        %3069 = vst [vmem:[%s409] sm:$0x1] %v3067
        %s3070 = sand.u32 %s248, 1
        %s3071 = scalar_lea.sflag [#allocation7], %s3070
        %s3072 = sand.u32 %s248, 1
        %s3073 = scalar_lea.vmem [#allocation15], %s3072
        // Predicated region
        $region85: #{tpu_custom_call.1} parent=59 // pred_check
          %p3074 = pneg %p258
        $region86: #{tpu_custom_call.1} parent=59 // pred_check_branch
          %3076 = sbr.rel (%p3074) target = $region88
        $region87: #{tpu_custom_call.1} parent=59 // pred_region
          %s3078 = ssub.s32 16, 16
          %3079 = vsyncadd %s3071, %s3078
          %s3080 = smul.addr %s30, 16
          %s3081 = scalar_lea.hbm %s10, %s3080
          %s3083 = sshll.u32 %s3073, 4
          %s3084 = int_to_ptr.vmem [resolvable:$true] %s3083
          %3086 = dma.vmem_to_hbm [thread:$0]  %s3084, 16, %s3081, %s3071
        $region88: #{tpu_custom_call.1} parent=59 // pred_fallthru
          _
      $region60: #{tpu_custom_call.1} parent=5 // pred_fallthru
        _
      %p3087 = scmp.le.s32.totalorder 2, %s25
      // Predicated region
      $region89: #{tpu_custom_call.1} parent=5 // pred_check
        %p3088 = pneg %p3087
      $region90: #{tpu_custom_call.1} parent=5 // pred_check_branch
        %3090 = sbr.rel (%p3088) target = $region92
      $region91: #{tpu_custom_call.1} parent=5 // pred_region
        %s3091 = ssub.s32 %s25, 2
        // Predicated region
        $region93: #{tpu_custom_call.1} parent=91 // pred_check
          %p3092 = pneg %p264
        $region94: #{tpu_custom_call.1} parent=91 // pred_check_branch
          %3094 = sbr.rel (%p3092) target = $region96
        $region95: #{tpu_custom_call.1} parent=91 // pred_region
          %s3095 = sand.u32 %s249, 1
          %s3096 = scalar_lea.sflag [#allocation7], %s3095
          %s3097 = sand.u32 %s249, 1
          %s3098 = scalar_lea.vmem [#allocation15], %s3097
          %3099 = dma.done %s3096, 16
        $region96: #{tpu_custom_call.1} parent=91 // pred_fallthru
          _
      $region92: #{tpu_custom_call.1} parent=5 // pred_fallthru
        _
    $region6: #{tpu_custom_call.1} parent=1 // loop_footer
      %s29 = sadd.s32 1, %s25
    $region7: #{tpu_custom_call.1} parent=1 // loop_footer_branch
      %24 = sbr.rel target = $region3
    $region8: #{tpu_custom_call.1} parent=1 // loop_exit
      _
    %3100 = vsyncpa [#allocation6], 1
    %s3101 = scalar_lea.sflag [#allocation6], 1
    %3102 = vsyncpa %s3101, 1
    %3103 = vsyncpa [#allocation11], 1
    %3104 = vsyncpa [#allocation14], 1
    %3105 = vsyncpa [#allocation7], 1
    %s3106 = scalar_lea.sflag [#allocation7], 1
    %3107 = vsyncpa %s3106, 1
    %3108 = vsyncpa [#allocation8], 1
    %s3109 = scalar_lea.sflag [#allocation8], 1
    %3110 = vsyncpa %s3109, 1

</llo_original>
